<compile_context>
chip_gen: v7x
topology: tpu7x:2x2x1
jax: 0.10.0
libtpu: 0.0.40
codegen_flags: <defaults>
</compile_context>

<pallas_src>
import functools

import jax
import jax.numpy as jnp
from jax.experimental import pallas as pl
from jax.experimental.pallas import tpu as pltpu

_BN_EPS = 1e-5

_CONV_CFG = [
    # (out_channels, stride, padding, has_batchnorm) -- every conv is followed by ReLU
    (32, 1, 1, False),
    (32, 2, 0, True),
    (64, 1, 1, True),
    (64, 2, 0, True),
    (128, 1, 1, True),
    (128, 2, 0, True),
]


def _round_up(x: int, m: int) -> int:
    return (x + m - 1) // m * m


# ---------------------------------------------------------------------------
# Kernel 1: single-K-step fused GEMM  out = maybe_relu((x @ w) * scale + shift)
# ---------------------------------------------------------------------------
def _gemm_kernel(x_ref, w_ref, scale_ref, shift_ref, o_ref, *, apply_relu):
    y = jnp.dot(x_ref[...], w_ref[...], preferred_element_type=jnp.float32)
    y = y * scale_ref[...] + shift_ref[...]
    if apply_relu:
        y = jnp.maximum(y, 0.0)
    o_ref[...] = y.astype(o_ref.dtype)


def fused_gemm(x, w_p, scale_p, shift_p, n_out, *, apply_relu, out_dtype):
    """maybe_relu((x @ w) * scale + shift).

    x: (M, K) float; w_p: (K_pad, N_pad) bf16 (pre-padded at prep time);
    scale_p / shift_p: (1, N_pad) f32.  Returns (M, n_out) in `out_dtype`.
    """
    M, K = x.shape
    K_pad, N_pad = w_p.shape

    M_pad = _round_up(M, 16)                      # bf16 sublane packing
    tm = min(M_pad, 256)
    M_pad = _round_up(M_pad, tm)
    if N_pad <= 512:
        tn = N_pad
    else:
        tn = 512 if N_pad % 512 == 0 else (256 if N_pad % 256 == 0 else 128)

    xp = jnp.pad(x, ((0, M_pad - M), (0, K_pad - K))).astype(jnp.bfloat16)

    grid = (M_pad // tm, N_pad // tn)
    out_bytes = 2 if out_dtype == jnp.bfloat16 else 4
    out = pl.pallas_call(
        functools.partial(_gemm_kernel, apply_relu=apply_relu),
        out_shape=jax.ShapeDtypeStruct((M_pad, N_pad), out_dtype),
        grid=grid,
        in_specs=[
            pl.BlockSpec((tm, K_pad), lambda i, j: (i, 0)),
            pl.BlockSpec((K_pad, tn), lambda i, j: (0, j)),
            pl.BlockSpec((1, tn), lambda i, j: (0, j)),
            pl.BlockSpec((1, tn), lambda i, j: (0, j)),
        ],
        out_specs=pl.BlockSpec((tm, tn), lambda i, j: (i, j)),
        compiler_params=pltpu.CompilerParams(
            dimension_semantics=("parallel", "parallel")),
        cost_estimate=pl.CostEstimate(
            flops=2 * M_pad * N_pad * K_pad,
            transcendentals=0,
            bytes_accessed=2 * (M_pad * K_pad + K_pad * N_pad)
                           + out_bytes * M_pad * N_pad + 8 * N_pad),
    )(xp, w_p, scale_p, shift_p)
    return out[:M, :n_out]


# ---------------------------------------------------------------------------
# Kernel 2: fused head = conv5 (as GEMM) + BN + ReLU + fc0 + ReLU + fc1.
# Valid when conv5's output is 1x1 (flatten == channel vector), which holds
# for the 16x16 input of this test.  Intermediates never leave VMEM.
# ---------------------------------------------------------------------------
def _head_kernel(x_ref, w5_ref, s5_ref, t5_ref, w0_ref, b0_ref, w1_ref, b1_ref,
                 o_ref):
    h = jnp.dot(x_ref[...], w5_ref[...], preferred_element_type=jnp.float32)
    h = jnp.maximum(h * s5_ref[...] + t5_ref[...], 0.0)          # conv5 + BN + ReLU
    h = jnp.dot(h.astype(jnp.bfloat16), w0_ref[...],
                preferred_element_type=jnp.float32)
    h = jnp.maximum(h + b0_ref[...], 0.0)                        # fc0 + ReLU
    h = jnp.dot(h.astype(jnp.bfloat16), w1_ref[...],
                preferred_element_type=jnp.float32)
    o_ref[...] = (h + b1_ref[...]).astype(o_ref.dtype)           # fc1


def fused_head(prep, col5):
    B, K5 = col5.shape
    c5, fc0, fc1 = prep["conv5"], prep["fc0"], prep["fc1"]
    M_pad = _round_up(B, 16)
    xp = jnp.pad(col5, ((0, M_pad - B),
                        (0, c5["w"].shape[0] - K5))).astype(jnp.bfloat16)
    n_out = fc1["w"].shape[1]

    args = (xp, c5["w"], c5["scale"], c5["shift"],
            fc0["w"], fc0["shift"], fc1["w"], fc1["shift"])
    flops = 2 * M_pad * (c5["w"].shape[0] * c5["w"].shape[1]
                         + fc0["w"].shape[0] * fc0["w"].shape[1]
                         + fc1["w"].shape[0] * fc1["w"].shape[1])
    bytes_accessed = int(2 * (xp.size + c5["w"].size + fc0["w"].size + fc1["w"].size)
                         + 4 * (c5["scale"].size + c5["shift"].size
                                + fc0["shift"].size + fc1["shift"].size
                                + M_pad * n_out))

    out = pl.pallas_call(
        _head_kernel,
        out_shape=jax.ShapeDtypeStruct((M_pad, n_out), jnp.float32),
        grid=(1,),
        in_specs=[pl.BlockSpec(a.shape, lambda i: (0, 0)) for a in args],
        out_specs=pl.BlockSpec((M_pad, n_out), lambda i: (0, 0)),
        compiler_params=pltpu.CompilerParams(dimension_semantics=("arbitrary",)),
        cost_estimate=pl.CostEstimate(flops=flops, transcendentals=0,
                                      bytes_accessed=bytes_accessed),
    )(*args)
    return out[:B]


# ---------------------------------------------------------------------------
# Layout plumbing (plain JAX): NHWC im2col, one-time weight preparation
# ---------------------------------------------------------------------------
def _im2col_nhwc(x, stride, padding):
    B, H, W, C = x.shape
    if padding:
        x = jnp.pad(x, ((0, 0), (padding, padding), (padding, padding), (0, 0)))
    Hp, Wp = H + 2 * padding, W + 2 * padding
    Ho = (Hp - 3) // stride + 1
    Wo = (Wp - 3) // stride + 1
    taps = [x[:, i:i + stride * Ho:stride, j:j + stride * Wo:stride, :]
            for i in range(3) for j in range(3)]
    col = jnp.concatenate(taps, axis=-1)            # (B, Ho, Wo, 9*C), (i,j,cin) order
    return col.reshape(B * Ho * Wo, 9 * C), Ho, Wo


def _pad_layer(wmat, scale, shift):
    K, N = wmat.shape
    K_pad, N_pad = _round_up(K, 128), _round_up(N, 128)
    return {
        "w": jnp.pad(wmat, ((0, K_pad - K), (0, N_pad - N))).astype(jnp.bfloat16),
        "scale": jnp.pad(scale, (0, N_pad - N)).reshape(1, N_pad).astype(jnp.float32),
        "shift": jnp.pad(shift, (0, N_pad - N)).reshape(1, N_pad).astype(jnp.float32),
    }


def prepare_params(params):
    """One-time: fold BN into scale/shift, transpose/pad/cast weights to bf16."""
    prep = {}
    for idx, (_, _, _, has_bn) in enumerate(_CONV_CFG):
        p = params[f"conv{idx}"]
        o, cin = p["w"].shape[0], p["w"].shape[1]
        wmat = jnp.transpose(p["w"], (2, 3, 1, 0)).reshape(9 * cin, o)  # (i,j,cin) x O
        if has_bn:
            s = p["gamma"] * jax.lax.rsqrt(p["var"] + _BN_EPS)
            scale, shift = s, p["beta"] + (p["b"] - p["mean"]) * s      # BN(conv+bias) fold
        else:
            scale, shift = jnp.ones((o,), jnp.float32), p["b"]
        prep[f"conv{idx}"] = _pad_layer(wmat, scale, shift)
    for name in ("fc0", "fc1"):
        p = params[name]
        o = p["w"].shape[0]
        prep[name] = _pad_layer(p["w"].T, jnp.ones((o,), jnp.float32), p["b"])
    return prep


# ---------------------------------------------------------------------------
# Forward pass
# ---------------------------------------------------------------------------
def vgg11_feat_forward(prep, x):
    """x: (B, C, H, W) float32 (PyTorch NCHW layout)."""
    B = x.shape[0]
    h = jnp.transpose(x, (0, 2, 3, 1)).astype(jnp.bfloat16)     # NHWC end-to-end
    for idx, (out_ch, stride, padding, _) in enumerate(_CONV_CFG[:-1]):
        lp = prep[f"conv{idx}"]
        col, Ho, Wo = _im2col_nhwc(h, stride, padding)
        y = fused_gemm(col, lp["w"], lp["scale"], lp["shift"], out_ch,
                       apply_relu=True, out_dtype=jnp.bfloat16)
        h = y.reshape(B, Ho, Wo, out_ch)

    out_ch5, stride5, padding5, _ = _CONV_CFG[-1]
    col5, Ho5, Wo5 = _im2col_nhwc(h, stride5, padding5)
    if Ho5 == 1 and Wo5 == 1:
        # conv5 output is 1x1 -> flatten == channel vector: fuse conv5+fc0+fc1.
        return fused_head(prep, col5)

    # Generic fallback (other input sizes): per-layer GEMMs with NCHW flatten.
    lp = prep["conv5"]
    y5 = fused_gemm(col5, lp["w"], lp["scale"], lp["shift"], out_ch5,
                    apply_relu=True, out_dtype=jnp.bfloat16)
    h5 = y5.reshape(B, Ho5, Wo5, out_ch5).transpose(0, 3, 1, 2).reshape(B, -1)
    h6 = fused_gemm(h5, prep["fc0"]["w"], prep["fc0"]["scale"], prep["fc0"]["shift"],
                    prep["fc0"]["w"].shape[1], apply_relu=True, out_dtype=jnp.float32)
    return fused_gemm(h6, prep["fc1"]["w"], prep["fc1"]["scale"], prep["fc1"]["shift"],
                      prep["fc1"]["w"].shape[1], apply_relu=False, out_dtype=jnp.float32)


# ---------------------------------------------------------------------------
# Deterministic parameter construction + plain-JAX f32 reference
# ---------------------------------------------------------------------------
def init_params(key, input_size):
    C, H, W = input_size
    params = {}
    in_ch, h, w = C, H, W
    k = key
    for idx, (out_ch, stride, padding, has_bn) in enumerate(_CONV_CFG):
        k, k1, k2, k3, k4, k5, k6 = jax.random.split(k, 7)
        fan_in = in_ch * 9
        p = {
            "w": jax.random.normal(k1, (out_ch, in_ch, 3, 3), jnp.float32)
                 / jnp.sqrt(float(fan_in)),
            "b": 0.05 * jax.random.normal(k2, (out_ch,), jnp.float32),
        }
        if has_bn:
            p["gamma"] = 1.0 + 0.1 * jax.random.normal(k3, (out_ch,), jnp.float32)
            p["beta"] = 0.1 * jax.random.normal(k4, (out_ch,), jnp.float32)
            p["mean"] = 0.1 * jax.random.normal(k5, (out_ch,), jnp.float32)
            p["var"] = 1.0 + 0.1 * jnp.abs(jax.random.normal(k6, (out_ch,), jnp.float32))
        params[f"conv{idx}"] = p
        in_ch = out_ch
        h = (h + 2 * padding - 3) // stride + 1
        w = (w + 2 * padding - 3) // stride + 1
    flat = in_ch * h * w
    k, k1, k2, k3, k4 = jax.random.split(k, 5)
    params["fc0"] = {
        "w": jax.random.normal(k1, (1024, flat), jnp.float32) / jnp.sqrt(float(flat)),
        "b": 0.05 * jax.random.normal(k2, (1024,), jnp.float32),
    }
    params["fc1"] = {
        "w": jax.random.normal(k3, (128, 1024), jnp.float32) / jnp.sqrt(1024.0),
        "b": 0.05 * jax.random.normal(k4, (128,), jnp.float32),
    }
    return params


def ref_forward(params, x):
    h = x.astype(jnp.float32)
    for idx, (_, stride, padding, has_bn) in enumerate(_CONV_CFG):
        p = params[f"conv{idx}"]
        h = jax.lax.conv_general_dilated(
            h, p["w"], (stride, stride),
            [(padding, padding), (padding, padding)],
            dimension_numbers=("NCHW", "OIHW", "NCHW"))
        h = h + p["b"].reshape(1, -1, 1, 1)
        if has_bn:
            s = p["gamma"] * jax.lax.rsqrt(p["var"] + _BN_EPS)
            h = (h - p["mean"].reshape(1, -1, 1, 1)) * s.reshape(1, -1, 1, 1) \
                + p["beta"].reshape(1, -1, 1, 1)
        h = jnp.maximum(h, 0.0)
    B = h.shape[0]
    h = h.reshape(B, -1)
    h = jnp.maximum(h @ params["fc0"]["w"].T + params["fc0"]["b"], 0.0)
    h = h @ params["fc1"]["w"].T + params["fc1"]["b"]
    return h


if __name__ == "__main__":
    key = jax.random.PRNGKey(0)
    kp, kx = jax.random.split(key)
    input_size = (4, 16, 16)                            # (C, H, W)
    params = init_params(kp, input_size)
    prep = prepare_params(params)                       # one-time weight folding
    x = jax.random.normal(kx, (2, *input_size), jnp.float32)

    fwd = jax.jit(vgg11_feat_forward)
    out = jax.block_until_ready(fwd(prep, x))

    ref = jax.block_until_ready(ref_forward(params, x))
    assert out.shape == (2, 128), out.shape
    max_err = float(jnp.max(jnp.abs(out - ref)))
    # bf16 MXU operands (f32 accumulation / f32 epilogue) vs. pure-f32 reference.
    assert jnp.allclose(out, ref, atol=5e-2, rtol=5e-2), max_err

    print("KERNEL_OK")
</pallas_src>

<mosaic_0001>
module attributes {stable_mosaic.version = 11 : i64} {
  func.func @_gemm_kernel(%arg0: i32, %arg1: i32, %arg2: memref<256x128xbf16, #tpu.memory_space<vmem>>, %arg3: memref<128x128xbf16, #tpu.memory_space<vmem>>, %arg4: memref<1x128xf32, #tpu.memory_space<vmem>>, %arg5: memref<1x128xf32, #tpu.memory_space<vmem>>, %arg6: memref<256x128xbf16, #tpu.memory_space<vmem>>) attributes {dimension_semantics = [#tpu.dimension_semantics<parallel>, #tpu.dimension_semantics<parallel>], iteration_bounds = array<i64: 2, 1>, scalar_prefetch = 0 : i64, scratch_operands = 0 : i64, tpu.core_type = #tpu.core_type<tc>, window_params = [{transform_indices = @transform_0, window_bounds = array<i64: 256, 128>}, {transform_indices = @transform_1, window_bounds = array<i64: 128, 128>}, {transform_indices = @transform_2, window_bounds = array<i64: 1, 128>}, {transform_indices = @transform_3, window_bounds = array<i64: 1, 128>}, {transform_indices = @transform_4, window_bounds = array<i64: 256, 128>}]} {
    %c0 = arith.constant 0 : index
    %c0_0 = arith.constant 0 : index
    %0 = vector.load %arg2[%c0, %c0_0] : memref<256x128xbf16, #tpu.memory_space<vmem>>, vector<256x128xbf16>
    %c0_1 = arith.constant 0 : index
    %c0_2 = arith.constant 0 : index
    %1 = vector.load %arg3[%c0_1, %c0_2] : memref<128x128xbf16, #tpu.memory_space<vmem>>, vector<128x128xbf16>
    %cst = arith.constant dense<0.000000e+00> : vector<256x128xf32>
    %2 = tpu.matmul %0, %1, %cst {dimension_numbers = #tpu.dot_dimension_numbers<[1], [0], [0], [1], [0, 0, 1, 1], [], []>} : vector<256x128xbf16>, vector<128x128xbf16>, vector<256x128xf32> -> vector<256x128xf32>
    %c0_3 = arith.constant 0 : index
    %c0_4 = arith.constant 0 : index
    %3 = vector.load %arg4[%c0_3, %c0_4] : memref<1x128xf32, #tpu.memory_space<vmem>>, vector<1x128xf32>
    %4 = vector.broadcast %3 : vector<1x128xf32> to vector<256x128xf32>
    %5 = arith.mulf %2, %4 : vector<256x128xf32>
    %c0_5 = arith.constant 0 : index
    %c0_6 = arith.constant 0 : index
    %6 = vector.load %arg5[%c0_5, %c0_6] : memref<1x128xf32, #tpu.memory_space<vmem>>, vector<1x128xf32>
    %7 = vector.broadcast %6 : vector<1x128xf32> to vector<256x128xf32>
    %8 = arith.addf %5, %7 : vector<256x128xf32>
    %cst_7 = arith.constant 0.000000e+00 : f32
    %9 = vector.broadcast %cst_7 : f32 to vector<256x128xf32>
    %10 = arith.maximumf %8, %9 : vector<256x128xf32>
    %11 = arith.truncf %10 : vector<256x128xf32> to vector<256x128xbf16>
    %c0_8 = arith.constant 0 : index
    %c0_9 = arith.constant 0 : index
    %12 = vector.load %arg6[%c0_8, %c0_9] : memref<256x128xbf16, #tpu.memory_space<vmem>>, vector<256x128xbf16>
    tpu.vector_store %arg6[%c0_8, %c0_9], %11 {strides = array<i32>} : memref<256x128xbf16, #tpu.memory_space<vmem>>, vector<256x128xbf16>,
    return
  }
  func.func @transform_0(%arg0: i32, %arg1: i32) -> (i32, i32) {
    %c0_i32 = arith.constant 0 : i32
    %c0_i32_0 = arith.constant 0 : i32
    return %arg0, %c0_i32 : i32, i32
  }
  func.func @transform_1(%arg0: i32, %arg1: i32) -> (i32, i32) {
    %c0_i32 = arith.constant 0 : i32
    %c0_i32_0 = arith.constant 0 : i32
    return %c0_i32, %arg1 : i32, i32
  }
  func.func @transform_2(%arg0: i32, %arg1: i32) -> (i32, i32) {
    %c0_i32 = arith.constant 0 : i32
    %c0_i32_0 = arith.constant 0 : i32
    return %c0_i32, %arg1 : i32, i32
  }
  func.func @transform_3(%arg0: i32, %arg1: i32) -> (i32, i32) {
    %c0_i32 = arith.constant 0 : i32
    %c0_i32_0 = arith.constant 0 : i32
    return %c0_i32, %arg1 : i32, i32
  }
  func.func @transform_4(%arg0: i32, %arg1: i32) -> (i32, i32) {
    %c0_i32 = arith.constant 0 : i32
    return %arg0, %arg1 : i32, i32
  }
}

module attributes {stable_mosaic.version = 11 : i64} {
  func.func @_gemm_kernel(%arg0: i32, %arg1: i32, %arg2: memref<112x384xbf16, #tpu.memory_space<vmem>>, %arg3: memref<384x128xbf16, #tpu.memory_space<vmem>>, %arg4: memref<1x128xf32, #tpu.memory_space<vmem>>, %arg5: memref<1x128xf32, #tpu.memory_space<vmem>>, %arg6: memref<112x128xbf16, #tpu.memory_space<vmem>>) attributes {dimension_semantics = [#tpu.dimension_semantics<parallel>, #tpu.dimension_semantics<parallel>], iteration_bounds = array<i64: 1, 1>, scalar_prefetch = 0 : i64, scratch_operands = 0 : i64, tpu.core_type = #tpu.core_type<tc>, window_params = [{transform_indices = @transform_0, window_bounds = array<i64: 112, 384>}, {transform_indices = @transform_1, window_bounds = array<i64: 384, 128>}, {transform_indices = @transform_2, window_bounds = array<i64: 1, 128>}, {transform_indices = @transform_3, window_bounds = array<i64: 1, 128>}, {transform_indices = @transform_4, window_bounds = array<i64: 112, 128>}]} {
    %c0 = arith.constant 0 : index
    %c0_0 = arith.constant 0 : index
    %0 = vector.load %arg2[%c0, %c0_0] : memref<112x384xbf16, #tpu.memory_space<vmem>>, vector<112x384xbf16>
    %c0_1 = arith.constant 0 : index
    %c0_2 = arith.constant 0 : index
    %1 = vector.load %arg3[%c0_1, %c0_2] : memref<384x128xbf16, #tpu.memory_space<vmem>>, vector<384x128xbf16>
    %cst = arith.constant dense<0.000000e+00> : vector<112x128xf32>
    %2 = tpu.matmul %0, %1, %cst {dimension_numbers = #tpu.dot_dimension_numbers<[1], [0], [0], [1], [0, 0, 1, 1], [], []>} : vector<112x384xbf16>, vector<384x128xbf16>, vector<112x128xf32> -> vector<112x128xf32>
    %c0_3 = arith.constant 0 : index
    %c0_4 = arith.constant 0 : index
    %3 = vector.load %arg4[%c0_3, %c0_4] : memref<1x128xf32, #tpu.memory_space<vmem>>, vector<1x128xf32>
    %4 = vector.broadcast %3 : vector<1x128xf32> to vector<112x128xf32>
    %5 = arith.mulf %2, %4 : vector<112x128xf32>
    %c0_5 = arith.constant 0 : index
    %c0_6 = arith.constant 0 : index
    %6 = vector.load %arg5[%c0_5, %c0_6] : memref<1x128xf32, #tpu.memory_space<vmem>>, vector<1x128xf32>
    %7 = vector.broadcast %6 : vector<1x128xf32> to vector<112x128xf32>
    %8 = arith.addf %5, %7 : vector<112x128xf32>
    %cst_7 = arith.constant 0.000000e+00 : f32
    %9 = vector.broadcast %cst_7 : f32 to vector<112x128xf32>
    %10 = arith.maximumf %8, %9 : vector<112x128xf32>
    %11 = arith.truncf %10 : vector<112x128xf32> to vector<112x128xbf16>
    %c0_8 = arith.constant 0 : index
    %c0_9 = arith.constant 0 : index
    %12 = vector.load %arg6[%c0_8, %c0_9] : memref<112x128xbf16, #tpu.memory_space<vmem>>, vector<112x128xbf16>
    tpu.vector_store %arg6[%c0_8, %c0_9], %11 {strides = array<i32>} : memref<112x128xbf16, #tpu.memory_space<vmem>>, vector<112x128xbf16>,
    return
  }
  func.func @transform_0(%arg0: i32, %arg1: i32) -> (i32, i32) {
    %c0_i32 = arith.constant 0 : i32
    %c0_i32_0 = arith.constant 0 : i32
    return %arg0, %c0_i32 : i32, i32
  }
  func.func @transform_1(%arg0: i32, %arg1: i32) -> (i32, i32) {
    %c0_i32 = arith.constant 0 : i32
    %c0_i32_0 = arith.constant 0 : i32
    return %c0_i32, %arg1 : i32, i32
  }
  func.func @transform_2(%arg0: i32, %arg1: i32) -> (i32, i32) {
    %c0_i32 = arith.constant 0 : i32
    %c0_i32_0 = arith.constant 0 : i32
    return %c0_i32, %arg1 : i32, i32
  }
  func.func @transform_3(%arg0: i32, %arg1: i32) -> (i32, i32) {
    %c0_i32 = arith.constant 0 : i32
    %c0_i32_0 = arith.constant 0 : i32
    return %c0_i32, %arg1 : i32, i32
  }
  func.func @transform_4(%arg0: i32, %arg1: i32) -> (i32, i32) {
    %c0_i32 = arith.constant 0 : i32
    return %arg0, %arg1 : i32, i32
  }
}

module attributes {stable_mosaic.version = 11 : i64} {
  func.func @_gemm_kernel(%arg0: i32, %arg1: i32, %arg2: memref<32x640xbf16, #tpu.memory_space<vmem>>, %arg3: memref<640x128xbf16, #tpu.memory_space<vmem>>, %arg4: memref<1x128xf32, #tpu.memory_space<vmem>>, %arg5: memref<1x128xf32, #tpu.memory_space<vmem>>, %arg6: memref<32x128xbf16, #tpu.memory_space<vmem>>) attributes {dimension_semantics = [#tpu.dimension_semantics<parallel>, #tpu.dimension_semantics<parallel>], iteration_bounds = array<i64: 1, 1>, scalar_prefetch = 0 : i64, scratch_operands = 0 : i64, tpu.core_type = #tpu.core_type<tc>, window_params = [{transform_indices = @transform_0, window_bounds = array<i64: 32, 640>}, {transform_indices = @transform_1, window_bounds = array<i64: 640, 128>}, {transform_indices = @transform_2, window_bounds = array<i64: 1, 128>}, {transform_indices = @transform_3, window_bounds = array<i64: 1, 128>}, {transform_indices = @transform_4, window_bounds = array<i64: 32, 128>}]} {
    %c0 = arith.constant 0 : index
    %c0_0 = arith.constant 0 : index
    %0 = vector.load %arg2[%c0, %c0_0] : memref<32x640xbf16, #tpu.memory_space<vmem>>, vector<32x640xbf16>
    %c0_1 = arith.constant 0 : index
    %c0_2 = arith.constant 0 : index
    %1 = vector.load %arg3[%c0_1, %c0_2] : memref<640x128xbf16, #tpu.memory_space<vmem>>, vector<640x128xbf16>
    %cst = arith.constant dense<0.000000e+00> : vector<32x128xf32>
    %2 = tpu.matmul %0, %1, %cst {dimension_numbers = #tpu.dot_dimension_numbers<[1], [0], [0], [1], [0, 0, 1, 1], [], []>} : vector<32x640xbf16>, vector<640x128xbf16>, vector<32x128xf32> -> vector<32x128xf32>
    %c0_3 = arith.constant 0 : index
    %c0_4 = arith.constant 0 : index
    %3 = vector.load %arg4[%c0_3, %c0_4] : memref<1x128xf32, #tpu.memory_space<vmem>>, vector<1x128xf32>
    %4 = vector.broadcast %3 : vector<1x128xf32> to vector<32x128xf32>
    %5 = arith.mulf %2, %4 : vector<32x128xf32>
    %c0_5 = arith.constant 0 : index
    %c0_6 = arith.constant 0 : index
    %6 = vector.load %arg5[%c0_5, %c0_6] : memref<1x128xf32, #tpu.memory_space<vmem>>, vector<1x128xf32>
    %7 = vector.broadcast %6 : vector<1x128xf32> to vector<32x128xf32>
    %8 = arith.addf %5, %7 : vector<32x128xf32>
    %cst_7 = arith.constant 0.000000e+00 : f32
    %9 = vector.broadcast %cst_7 : f32 to vector<32x128xf32>
    %10 = arith.maximumf %8, %9 : vector<32x128xf32>
    %11 = arith.truncf %10 : vector<32x128xf32> to vector<32x128xbf16>
    %c0_8 = arith.constant 0 : index
    %c0_9 = arith.constant 0 : index
    %12 = vector.load %arg6[%c0_8, %c0_9] : memref<32x128xbf16, #tpu.memory_space<vmem>>, vector<32x128xbf16>
    tpu.vector_store %arg6[%c0_8, %c0_9], %11 {strides = array<i32>} : memref<32x128xbf16, #tpu.memory_space<vmem>>, vector<32x128xbf16>,
    return
  }
  func.func @transform_0(%arg0: i32, %arg1: i32) -> (i32, i32) {
    %c0_i32 = arith.constant 0 : i32
    %c0_i32_0 = arith.constant 0 : i32
    return %arg0, %c0_i32 : i32, i32
  }
  func.func @transform_1(%arg0: i32, %arg1: i32) -> (i32, i32) {
    %c0_i32 = arith.constant 0 : i32
    %c0_i32_0 = arith.constant 0 : i32
    return %c0_i32, %arg1 : i32, i32
  }
  func.func @transform_2(%arg0: i32, %arg1: i32) -> (i32, i32) {
    %c0_i32 = arith.constant 0 : i32
    %c0_i32_0 = arith.constant 0 : i32
    return %c0_i32, %arg1 : i32, i32
  }
  func.func @transform_3(%arg0: i32, %arg1: i32) -> (i32, i32) {
    %c0_i32 = arith.constant 0 : i32
    %c0_i32_0 = arith.constant 0 : i32
    return %c0_i32, %arg1 : i32, i32
  }
  func.func @transform_4(%arg0: i32, %arg1: i32) -> (i32, i32) {
    %c0_i32 = arith.constant 0 : i32
    return %arg0, %arg1 : i32, i32
  }
}

module attributes {stable_mosaic.version = 11 : i64} {
  func.func @_head_kernel(%arg0: i32, %arg1: memref<16x1152xbf16, #tpu.memory_space<vmem>>, %arg2: memref<1152x128xbf16, #tpu.memory_space<vmem>>, %arg3: memref<1x128xf32, #tpu.memory_space<vmem>>, %arg4: memref<1x128xf32, #tpu.memory_space<vmem>>, %arg5: memref<128x1024xbf16, #tpu.memory_space<vmem>>, %arg6: memref<1x1024xf32, #tpu.memory_space<vmem>>, %arg7: memref<1024x128xbf16, #tpu.memory_space<vmem>>, %arg8: memref<1x128xf32, #tpu.memory_space<vmem>>, %arg9: memref<16x128xf32, #tpu.memory_space<vmem>>) attributes {dimension_semantics = [#tpu.dimension_semantics<arbitrary>], iteration_bounds = array<i64: 1>, scalar_prefetch = 0 : i64, scratch_operands = 0 : i64, tpu.core_type = #tpu.core_type<tc>, window_params = [{pipeline_mode = #tpu.pipeline_mode<synchronous>, transform_indices = @transform_0, window_bounds = array<i64: 16, 1152>}, {pipeline_mode = #tpu.pipeline_mode<synchronous>, transform_indices = @transform_1, window_bounds = array<i64: 1152, 128>}, {pipeline_mode = #tpu.pipeline_mode<synchronous>, transform_indices = @transform_2, window_bounds = array<i64: 1, 128>}, {pipeline_mode = #tpu.pipeline_mode<synchronous>, transform_indices = @transform_3, window_bounds = array<i64: 1, 128>}, {pipeline_mode = #tpu.pipeline_mode<synchronous>, transform_indices = @transform_4, window_bounds = array<i64: 128, 1024>}, {pipeline_mode = #tpu.pipeline_mode<synchronous>, transform_indices = @transform_5, window_bounds = array<i64: 1, 1024>}, {pipeline_mode = #tpu.pipeline_mode<synchronous>, transform_indices = @transform_6, window_bounds = array<i64: 1024, 128>}, {pipeline_mode = #tpu.pipeline_mode<synchronous>, transform_indices = @transform_7, window_bounds = array<i64: 1, 128>}, {pipeline_mode = #tpu.pipeline_mode<synchronous>, transform_indices = @transform_8, window_bounds = array<i64: 16, 128>}]} {
    %c0 = arith.constant 0 : index
    %c0_0 = arith.constant 0 : index
    %0 = vector.load %arg1[%c0, %c0_0] : memref<16x1152xbf16, #tpu.memory_space<vmem>>, vector<16x1152xbf16>
    %c0_1 = arith.constant 0 : index
    %c0_2 = arith.constant 0 : index
    %1 = vector.load %arg2[%c0_1, %c0_2] : memref<1152x128xbf16, #tpu.memory_space<vmem>>, vector<1152x128xbf16>
    %cst = arith.constant dense<0.000000e+00> : vector<16x128xf32>
    %2 = tpu.matmul %0, %1, %cst {dimension_numbers = #tpu.dot_dimension_numbers<[1], [0], [0], [1], [0, 0, 1, 1], [], []>} : vector<16x1152xbf16>, vector<1152x128xbf16>, vector<16x128xf32> -> vector<16x128xf32>
    %c0_3 = arith.constant 0 : index
    %c0_4 = arith.constant 0 : index
    %3 = vector.load %arg3[%c0_3, %c0_4] : memref<1x128xf32, #tpu.memory_space<vmem>>, vector<1x128xf32>
    %4 = vector.broadcast %3 : vector<1x128xf32> to vector<16x128xf32>
    %5 = arith.mulf %2, %4 : vector<16x128xf32>
    %c0_5 = arith.constant 0 : index
    %c0_6 = arith.constant 0 : index
    %6 = vector.load %arg4[%c0_5, %c0_6] : memref<1x128xf32, #tpu.memory_space<vmem>>, vector<1x128xf32>
    %7 = vector.broadcast %6 : vector<1x128xf32> to vector<16x128xf32>
    %8 = arith.addf %5, %7 : vector<16x128xf32>
    %cst_7 = arith.constant 0.000000e+00 : f32
    %9 = vector.broadcast %cst_7 : f32 to vector<16x128xf32>
    %10 = arith.maximumf %8, %9 : vector<16x128xf32>
    %11 = arith.truncf %10 : vector<16x128xf32> to vector<16x128xbf16>
    %c0_8 = arith.constant 0 : index
    %c0_9 = arith.constant 0 : index
    %12 = vector.load %arg5[%c0_8, %c0_9] : memref<128x1024xbf16, #tpu.memory_space<vmem>>, vector<128x1024xbf16>
    %cst_10 = arith.constant dense<0.000000e+00> : vector<16x1024xf32>
    %13 = tpu.matmul %11, %12, %cst_10 {dimension_numbers = #tpu.dot_dimension_numbers<[1], [0], [0], [1], [0, 0, 1, 1], [], []>} : vector<16x128xbf16>, vector<128x1024xbf16>, vector<16x1024xf32> -> vector<16x1024xf32>
    %c0_11 = arith.constant 0 : index
    %c0_12 = arith.constant 0 : index
    %14 = vector.load %arg6[%c0_11, %c0_12] : memref<1x1024xf32, #tpu.memory_space<vmem>>, vector<1x1024xf32>
    %15 = vector.broadcast %14 : vector<1x1024xf32> to vector<16x1024xf32>
    %16 = arith.addf %13, %15 : vector<16x1024xf32>
    %cst_13 = arith.constant 0.000000e+00 : f32
    %17 = vector.broadcast %cst_13 : f32 to vector<16x1024xf32>
    %18 = arith.maximumf %16, %17 : vector<16x1024xf32>
    %19 = arith.truncf %18 : vector<16x1024xf32> to vector<16x1024xbf16>
    %c0_14 = arith.constant 0 : index
    %c0_15 = arith.constant 0 : index
    %20 = vector.load %arg7[%c0_14, %c0_15] : memref<1024x128xbf16, #tpu.memory_space<vmem>>, vector<1024x128xbf16>
    %cst_16 = arith.constant dense<0.000000e+00> : vector<16x128xf32>
    %21 = tpu.matmul %19, %20, %cst_16 {dimension_numbers = #tpu.dot_dimension_numbers<[1], [0], [0], [1], [0, 0, 1, 1], [], []>} : vector<16x1024xbf16>, vector<1024x128xbf16>, vector<16x128xf32> -> vector<16x128xf32>
    %c0_17 = arith.constant 0 : index
    %c0_18 = arith.constant 0 : index
    %22 = vector.load %arg8[%c0_17, %c0_18] : memref<1x128xf32, #tpu.memory_space<vmem>>, vector<1x128xf32>
    %23 = vector.broadcast %22 : vector<1x128xf32> to vector<16x128xf32>
    %24 = arith.addf %21, %23 : vector<16x128xf32>
    %c0_19 = arith.constant 0 : index
    %c0_20 = arith.constant 0 : index
    %25 = vector.load %arg9[%c0_19, %c0_20] : memref<16x128xf32, #tpu.memory_space<vmem>>, vector<16x128xf32>
    tpu.vector_store %arg9[%c0_19, %c0_20], %24 {strides = array<i32>} : memref<16x128xf32, #tpu.memory_space<vmem>>, vector<16x128xf32>,
    return
  }
  func.func @transform_0(%arg0: i32) -> (i32, i32) {
    %c0_i32 = arith.constant 0 : i32
    %c0_i32_0 = arith.constant 0 : i32
    %c0_i32_1 = arith.constant 0 : i32
    return %c0_i32, %c0_i32_0 : i32, i32
  }
  func.func @transform_1(%arg0: i32) -> (i32, i32) {
    %c0_i32 = arith.constant 0 : i32
    %c0_i32_0 = arith.constant 0 : i32
    %c0_i32_1 = arith.constant 0 : i32
    return %c0_i32, %c0_i32_0 : i32, i32
  }
  func.func @transform_2(%arg0: i32) -> (i32, i32) {
    %c0_i32 = arith.constant 0 : i32
    %c0_i32_0 = arith.constant 0 : i32
    %c0_i32_1 = arith.constant 0 : i32
    return %c0_i32, %c0_i32_0 : i32, i32
  }
  func.func @transform_3(%arg0: i32) -> (i32, i32) {
    %c0_i32 = arith.constant 0 : i32
    %c0_i32_0 = arith.constant 0 : i32
    %c0_i32_1 = arith.constant 0 : i32
    return %c0_i32, %c0_i32_0 : i32, i32
  }
  func.func @transform_4(%arg0: i32) -> (i32, i32) {
    %c0_i32 = arith.constant 0 : i32
    %c0_i32_0 = arith.constant 0 : i32
    %c0_i32_1 = arith.constant 0 : i32
    return %c0_i32, %c0_i32_0 : i32, i32
  }
  func.func @transform_5(%arg0: i32) -> (i32, i32) {
    %c0_i32 = arith.constant 0 : i32
    %c0_i32_0 = arith.constant 0 : i32
    %c0_i32_1 = arith.constant 0 : i32
    return %c0_i32, %c0_i32_0 : i32, i32
  }
  func.func @transform_6(%arg0: i32) -> (i32, i32) {
    %c0_i32 = arith.constant 0 : i32
    %c0_i32_0 = arith.constant 0 : i32
    %c0_i32_1 = arith.constant 0 : i32
    return %c0_i32, %c0_i32_0 : i32, i32
  }
  func.func @transform_7(%arg0: i32) -> (i32, i32) {
    %c0_i32 = arith.constant 0 : i32
    %c0_i32_0 = arith.constant 0 : i32
    %c0_i32_1 = arith.constant 0 : i32
    return %c0_i32, %c0_i32_0 : i32, i32
  }
  func.func @transform_8(%arg0: i32) -> (i32, i32) {
    %c0_i32 = arith.constant 0 : i32
    %c0_i32_0 = arith.constant 0 : i32
    %c0_i32_1 = arith.constant 0 : i32
    return %c0_i32, %c0_i32_0 : i32, i32
  }
}

</mosaic_0001>

<llo_original>
// kernel: vgg11_feat_forward.6
$region0: #{vgg11_feat_forward.6}
  #allocation0 [shape = 'u32[]', space=smem, size = 0x4, offset = 0x4, fixed_abs, tag = 'smem constant byte address 0x4 - core index']
  #allocation1 [shape = 'u32[144,128]{1,0:T(1,128)}', space=vmem, size = 0x12000, scoped, tag = 'internal scratch']
  %s0 = inlined_call_operand.vmem [shape: bf16[512,128], index: 0, kind: input, shape index: {}]
  %s1 = inlined_call_operand.vmem [shape: bf16[128,128], index: 1, kind: input, shape index: {}]
  %s2 = inlined_call_operand.vmem [shape: f32[1,128], index: 2, kind: input, shape index: {}]
  %s3 = inlined_call_operand.vmem [shape: f32[1,128], index: 3, kind: input, shape index: {}]
  %s4 = inlined_call_operand.vmem [shape: bf16[512,128], index: 4, kind: output, shape index: {}]
  %s5 = sld [smem:[#allocation0]]
  $region49: #{vgg11_feat_forward.6} parent=0
    _
  %s7 = ssub.s32 1, %s5
  %s8 = scalar_select 0, %s7, %s5
  loop: start=0, step=1, limit=4
  $region2: #{vgg11_feat_forward.6} parent=0 // loop_pre_header
    _
  $region3: #{vgg11_feat_forward.6} parent=0 // loop_header
    %s10 = sphi 0, %s14
    %p11 = scmp.ge.s32.totalorder %s10, 4
    %s17 = sphi 0, %s29
    %s18 = sphi 0, %s25
    %s19 = sphi 0, %s17
    %s20 = sphi 0, %s18
    %s21 = sphi 0, %s19
    %s22 = sphi 0, %s20
    %s32 = sphi 0, %s34
    %s35 = sphi 0, %s32
    %s36 = sphi 0, %s35
    %s52 = sphi 0, %s36
    %s58 = sphi 0, %s60
    %s61 = sphi 0, %s58
    %s62 = sphi 0, %s61
    %s78 = sphi 0, %s62
    %s84 = sphi 0, %s86
    %s87 = sphi 0, %s84
    %s88 = sphi 0, %s87
    %s104 = sphi 0, %s88
    %s110 = sphi 0, %s112
    %s113 = sphi 0, %s110
    %s114 = sphi 0, %s113
    %s130 = sphi 0, %s114
    %s138 = sphi 0, %s140
    %s141 = sphi 0, %s138
    %s142 = sphi 0, %s141
    %s158 = sphi 0, %s142
  $region4: #{vgg11_feat_forward.6} parent=0 // loop_header_branch
    %13 = sbr.rel (%p11) target = $region8
  $region5: #{vgg11_feat_forward.6} parent=0 // loop_body
    %s15 = ssub.s32 %s10, 1
    %s16 = ssub.s32 %s10, 2
    %s23 = sadd.s32 1, %s18
    %p24 = scmp.ge.s32.totalorder %s23, 1
    %s25 = scalar_select %p24, 0, %s23
    %s26 = sadd.s32 1, %s17
    %s27 = scalar_select %p24, %s26, %s17
    %p28 = scmp.ge.s32.totalorder %s27, 2
    %s29 = scalar_select %p28, 0, %s27
    %s30 = ssub.s32 %s17, %s29
    %p31 = scmp.eq.s32.totalorder %s30, 0
    %s33 = sadd.s32 %s32, 1
    %s34 = scalar_select %p31, %s32, %s33
    %p37 = pneg %p31
    %p38 = scmp.eq.s32.totalorder %s10, 1
    %p39 = por %p37, %p38
    %p40 = scmp.ne.s32.totalorder %s32, %s35
    %p41 = scmp.eq.s32.totalorder %s10, 0
    %p42 = por %p40, %p41
    %p43 = scmp.ne.s32.totalorder %s32, %s35
    %p44 = scmp.eq.s32.totalorder %s15, 1
    %p45 = por %p43, %p44
    %p46 = scmp.ne.s32.totalorder %s35, %s36
    %p47 = scmp.eq.s32.totalorder %s15, 0
    %p48 = por %p46, %p47
    %p49 = scmp.ne.s32.totalorder %s35, %s36
    %p50 = scmp.eq.s32.totalorder %s16, 1
    %p51 = por %p49, %p50
    %p53 = scmp.ne.s32.totalorder %s36, %s52
    %p54 = scmp.eq.s32.totalorder %s16, 0
    %p55 = por %p53, %p54
    %s56 = ssub.s32 %s18, %s25
    %p57 = scmp.eq.s32.totalorder %s56, 0
    %s59 = sadd.s32 %s58, 1
    %s60 = scalar_select %p57, %s58, %s59
    %p63 = pneg %p57
    %p64 = scmp.eq.s32.totalorder %s10, 1
    %p65 = por %p63, %p64
    %p66 = scmp.ne.s32.totalorder %s58, %s61
    %p67 = scmp.eq.s32.totalorder %s10, 0
    %p68 = por %p66, %p67
    %p69 = scmp.ne.s32.totalorder %s58, %s61
    %p70 = scmp.eq.s32.totalorder %s15, 1
    %p71 = por %p69, %p70
    %p72 = scmp.ne.s32.totalorder %s61, %s62
    %p73 = scmp.eq.s32.totalorder %s15, 0
    %p74 = por %p72, %p73
    %p75 = scmp.ne.s32.totalorder %s61, %s62
    %p76 = scmp.eq.s32.totalorder %s16, 1
    %p77 = por %p75, %p76
    %p79 = scmp.ne.s32.totalorder %s62, %s78
    %p80 = scmp.eq.s32.totalorder %s16, 0
    %p81 = por %p79, %p80
    %s82 = ssub.s32 %s18, %s25
    %p83 = scmp.eq.s32.totalorder %s82, 0
    %s85 = sadd.s32 %s84, 1
    %s86 = scalar_select %p83, %s84, %s85
    %p89 = pneg %p83
    %p90 = scmp.eq.s32.totalorder %s10, 1
    %p91 = por %p89, %p90
    %p92 = scmp.ne.s32.totalorder %s84, %s87
    %p93 = scmp.eq.s32.totalorder %s10, 0
    %p94 = por %p92, %p93
    %p95 = scmp.ne.s32.totalorder %s84, %s87
    %p96 = scmp.eq.s32.totalorder %s15, 1
    %p97 = por %p95, %p96
    %p98 = scmp.ne.s32.totalorder %s87, %s88
    %p99 = scmp.eq.s32.totalorder %s15, 0
    %p100 = por %p98, %p99
    %p101 = scmp.ne.s32.totalorder %s87, %s88
    %p102 = scmp.eq.s32.totalorder %s16, 1
    %p103 = por %p101, %p102
    %p105 = scmp.ne.s32.totalorder %s88, %s104
    %p106 = scmp.eq.s32.totalorder %s16, 0
    %p107 = por %p105, %p106
    %s108 = ssub.s32 %s18, %s25
    %p109 = scmp.eq.s32.totalorder %s108, 0
    %s111 = sadd.s32 %s110, 1
    %s112 = scalar_select %p109, %s110, %s111
    %p115 = pneg %p109
    %p116 = scmp.eq.s32.totalorder %s10, 1
    %p117 = por %p115, %p116
    %p118 = scmp.ne.s32.totalorder %s110, %s113
    %p119 = scmp.eq.s32.totalorder %s10, 0
    %p120 = por %p118, %p119
    %p121 = scmp.ne.s32.totalorder %s110, %s113
    %p122 = scmp.eq.s32.totalorder %s15, 1
    %p123 = por %p121, %p122
    %p124 = scmp.ne.s32.totalorder %s113, %s114
    %p125 = scmp.eq.s32.totalorder %s15, 0
    %p126 = por %p124, %p125
    %p127 = scmp.ne.s32.totalorder %s113, %s114
    %p128 = scmp.eq.s32.totalorder %s16, 1
    %p129 = por %p127, %p128
    %p131 = scmp.ne.s32.totalorder %s114, %s130
    %p132 = scmp.eq.s32.totalorder %s16, 0
    %p133 = por %p131, %p132
    %s134 = ssub.s32 %s17, %s29
    %s135 = ssub.s32 %s18, %s25
    %s136 = sor.u32 %s134, %s135
    %p137 = scmp.eq.s32.totalorder %s136, 0
    %s139 = sadd.s32 %s138, 1
    %s140 = scalar_select %p137, %s138, %s139
    %p143 = pneg %p137
    %p144 = scmp.eq.s32.totalorder %s10, 1
    %p145 = por %p143, %p144
    %p146 = scmp.ne.s32.totalorder %s138, %s141
    %p147 = scmp.eq.s32.totalorder %s10, 0
    %p148 = por %p146, %p147
    %p149 = scmp.ne.s32.totalorder %s138, %s141
    %p150 = scmp.eq.s32.totalorder %s15, 1
    %p151 = por %p149, %p150
    %p152 = scmp.ne.s32.totalorder %s141, %s142
    %p153 = scmp.eq.s32.totalorder %s15, 0
    %p154 = por %p152, %p153
    %p155 = scmp.ne.s32.totalorder %s141, %s142
    %p156 = scmp.eq.s32.totalorder %s16, 1
    %p157 = por %p155, %p156
    %p159 = scmp.ne.s32.totalorder %s142, %s158
    %p160 = scmp.eq.s32.totalorder %s16, 0
    %p161 = por %p159, %p160
    %p162 = scmp.le.s32.totalorder 1, %s10
    %p163 = scmp.lt.s32.totalorder %s10, 3
    %p164 = pnand %p162, %p163
    %p165 = pneg %p164
    // Predicated region
    $region9: #{vgg11_feat_forward.6} parent=5 // pred_check
      _
    $region10: #{vgg11_feat_forward.6} parent=5 // pred_check_branch
      %167 = sbr.rel (%p164) target = $region12
    $region11: #{vgg11_feat_forward.6} parent=5 // pred_region
      %s168 = ssub.s32 %s10, 1
      // Predicated region
      $region13: #{vgg11_feat_forward.6} parent=11 // pred_check
        %p169 = pneg %p74
      $region14: #{vgg11_feat_forward.6} parent=11 // pred_check_branch
        %171 = sbr.rel (%p169) target = $region16
      $region15: #{vgg11_feat_forward.6} parent=11 // pred_region
        %p172 = scmp.lt.s32.totalorder %s20, 0
        %s173 = scalar_select %p172, %s20, 0
        %s174 = smul.addr %s173, 4
        %s175 = scalar_lea.vmem %s1, %s174
      $region16: #{vgg11_feat_forward.6} parent=11 // pred_fallthru
        _
      // Predicated region
      $region17: #{vgg11_feat_forward.6} parent=11 // pred_check
        %p176 = pneg %p100
      $region18: #{vgg11_feat_forward.6} parent=11 // pred_check_branch
        %178 = sbr.rel (%p176) target = $region20
      $region19: #{vgg11_feat_forward.6} parent=11 // pred_region
        %p179 = scmp.lt.s32.totalorder %s20, 0
        %s180 = scalar_select %p179, %s20, 0
        %s181 = scalar_lea.vmem %s2, %s180
      $region20: #{vgg11_feat_forward.6} parent=11 // pred_fallthru
        _
      // Predicated region
      $region21: #{vgg11_feat_forward.6} parent=11 // pred_check
        %p182 = pneg %p126
      $region22: #{vgg11_feat_forward.6} parent=11 // pred_check_branch
        %184 = sbr.rel (%p182) target = $region24
      $region23: #{vgg11_feat_forward.6} parent=11 // pred_region
        %p185 = scmp.lt.s32.totalorder %s20, 0
        %s186 = scalar_select %p185, %s20, 0
        %s187 = scalar_lea.vmem %s3, %s186
      $region24: #{vgg11_feat_forward.6} parent=11 // pred_fallthru
        _
    $region12: #{vgg11_feat_forward.6} parent=5 // pred_fallthru
      _
    %p188 = scmp.lt.s32.totalorder %s10, 2
    // Predicated region
    $region25: #{vgg11_feat_forward.6} parent=5 // pred_check
      %p189 = pneg %p188
    $region26: #{vgg11_feat_forward.6} parent=5 // pred_check_branch
      %191 = sbr.rel (%p189) target = $region28
    $region27: #{vgg11_feat_forward.6} parent=5 // pred_region
      // Predicated region
      $region29: #{vgg11_feat_forward.6} parent=27 // pred_check
        %p192 = pneg %p42
      $region30: #{vgg11_feat_forward.6} parent=27 // pred_check_branch
        %194 = sbr.rel (%p192) target = $region32
      $region31: #{vgg11_feat_forward.6} parent=27 // pred_region
        %s195 = smul.u32 32, %s17
        %p196 = scmp.lt.s32.totalorder %s195, 63
        %s197 = scalar_select %p196, %s195, 63
        %s198 = smul.addr %s197, 4
        %s199 = scalar_lea.vmem %s0, %s198
        %s200 = smul.u32 32, %s17
      $region32: #{vgg11_feat_forward.6} parent=27 // pred_fallthru
        _
    $region28: #{vgg11_feat_forward.6} parent=5 // pred_fallthru
      _
    %p201 = scmp.le.s32.totalorder 1, %s10
    %p202 = scmp.lt.s32.totalorder %s10, 3
    %p203 = pnand %p201, %p202
    %p204 = pneg %p203
    // Predicated region
    $region33: #{vgg11_feat_forward.6} parent=5 // pred_check
      _
    $region34: #{vgg11_feat_forward.6} parent=5 // pred_check_branch
      %206 = sbr.rel (%p203) target = $region36
    $region35: #{vgg11_feat_forward.6} parent=5 // pred_region
      %s207 = ssub.s32 %s10, 1
      %s208 = smul.u32 32, %s19
      %p209 = scmp.lt.s32.totalorder %s208, 63
      %s210 = scalar_select %p209, %s208, 63
      %s211 = smul.addr %s210, 4
      %s212 = scalar_lea.vmem %s0, %s211
      %p213 = pneg %p48
      %p214 = pneg %p45
      %p215 = scmp.lt.s32.totalorder %s20, 0
      %s216 = scalar_select %p215, %s20, 0
      %s217 = smul.addr %s216, 4
      %s218 = scalar_lea.vmem %s1, %s217
      %p219 = pneg %p74
      %p220 = pneg %p71
      %p221 = scmp.lt.s32.totalorder %s20, 0
      %s222 = scalar_select %p221, %s20, 0
      %s223 = scalar_lea.vmem %s2, %s222
      %p224 = pneg %p100
      %p225 = pneg %p97
      %p226 = scmp.lt.s32.totalorder %s20, 0
      %s227 = scalar_select %p226, %s20, 0
      %s228 = scalar_lea.vmem %s3, %s227
      %p229 = pneg %p126
      %p230 = pneg %p123
      %p231 = pneg %p154
      %p232 = pneg %p151
      %s233 = smul.u32 32, %s19
      %p234 = scmp.lt.s32.totalorder %s233, 63
      %s235 = scalar_select %p234, %s233, 63
      %p236 = scmp.lt.s32.totalorder %s20, 0
      %s237 = scalar_select %p236, %s20, 0
      %s238 = sadd.s32 %s237, %s235
      %s239 = smul.addr %s238, 4
      %s240 = scalar_lea.vmem %s4, %s239
      %s241 = smul.u32 32, %s19
      %p242 = scmp.lt.s32.totalorder %s241, 63
      %s243 = scalar_select %p242, %s241, 63
      %s244 = smul.addr %s243, 4
      %s245 = scalar_lea.vmem %s0, %s244
      %s246 = smul.u32 32, %s19
      %p247 = scmp.lt.s32.totalorder %s20, 0
      %s248 = scalar_select %p247, %s20, 0
      %s249 = smul.addr %s248, 4
      %s250 = scalar_lea.vmem %s1, %s249
      %p251 = scmp.lt.s32.totalorder %s20, 0
      %s252 = scalar_select %p251, %s20, 0
      %s253 = scalar_lea.vmem %s2, %s252
      %p254 = scmp.lt.s32.totalorder %s20, 0
      %s255 = scalar_select %p254, %s20, 0
      %s256 = scalar_lea.vmem %s3, %s255
      %s257 = smul.u32 32, %s19
      %p258 = scmp.lt.s32.totalorder %s257, 63
      %s259 = scalar_select %p258, %s257, 63
      %p260 = scmp.lt.s32.totalorder %s20, 0
      %s261 = scalar_select %p260, %s20, 0
      %s262 = sadd.s32 %s261, %s259
      %s263 = smul.addr %s262, 4
      %s264 = scalar_lea.vmem %s4, %s263
      %s265 = smul.u32 32, %s19
      %v267 = vld [vmem:[%s245] sm:$0xf]
      %v268 = vld [vmem:[%s245 + $0x4] sm:$0xf]
      %v269 = vld [vmem:[%s245 + $0x8] sm:$0xf]
      %v270 = vld [vmem:[%s245 + $0xc] sm:$0xf]
      %v271 = vld [vmem:[%s245 + $0x10] sm:$0xf]
      %v272 = vld [vmem:[%s245 + $0x14] sm:$0xf]
      %v273 = vld [vmem:[%s245 + $0x18] sm:$0xf]
      %v274 = vld [vmem:[%s245 + $0x1c] sm:$0xf]
      %v275 = vld [vmem:[%s245 + $0x20] sm:$0xf]
      %v276 = vld [vmem:[%s245 + $0x24] sm:$0xf]
      %v277 = vld [vmem:[%s245 + $0x28] sm:$0xf]
      %v278 = vld [vmem:[%s245 + $0x2c] sm:$0xf]
      %v279 = vld [vmem:[%s245 + $0x30] sm:$0xf]
      %v280 = vld [vmem:[%s245 + $0x34] sm:$0xf]
      %v281 = vld [vmem:[%s245 + $0x38] sm:$0xf]
      %v282 = vld [vmem:[%s245 + $0x3c] sm:$0xf]
      %v283 = vld [vmem:[%s245 + $0x40] sm:$0xf]
      %v284 = vld [vmem:[%s245 + $0x44] sm:$0xf]
      %v285 = vld [vmem:[%s245 + $0x48] sm:$0xf]
      %v286 = vld [vmem:[%s245 + $0x4c] sm:$0xf]
      %v287 = vld [vmem:[%s245 + $0x50] sm:$0xf]
      %v288 = vld [vmem:[%s245 + $0x54] sm:$0xf]
      %v289 = vld [vmem:[%s245 + $0x58] sm:$0xf]
      %v290 = vld [vmem:[%s245 + $0x5c] sm:$0xf]
      %v291 = vld [vmem:[%s245 + $0x60] sm:$0xf]
      %v292 = vld [vmem:[%s245 + $0x64] sm:$0xf]
      %v293 = vld [vmem:[%s245 + $0x68] sm:$0xf]
      %v294 = vld [vmem:[%s245 + $0x6c] sm:$0xf]
      %v295 = vld [vmem:[%s245 + $0x70] sm:$0xf]
      %v296 = vld [vmem:[%s245 + $0x74] sm:$0xf]
      %v297 = vld [vmem:[%s245 + $0x78] sm:$0xf]
      %v298 = vld [vmem:[%s245 + $0x7c] sm:$0xf]
      %v299 = vld [vmem:[%s250] sm:$0xf]
      %v300 = vld [vmem:[%s250 + $0x4] sm:$0xf]
      %v301 = vld [vmem:[%s250 + $0x8] sm:$0xf]
      %v302 = vld [vmem:[%s250 + $0xc] sm:$0xf]
      %v303 = vld [vmem:[%s250 + $0x10] sm:$0xf]
      %v304 = vld [vmem:[%s250 + $0x14] sm:$0xf]
      %v305 = vld [vmem:[%s250 + $0x18] sm:$0xf]
      %v306 = vld [vmem:[%s250 + $0x1c] sm:$0xf]
      %v307 = vld [vmem:[%s250 + $0x20] sm:$0xf]
      %v308 = vld [vmem:[%s250 + $0x24] sm:$0xf]
      %v309 = vld [vmem:[%s250 + $0x28] sm:$0xf]
      %v310 = vld [vmem:[%s250 + $0x2c] sm:$0xf]
      %v311 = vld [vmem:[%s250 + $0x30] sm:$0xf]
      %v312 = vld [vmem:[%s250 + $0x34] sm:$0xf]
      %v313 = vld [vmem:[%s250 + $0x38] sm:$0xf]
      %v314 = vld [vmem:[%s250 + $0x3c] sm:$0xf]
      %v347 = vunpack.c.l.b16 %v267
      %v348 = vunpack.c.l.b16 %v268
      %v349 = vunpack.c.l.b16 %v269
      %v350 = vunpack.c.l.b16 %v270
      %v351 = vunpack.c.l.b16 %v271
      %v352 = vunpack.c.l.b16 %v272
      %v353 = vunpack.c.l.b16 %v273
      %v354 = vunpack.c.l.b16 %v274
      %v355 = vunpack.c.l.b16 %v275
      %v356 = vunpack.c.l.b16 %v276
      %v357 = vunpack.c.l.b16 %v277
      %v358 = vunpack.c.l.b16 %v278
      %v359 = vunpack.c.l.b16 %v279
      %v360 = vunpack.c.l.b16 %v280
      %v361 = vunpack.c.l.b16 %v281
      %v362 = vunpack.c.l.b16 %v282
      %v363 = vunpack.c.l.b16 %v283
      %v364 = vunpack.c.l.b16 %v284
      %v365 = vunpack.c.l.b16 %v285
      %v366 = vunpack.c.l.b16 %v286
      %v367 = vunpack.c.l.b16 %v287
      %v368 = vunpack.c.l.b16 %v288
      %v369 = vunpack.c.l.b16 %v289
      %v370 = vunpack.c.l.b16 %v290
      %v371 = vunpack.c.l.b16 %v291
      %v372 = vunpack.c.l.b16 %v292
      %v373 = vunpack.c.l.b16 %v293
      %v374 = vunpack.c.l.b16 %v294
      %v375 = vunpack.c.l.b16 %v295
      %v376 = vunpack.c.l.b16 %v296
      %v377 = vunpack.c.l.b16 %v297
      %v378 = vunpack.c.l.b16 %v298
      %v379 = vpack.c.b16 %v348, %v347
      %v380 = vpack.c.b16 %v350, %v349
      %v381 = vpack.c.b16 %v352, %v351
      %v382 = vpack.c.b16 %v354, %v353
      %v383 = vpack.c.b16 %v356, %v355
      %v384 = vpack.c.b16 %v358, %v357
      %v385 = vpack.c.b16 %v360, %v359
      %v386 = vpack.c.b16 %v362, %v361
      %v387 = vpack.c.b16 %v364, %v363
      %v388 = vpack.c.b16 %v366, %v365
      %v389 = vpack.c.b16 %v368, %v367
      %v390 = vpack.c.b16 %v370, %v369
      %v391 = vpack.c.b16 %v372, %v371
      %v392 = vpack.c.b16 %v374, %v373
      %v393 = vpack.c.b16 %v376, %v375
      %v394 = vpack.c.b16 %v378, %v377
      %v427 = vunpack.c.l.b16 %v299
      %v428 = vunpack.c.l.b16 %v300
      %v429 = vunpack.c.l.b16 %v301
      %v430 = vunpack.c.l.b16 %v302
      %v431 = vunpack.c.l.b16 %v303
      %v432 = vunpack.c.l.b16 %v304
      %v433 = vunpack.c.l.b16 %v305
      %v434 = vunpack.c.l.b16 %v306
      %v435 = vunpack.c.l.b16 %v307
      %v436 = vunpack.c.l.b16 %v308
      %v437 = vunpack.c.l.b16 %v309
      %v438 = vunpack.c.l.b16 %v310
      %v439 = vunpack.c.l.b16 %v311
      %v440 = vunpack.c.l.b16 %v312
      %v441 = vunpack.c.l.b16 %v313
      %v442 = vunpack.c.l.b16 %v314
      %v443 = vpack.c.b16 %v428, %v427
      %v444 = vpack.c.b16 %v430, %v429
      %v445 = vpack.c.b16 %v432, %v431
      %v446 = vpack.c.b16 %v434, %v433
      %v447 = vpack.c.b16 %v436, %v435
      %v448 = vpack.c.b16 %v438, %v437
      %v449 = vpack.c.b16 %v440, %v439
      %v450 = vpack.c.b16 %v442, %v441
      %459 = vmatprep.subr.bf16.mxu0 0
      %460 = vmatpush1.bf16.msra.mxu0 %v443
      %461 = vmatprep.subr.bf16.mxu0 0
      %462 = vmatpush1.bf16.msra.mxu0 %v444
      %463 = vmatprep.subr.bf16.mxu0 0
      %464 = vmatpush1.bf16.msra.mxu0 %v445
      %465 = vmatprep.subr.bf16.mxu0 0
      %466 = vmatpush1.bf16.msra.mxu0 %v446
      %467 = vmatprep.subr.bf16.mxu0 0
      %468 = vmatpush1.bf16.msra.mxu0 %v447
      %469 = vmatprep.subr.bf16.mxu0 0
      %470 = vmatpush1.bf16.msra.mxu0 %v448
      %471 = vmatprep.subr.bf16.mxu0 0
      %472 = vmatpush1.bf16.msra.mxu0 %v449
      %473 = vmatprep.subr.bf16.mxu0 0
      %474 = vmatpush1.bf16.msra.mxu0 %v450
      %475 = vmatprep.subr.bf16.mxu0 0
      %476 = vmatpush1.bf16.msra.mxu0 0
      %477 = vmatprep.subr.bf16.mxu0 0
      %478 = vmatpush1.bf16.msra.mxu0 0
      %479 = vmatprep.subr.bf16.mxu0 0
      %480 = vmatpush1.bf16.msra.mxu0 0
      %481 = vmatprep.subr.bf16.mxu0 0
      %482 = vmatpush1.bf16.msra.mxu0 0
      %483 = vmatprep.subr.bf16.mxu0 0
      %484 = vmatpush1.bf16.msra.mxu0 0
      %485 = vmatprep.subr.bf16.mxu0 0
      %486 = vmatpush1.bf16.msra.mxu0 0
      %487 = vmatprep.subr.bf16.mxu0 0
      %488 = vmatpush1.bf16.msra.mxu0 0
      %489 = vmatprep.subr.bf16.mxu0 0
      %490 = vmatpush1.bf16.msra.mxu0 0
      %491 = vmatprep.mubr.bf16.mxu0 0
      %492 = vmatmul.mubr.bf16.gmra.mrb[0].mxu0 %v379
      %v493 = vpop.f32.mrb[0].mxu0
      %v494 = vadd.f32 0.0, %v493
      %v495 = vpop.f32.mrb[0].mxu0
      %v496 = vpop.f32.mrb[0].mxu0
      %v497 = vadd.f32 0.0, %v496
      %v498 = vpop.f32.mrb[0].mxu0
      %499 = vmatprep.mubr.bf16.mxu0 0
      %500 = vmatmul.mubr.bf16.gmra.mrb[0].mxu0 %v380
      %v501 = vpop.f32.mrb[0].mxu0
      %v502 = vadd.f32 0.0, %v501
      %v503 = vpop.f32.mrb[0].mxu0
      %v504 = vpop.f32.mrb[0].mxu0
      %v505 = vadd.f32 0.0, %v504
      %v506 = vpop.f32.mrb[0].mxu0
      %507 = vmatprep.mubr.bf16.mxu0 0
      %508 = vmatmul.mubr.bf16.gmra.mrb[0].mxu0 %v381
      %v509 = vpop.f32.mrb[0].mxu0
      %v510 = vadd.f32 0.0, %v509
      %v511 = vpop.f32.mrb[0].mxu0
      %v512 = vpop.f32.mrb[0].mxu0
      %v513 = vadd.f32 0.0, %v512
      %v514 = vpop.f32.mrb[0].mxu0
      %515 = vmatprep.mubr.bf16.mxu0 0
      %516 = vmatmul.mubr.bf16.gmra.mrb[0].mxu0 %v382
      %v517 = vpop.f32.mrb[0].mxu0
      %v518 = vadd.f32 0.0, %v517
      %v519 = vpop.f32.mrb[0].mxu0
      %v520 = vpop.f32.mrb[0].mxu0
      %v521 = vadd.f32 0.0, %v520
      %v522 = vpop.f32.mrb[0].mxu0
      %523 = vmatprep.mubr.bf16.mxu0 0
      %524 = vmatmul.mubr.bf16.gmra.mrb[0].mxu0 %v383
      %v525 = vpop.f32.mrb[0].mxu0
      %v526 = vadd.f32 0.0, %v525
      %v527 = vpop.f32.mrb[0].mxu0
      %v528 = vpop.f32.mrb[0].mxu0
      %v529 = vadd.f32 0.0, %v528
      %v530 = vpop.f32.mrb[0].mxu0
      %531 = vmatprep.mubr.bf16.mxu0 0
      %532 = vmatmul.mubr.bf16.gmra.mrb[0].mxu0 %v384
      %v533 = vpop.f32.mrb[0].mxu0
      %v534 = vadd.f32 0.0, %v533
      %v535 = vpop.f32.mrb[0].mxu0
      %v536 = vpop.f32.mrb[0].mxu0
      %v537 = vadd.f32 0.0, %v536
      %v538 = vpop.f32.mrb[0].mxu0
      %539 = vmatprep.mubr.bf16.mxu0 0
      %540 = vmatmul.mubr.bf16.gmra.mrb[0].mxu0 %v385
      %v541 = vpop.f32.mrb[0].mxu0
      %v542 = vadd.f32 0.0, %v541
      %v543 = vpop.f32.mrb[0].mxu0
      %v544 = vpop.f32.mrb[0].mxu0
      %v545 = vadd.f32 0.0, %v544
      %v546 = vpop.f32.mrb[0].mxu0
      %547 = vmatprep.mubr.bf16.mxu0 0
      %548 = vmatmul.mubr.bf16.gmra.mrb[0].mxu0 %v386
      %v549 = vpop.f32.mrb[0].mxu0
      %v550 = vadd.f32 0.0, %v549
      %v551 = vpop.f32.mrb[0].mxu0
      %v552 = vpop.f32.mrb[0].mxu0
      %v553 = vadd.f32 0.0, %v552
      %v554 = vpop.f32.mrb[0].mxu0
      %555 = vmatprep.mubr.bf16.mxu0 0
      %556 = vmatmul.mubr.bf16.gmra.mrb[0].mxu0 %v387
      %v557 = vpop.f32.mrb[0].mxu0
      %v558 = vadd.f32 0.0, %v557
      %v559 = vpop.f32.mrb[0].mxu0
      %v560 = vpop.f32.mrb[0].mxu0
      %v561 = vadd.f32 0.0, %v560
      %v562 = vpop.f32.mrb[0].mxu0
      %563 = vmatprep.mubr.bf16.mxu0 0
      %564 = vmatmul.mubr.bf16.gmra.mrb[0].mxu0 %v388
      %v565 = vpop.f32.mrb[0].mxu0
      %v566 = vadd.f32 0.0, %v565
      %v567 = vpop.f32.mrb[0].mxu0
      %v568 = vpop.f32.mrb[0].mxu0
      %v569 = vadd.f32 0.0, %v568
      %v570 = vpop.f32.mrb[0].mxu0
      %571 = vmatprep.mubr.bf16.mxu0 0
      %572 = vmatmul.mubr.bf16.gmra.mrb[0].mxu0 %v389
      %v573 = vpop.f32.mrb[0].mxu0
      %v574 = vadd.f32 0.0, %v573
      %v575 = vpop.f32.mrb[0].mxu0
      %v576 = vpop.f32.mrb[0].mxu0
      %v577 = vadd.f32 0.0, %v576
      %v578 = vpop.f32.mrb[0].mxu0
      %579 = vmatprep.mubr.bf16.mxu0 0
      %580 = vmatmul.mubr.bf16.gmra.mrb[0].mxu0 %v390
      %v581 = vpop.f32.mrb[0].mxu0
      %v582 = vadd.f32 0.0, %v581
      %v583 = vpop.f32.mrb[0].mxu0
      %v584 = vpop.f32.mrb[0].mxu0
      %v585 = vadd.f32 0.0, %v584
      %v586 = vpop.f32.mrb[0].mxu0
      %587 = vmatprep.mubr.bf16.mxu0 0
      %588 = vmatmul.mubr.bf16.gmra.mrb[0].mxu0 %v391
      %v589 = vpop.f32.mrb[0].mxu0
      %v590 = vadd.f32 0.0, %v589
      %v591 = vpop.f32.mrb[0].mxu0
      %v592 = vpop.f32.mrb[0].mxu0
      %v593 = vadd.f32 0.0, %v592
      %v594 = vpop.f32.mrb[0].mxu0
      %595 = vmatprep.mubr.bf16.mxu0 0
      %596 = vmatmul.mubr.bf16.gmra.mrb[0].mxu0 %v392
      %v597 = vpop.f32.mrb[0].mxu0
      %v598 = vadd.f32 0.0, %v597
      %v599 = vpop.f32.mrb[0].mxu0
      %v600 = vpop.f32.mrb[0].mxu0
      %v601 = vadd.f32 0.0, %v600
      %v602 = vpop.f32.mrb[0].mxu0
      %603 = vmatprep.mubr.bf16.mxu0 0
      %604 = vmatmul.mubr.bf16.gmra.mrb[0].mxu0 %v393
      %v605 = vpop.f32.mrb[0].mxu0
      %v606 = vadd.f32 0.0, %v605
      %v607 = vpop.f32.mrb[0].mxu0
      %v608 = vpop.f32.mrb[0].mxu0
      %v609 = vadd.f32 0.0, %v608
      %v610 = vpop.f32.mrb[0].mxu0
      %611 = vmatprep.mubr.bf16.mxu0 0
      %612 = vmatmul.mubr.bf16.gmra.mrb[0].mxu0 %v394
      %v613 = vpop.f32.mrb[0].mxu0
      %v614 = vadd.f32 0.0, %v613
      %v615 = vpop.f32.mrb[0].mxu0
      %v616 = vpop.f32.mrb[0].mxu0
      %v617 = vadd.f32 0.0, %v616
      %v618 = vpop.f32.mrb[0].mxu0
      %619 = vdwg.mxu0
      %v620 = vld [vmem:[%s253] sm:$0x1]
      %v622 = vlaneseq
      %v623 = vshrl.u32 %v622, 7
      %v624 = vsub.s32 0, %v623
      %v625 = vrot.slane %v620, %v624
      %v627 = vmul.f32 %v494, %v625
      %v628 = vmul.f32 %v497, %v625
      %v629 = vmul.f32 %v502, %v625
      %v630 = vmul.f32 %v505, %v625
      %v631 = vmul.f32 %v510, %v625
      %v632 = vmul.f32 %v513, %v625
      %v633 = vmul.f32 %v518, %v625
      %v634 = vmul.f32 %v521, %v625
      %v635 = vmul.f32 %v526, %v625
      %v636 = vmul.f32 %v529, %v625
      %v637 = vmul.f32 %v534, %v625
      %v638 = vmul.f32 %v537, %v625
      %v639 = vmul.f32 %v542, %v625
      %v640 = vmul.f32 %v545, %v625
      %v641 = vmul.f32 %v550, %v625
      %v642 = vmul.f32 %v553, %v625
      %v643 = vmul.f32 %v558, %v625
      %v644 = vmul.f32 %v561, %v625
      %v645 = vmul.f32 %v566, %v625
      %v646 = vmul.f32 %v569, %v625
      %v647 = vmul.f32 %v574, %v625
      %v648 = vmul.f32 %v577, %v625
      %v649 = vmul.f32 %v582, %v625
      %v650 = vmul.f32 %v585, %v625
      %v651 = vmul.f32 %v590, %v625
      %v652 = vmul.f32 %v593, %v625
      %v653 = vmul.f32 %v598, %v625
      %v654 = vmul.f32 %v601, %v625
      %v655 = vmul.f32 %v606, %v625
      %v656 = vmul.f32 %v609, %v625
      %v657 = vmul.f32 %v614, %v625
      %v658 = vmul.f32 %v617, %v625
      %v659 = vld [vmem:[%s256] sm:$0x1]
      %v661 = vlaneseq
      %v662 = vshrl.u32 %v661, 7
      %v663 = vsub.s32 0, %v662
      %v664 = vrot.slane %v659, %v663
      %v666 = vadd.f32 %v627, %v664
      %v667 = vadd.f32 %v628, %v664
      %v668 = vadd.f32 %v629, %v664
      %v669 = vadd.f32 %v630, %v664
      %v670 = vadd.f32 %v631, %v664
      %v671 = vadd.f32 %v632, %v664
      %v672 = vadd.f32 %v633, %v664
      %v673 = vadd.f32 %v634, %v664
      %v674 = vadd.f32 %v635, %v664
      %v675 = vadd.f32 %v636, %v664
      %v676 = vadd.f32 %v637, %v664
      %v677 = vadd.f32 %v638, %v664
      %v678 = vadd.f32 %v639, %v664
      %v679 = vadd.f32 %v640, %v664
      %v680 = vadd.f32 %v641, %v664
      %v681 = vadd.f32 %v642, %v664
      %v682 = vadd.f32 %v643, %v664
      %v683 = vadd.f32 %v644, %v664
      %v684 = vadd.f32 %v645, %v664
      %v685 = vadd.f32 %v646, %v664
      %v686 = vadd.f32 %v647, %v664
      %v687 = vadd.f32 %v648, %v664
      %v688 = vadd.f32 %v649, %v664
      %v689 = vadd.f32 %v650, %v664
      %v690 = vadd.f32 %v651, %v664
      %v691 = vadd.f32 %v652, %v664
      %v692 = vadd.f32 %v653, %v664
      %v693 = vadd.f32 %v654, %v664
      %v694 = vadd.f32 %v655, %v664
      %v695 = vadd.f32 %v656, %v664
      %v696 = vadd.f32 %v657, %v664
      %v697 = vadd.f32 %v658, %v664
      %v698 = vmax.f32 %v666, 0.0
      %v699 = vmax.f32 %v667, 0.0
      %v700 = vmax.f32 %v668, 0.0
      %v701 = vmax.f32 %v669, 0.0
      %v702 = vmax.f32 %v670, 0.0
      %v703 = vmax.f32 %v671, 0.0
      %v704 = vmax.f32 %v672, 0.0
      %v705 = vmax.f32 %v673, 0.0
      %v706 = vmax.f32 %v674, 0.0
      %v707 = vmax.f32 %v675, 0.0
      %v708 = vmax.f32 %v676, 0.0
      %v709 = vmax.f32 %v677, 0.0
      %v710 = vmax.f32 %v678, 0.0
      %v711 = vmax.f32 %v679, 0.0
      %v712 = vmax.f32 %v680, 0.0
      %v713 = vmax.f32 %v681, 0.0
      %v714 = vmax.f32 %v682, 0.0
      %v715 = vmax.f32 %v683, 0.0
      %v716 = vmax.f32 %v684, 0.0
      %v717 = vmax.f32 %v685, 0.0
      %v718 = vmax.f32 %v686, 0.0
      %v719 = vmax.f32 %v687, 0.0
      %v720 = vmax.f32 %v688, 0.0
      %v721 = vmax.f32 %v689, 0.0
      %v722 = vmax.f32 %v690, 0.0
      %v723 = vmax.f32 %v691, 0.0
      %v724 = vmax.f32 %v692, 0.0
      %v725 = vmax.f32 %v693, 0.0
      %v726 = vmax.f32 %v694, 0.0
      %v727 = vmax.f32 %v695, 0.0
      %v728 = vmax.f32 %v696, 0.0
      %v729 = vmax.f32 %v697, 0.0
      %v730 = vpack.c.bf16 %v699, %v698
      %v731 = vpack.c.bf16 %v701, %v700
      %v732 = vpack.c.bf16 %v703, %v702
      %v733 = vpack.c.bf16 %v705, %v704
      %v734 = vpack.c.bf16 %v707, %v706
      %v735 = vpack.c.bf16 %v709, %v708
      %v736 = vpack.c.bf16 %v711, %v710
      %v737 = vpack.c.bf16 %v713, %v712
      %v738 = vpack.c.bf16 %v715, %v714
      %v739 = vpack.c.bf16 %v717, %v716
      %v740 = vpack.c.bf16 %v719, %v718
      %v741 = vpack.c.bf16 %v721, %v720
      %v742 = vpack.c.bf16 %v723, %v722
      %v743 = vpack.c.bf16 %v725, %v724
      %v744 = vpack.c.bf16 %v727, %v726
      %v745 = vpack.c.bf16 %v729, %v728
      %v762 = vunpack.c.l.b16 %v730
      %v763 = vunpack.c.h.b16 %v730
      %v764 = vunpack.c.l.b16 %v731
      %v765 = vunpack.c.h.b16 %v731
      %v766 = vunpack.c.l.b16 %v732
      %v767 = vunpack.c.h.b16 %v732
      %v768 = vunpack.c.l.b16 %v733
      %v769 = vunpack.c.h.b16 %v733
      %v770 = vunpack.c.l.b16 %v734
      %v771 = vunpack.c.h.b16 %v734
      %v772 = vunpack.c.l.b16 %v735
      %v773 = vunpack.c.h.b16 %v735
      %v774 = vunpack.c.l.b16 %v736
      %v775 = vunpack.c.h.b16 %v736
      %v776 = vunpack.c.l.b16 %v737
      %v777 = vunpack.c.h.b16 %v737
      %v778 = vunpack.c.l.b16 %v738
      %v779 = vunpack.c.h.b16 %v738
      %v780 = vunpack.c.l.b16 %v739
      %v781 = vunpack.c.h.b16 %v739
      %v782 = vunpack.c.l.b16 %v740
      %v783 = vunpack.c.h.b16 %v740
      %v784 = vunpack.c.l.b16 %v741
      %v785 = vunpack.c.h.b16 %v741
      %v786 = vunpack.c.l.b16 %v742
      %v787 = vunpack.c.h.b16 %v742
      %v788 = vunpack.c.l.b16 %v743
      %v789 = vunpack.c.h.b16 %v743
      %v790 = vunpack.c.l.b16 %v744
      %v791 = vunpack.c.h.b16 %v744
      %v792 = vunpack.c.l.b16 %v745
      %v793 = vunpack.c.h.b16 %v745
      %v794 = vpack.c.b16 %v762, %v762
      %v795 = vpack.c.b16 %v763, %v763
      %v796 = vpack.c.b16 %v764, %v764
      %v797 = vpack.c.b16 %v765, %v765
      %v798 = vpack.c.b16 %v766, %v766
      %v799 = vpack.c.b16 %v767, %v767
      %v800 = vpack.c.b16 %v768, %v768
      %v801 = vpack.c.b16 %v769, %v769
      %v802 = vpack.c.b16 %v770, %v770
      %v803 = vpack.c.b16 %v771, %v771
      %v804 = vpack.c.b16 %v772, %v772
      %v805 = vpack.c.b16 %v773, %v773
      %v806 = vpack.c.b16 %v774, %v774
      %v807 = vpack.c.b16 %v775, %v775
      %v808 = vpack.c.b16 %v776, %v776
      %v809 = vpack.c.b16 %v777, %v777
      %v810 = vpack.c.b16 %v778, %v778
      %v811 = vpack.c.b16 %v779, %v779
      %v812 = vpack.c.b16 %v780, %v780
      %v813 = vpack.c.b16 %v781, %v781
      %v814 = vpack.c.b16 %v782, %v782
      %v815 = vpack.c.b16 %v783, %v783
      %v816 = vpack.c.b16 %v784, %v784
      %v817 = vpack.c.b16 %v785, %v785
      %v818 = vpack.c.b16 %v786, %v786
      %v819 = vpack.c.b16 %v787, %v787
      %v820 = vpack.c.b16 %v788, %v788
      %v821 = vpack.c.b16 %v789, %v789
      %v822 = vpack.c.b16 %v790, %v790
      %v823 = vpack.c.b16 %v791, %v791
      %v824 = vpack.c.b16 %v792, %v792
      %v825 = vpack.c.b16 %v793, %v793
      %858 = vst [vmem:[%s264] sm:$0xf] %v794
      %859 = vst [vmem:[%s264 + $0x4] sm:$0xf] %v795
      %860 = vst [vmem:[%s264 + $0x8] sm:$0xf] %v796
      %861 = vst [vmem:[%s264 + $0xc] sm:$0xf] %v797
      %862 = vst [vmem:[%s264 + $0x10] sm:$0xf] %v798
      %863 = vst [vmem:[%s264 + $0x14] sm:$0xf] %v799
      %864 = vst [vmem:[%s264 + $0x18] sm:$0xf] %v800
      %865 = vst [vmem:[%s264 + $0x1c] sm:$0xf] %v801
      %866 = vst [vmem:[%s264 + $0x20] sm:$0xf] %v802
      %867 = vst [vmem:[%s264 + $0x24] sm:$0xf] %v803
      %868 = vst [vmem:[%s264 + $0x28] sm:$0xf] %v804
      %869 = vst [vmem:[%s264 + $0x2c] sm:$0xf] %v805
      %870 = vst [vmem:[%s264 + $0x30] sm:$0xf] %v806
      %871 = vst [vmem:[%s264 + $0x34] sm:$0xf] %v807
      %872 = vst [vmem:[%s264 + $0x38] sm:$0xf] %v808
      %873 = vst [vmem:[%s264 + $0x3c] sm:$0xf] %v809
      %874 = vst [vmem:[%s264 + $0x40] sm:$0xf] %v810
      %875 = vst [vmem:[%s264 + $0x44] sm:$0xf] %v811
      %876 = vst [vmem:[%s264 + $0x48] sm:$0xf] %v812
      %877 = vst [vmem:[%s264 + $0x4c] sm:$0xf] %v813
      %878 = vst [vmem:[%s264 + $0x50] sm:$0xf] %v814
      %879 = vst [vmem:[%s264 + $0x54] sm:$0xf] %v815
      %880 = vst [vmem:[%s264 + $0x58] sm:$0xf] %v816
      %881 = vst [vmem:[%s264 + $0x5c] sm:$0xf] %v817
      %882 = vst [vmem:[%s264 + $0x60] sm:$0xf] %v818
      %883 = vst [vmem:[%s264 + $0x64] sm:$0xf] %v819
      %884 = vst [vmem:[%s264 + $0x68] sm:$0xf] %v820
      %885 = vst [vmem:[%s264 + $0x6c] sm:$0xf] %v821
      %886 = vst [vmem:[%s264 + $0x70] sm:$0xf] %v822
      %887 = vst [vmem:[%s264 + $0x74] sm:$0xf] %v823
      %888 = vst [vmem:[%s264 + $0x78] sm:$0xf] %v824
      %889 = vst [vmem:[%s264 + $0x7c] sm:$0xf] %v825
      %s890 = smul.u32 32, %s19
      %p891 = scmp.lt.s32.totalorder %s890, 63
      %s892 = scalar_select %p891, %s890, 63
      %p893 = scmp.lt.s32.totalorder %s20, 0
      %s894 = scalar_select %p893, %s20, 0
      %s895 = sadd.s32 %s894, %s892
      %s896 = smul.addr %s895, 4
      %s897 = scalar_lea.vmem %s4, %s896
      // Predicated region
      $region37: #{vgg11_feat_forward.6} parent=35 // pred_check
        %p898 = pneg %p151
      $region38: #{vgg11_feat_forward.6} parent=35 // pred_check_branch
        %900 = sbr.rel (%p898) target = $region40
      $region39: #{vgg11_feat_forward.6} parent=35 // pred_region
        %s901 = smul.u32 32, %s19
      $region40: #{vgg11_feat_forward.6} parent=35 // pred_fallthru
        _
    $region36: #{vgg11_feat_forward.6} parent=5 // pred_fallthru
      _
    %p902 = scmp.le.s32.totalorder 2, %s10
    // Predicated region
    $region41: #{vgg11_feat_forward.6} parent=5 // pred_check
      %p903 = pneg %p902
    $region42: #{vgg11_feat_forward.6} parent=5 // pred_check_branch
      %905 = sbr.rel (%p903) target = $region44
    $region43: #{vgg11_feat_forward.6} parent=5 // pred_region
      %s906 = ssub.s32 %s10, 2
      // Predicated region
      $region45: #{vgg11_feat_forward.6} parent=43 // pred_check
        %p907 = pneg %p157
      $region46: #{vgg11_feat_forward.6} parent=43 // pred_check_branch
        %909 = sbr.rel (%p907) target = $region48
      $region47: #{vgg11_feat_forward.6} parent=43 // pred_region
        %s910 = smul.u32 32, %s21
        %p911 = scmp.lt.s32.totalorder %s910, 63
        %s912 = scalar_select %p911, %s910, 63
        %p913 = scmp.lt.s32.totalorder %s22, 0
        %s914 = scalar_select %p913, %s22, 0
        %s915 = sadd.s32 %s914, %s912
        %s916 = smul.addr %s915, 4
        %s917 = scalar_lea.vmem %s4, %s916
      $region48: #{vgg11_feat_forward.6} parent=43 // pred_fallthru
        _
    $region44: #{vgg11_feat_forward.6} parent=5 // pred_fallthru
      _
  $region6: #{vgg11_feat_forward.6} parent=0 // loop_footer
    %s14 = sadd.s32 1, %s10
  $region7: #{vgg11_feat_forward.6} parent=0 // loop_footer_branch
    %9 = sbr.rel target = $region3
  $region8: #{vgg11_feat_forward.6} parent=0 // loop_exit
    _

// kernel: vgg11_feat_forward.7
$region0: #{vgg11_feat_forward.7}
  #allocation0 [shape = 'u32[]', space=smem, size = 0x4, offset = 0x4, fixed_abs, tag = 'smem constant byte address 0x4 - core index']
  #allocation1 [shape = 'u32[144,128]{1,0:T(1,128)}', space=vmem, size = 0x12000, scoped, tag = 'internal scratch']
  %s0 = inlined_call_operand.vmem [shape: bf16[112,384], index: 0, kind: input, shape index: {}]
  %s1 = inlined_call_operand.vmem [shape: bf16[384,128], index: 1, kind: input, shape index: {}]
  %s2 = inlined_call_operand.vmem [shape: f32[1,128], index: 2, kind: input, shape index: {}]
  %s3 = inlined_call_operand.vmem [shape: f32[1,128], index: 3, kind: input, shape index: {}]
  %s4 = inlined_call_operand.vmem [shape: bf16[112,128], index: 4, kind: output, shape index: {}]
  %s5 = sld [smem:[#allocation0]]
  $region26: #{vgg11_feat_forward.7} parent=0
    _
  %s7 = ssub.s32 1, %s5
  %s8 = scalar_select 0, %s7, %s5
  // Predicated region
  $region2: #{vgg11_feat_forward.7} parent=0 // pred_check
    _
  $region3: #{vgg11_feat_forward.7} parent=0 // pred_check_branch
    %10 = sbr.rel (0) target = $region5
  $region4: #{vgg11_feat_forward.7} parent=0 // pred_region
    _
  $region5: #{vgg11_feat_forward.7} parent=0 // pred_fallthru
    _
  // Predicated region
  $region6: #{vgg11_feat_forward.7} parent=0 // pred_check
    _
  $region7: #{vgg11_feat_forward.7} parent=0 // pred_check_branch
    %12 = sbr.rel (0) target = $region9
  $region8: #{vgg11_feat_forward.7} parent=0 // pred_region
    _
  $region9: #{vgg11_feat_forward.7} parent=0 // pred_fallthru
    _
  // Predicated region
  $region10: #{vgg11_feat_forward.7} parent=0 // pred_check
    _
  $region11: #{vgg11_feat_forward.7} parent=0 // pred_check_branch
    %14 = sbr.rel (0) target = $region13
  $region12: #{vgg11_feat_forward.7} parent=0 // pred_region
    _
  $region13: #{vgg11_feat_forward.7} parent=0 // pred_fallthru
    _
  // Predicated region
  $region14: #{vgg11_feat_forward.7} parent=0 // pred_check
    _
  $region15: #{vgg11_feat_forward.7} parent=0 // pred_check_branch
    %16 = sbr.rel (0) target = $region17
  $region16: #{vgg11_feat_forward.7} parent=0 // pred_region
    _
  $region17: #{vgg11_feat_forward.7} parent=0 // pred_fallthru
    _
  %v18 = vld [vmem:[%s0] sm:$0xff]
  %v19 = vld [vmem:[%s0 + $0x8] sm:$0xf]
  %v20 = vld [vmem:[%s0 + $0xc] sm:$0xff]
  %v21 = vld [vmem:[%s0 + $0x14] sm:$0xf]
  %v22 = vld [vmem:[%s0 + $0x18] sm:$0xff]
  %v23 = vld [vmem:[%s0 + $0x20] sm:$0xf]
  %v24 = vld [vmem:[%s0 + $0x24] sm:$0xff]
  %v25 = vld [vmem:[%s0 + $0x2c] sm:$0xf]
  %v26 = vld [vmem:[%s0 + $0x30] sm:$0xff]
  %v27 = vld [vmem:[%s0 + $0x38] sm:$0xf]
  %v28 = vld [vmem:[%s0 + $0x3c] sm:$0xff]
  %v29 = vld [vmem:[%s0 + $0x44] sm:$0xf]
  %v30 = vld [vmem:[%s0 + $0x48] sm:$0xff]
  %v31 = vld [vmem:[%s0 + $0x50] sm:$0xf]
  %v32 = vld [vmem:[%s0 + $0x54] sm:$0xff]
  %v33 = vld [vmem:[%s0 + $0x5c] sm:$0xf]
  %v34 = vld [vmem:[%s0 + $0x60] sm:$0xff]
  %v35 = vld [vmem:[%s0 + $0x68] sm:$0xf]
  %v36 = vld [vmem:[%s0 + $0x6c] sm:$0xff]
  %v37 = vld [vmem:[%s0 + $0x74] sm:$0xf]
  %v38 = vld [vmem:[%s0 + $0x78] sm:$0xff]
  %v39 = vld [vmem:[%s0 + $0x80] sm:$0xf]
  %v40 = vld [vmem:[%s0 + $0x84] sm:$0xff]
  %v41 = vld [vmem:[%s0 + $0x8c] sm:$0xf]
  %v42 = vld [vmem:[%s0 + $0x90] sm:$0xff]
  %v43 = vld [vmem:[%s0 + $0x98] sm:$0xf]
  %v44 = vld [vmem:[%s0 + $0x9c] sm:$0xff]
  %v45 = vld [vmem:[%s0 + $0xa4] sm:$0xf]
  %v46 = vld [vmem:[%s1] sm:$0xf]
  %v47 = vld [vmem:[%s1 + $0x4] sm:$0xf]
  %v48 = vld [vmem:[%s1 + $0x8] sm:$0xf]
  %v49 = vld [vmem:[%s1 + $0xc] sm:$0xf]
  %v50 = vld [vmem:[%s1 + $0x10] sm:$0xf]
  %v51 = vld [vmem:[%s1 + $0x14] sm:$0xf]
  %v52 = vld [vmem:[%s1 + $0x18] sm:$0xf]
  %v53 = vld [vmem:[%s1 + $0x1c] sm:$0xf]
  %v54 = vld [vmem:[%s1 + $0x20] sm:$0xf]
  %v55 = vld [vmem:[%s1 + $0x24] sm:$0xf]
  %v56 = vld [vmem:[%s1 + $0x28] sm:$0xf]
  %v57 = vld [vmem:[%s1 + $0x2c] sm:$0xf]
  %v58 = vld [vmem:[%s1 + $0x30] sm:$0xf]
  %v59 = vld [vmem:[%s1 + $0x34] sm:$0xf]
  %v60 = vld [vmem:[%s1 + $0x38] sm:$0xf]
  %v61 = vld [vmem:[%s1 + $0x3c] sm:$0xf]
  %v62 = vld [vmem:[%s1 + $0x40] sm:$0xf]
  %v63 = vld [vmem:[%s1 + $0x44] sm:$0xf]
  %v64 = vld [vmem:[%s1 + $0x48] sm:$0xf]
  %v65 = vld [vmem:[%s1 + $0x4c] sm:$0xf]
  %v66 = vld [vmem:[%s1 + $0x50] sm:$0xf]
  %v67 = vld [vmem:[%s1 + $0x54] sm:$0xf]
  %v68 = vld [vmem:[%s1 + $0x58] sm:$0xf]
  %v69 = vld [vmem:[%s1 + $0x5c] sm:$0xf]
  %v70 = vld [vmem:[%s1 + $0x60] sm:$0xf]
  %v71 = vld [vmem:[%s1 + $0x64] sm:$0xf]
  %v72 = vld [vmem:[%s1 + $0x68] sm:$0xf]
  %v73 = vld [vmem:[%s1 + $0x6c] sm:$0xf]
  %v74 = vld [vmem:[%s1 + $0x70] sm:$0xf]
  %v75 = vld [vmem:[%s1 + $0x74] sm:$0xf]
  %v76 = vld [vmem:[%s1 + $0x78] sm:$0xf]
  %v77 = vld [vmem:[%s1 + $0x7c] sm:$0xf]
  %v78 = vld [vmem:[%s1 + $0x80] sm:$0xf]
  %v79 = vld [vmem:[%s1 + $0x84] sm:$0xf]
  %v80 = vld [vmem:[%s1 + $0x88] sm:$0xf]
  %v81 = vld [vmem:[%s1 + $0x8c] sm:$0xf]
  %v82 = vld [vmem:[%s1 + $0x90] sm:$0xf]
  %v83 = vld [vmem:[%s1 + $0x94] sm:$0xf]
  %v84 = vld [vmem:[%s1 + $0x98] sm:$0xf]
  %v85 = vld [vmem:[%s1 + $0x9c] sm:$0xf]
  %v86 = vld [vmem:[%s1 + $0xa0] sm:$0xf]
  %v87 = vld [vmem:[%s1 + $0xa4] sm:$0xf]
  %v88 = vld [vmem:[%s1 + $0xa8] sm:$0xf]
  %v89 = vld [vmem:[%s1 + $0xac] sm:$0xf]
  %v90 = vld [vmem:[%s1 + $0xb0] sm:$0xf]
  %v91 = vld [vmem:[%s1 + $0xb4] sm:$0xf]
  %v92 = vld [vmem:[%s1 + $0xb8] sm:$0xf]
  %v93 = vld [vmem:[%s1 + $0xbc] sm:$0xf]
  %v122 = vunpack.c.l.b16 %v18
  %v123 = vunpack.c.h.b16 %v18
  %v124 = vunpack.c.l.b16 %v19
  %v125 = vunpack.c.l.b16 %v20
  %v126 = vunpack.c.h.b16 %v20
  %v127 = vunpack.c.l.b16 %v21
  %v128 = vunpack.c.l.b16 %v22
  %v129 = vunpack.c.h.b16 %v22
  %v130 = vunpack.c.l.b16 %v23
  %v131 = vunpack.c.l.b16 %v24
  %v132 = vunpack.c.h.b16 %v24
  %v133 = vunpack.c.l.b16 %v25
  %v134 = vunpack.c.l.b16 %v26
  %v135 = vunpack.c.h.b16 %v26
  %v136 = vunpack.c.l.b16 %v27
  %v137 = vunpack.c.l.b16 %v28
  %v138 = vunpack.c.h.b16 %v28
  %v139 = vunpack.c.l.b16 %v29
  %v140 = vunpack.c.l.b16 %v30
  %v141 = vunpack.c.h.b16 %v30
  %v142 = vunpack.c.l.b16 %v31
  %v143 = vunpack.c.l.b16 %v32
  %v144 = vunpack.c.h.b16 %v32
  %v145 = vunpack.c.l.b16 %v33
  %v146 = vunpack.c.l.b16 %v34
  %v147 = vunpack.c.h.b16 %v34
  %v148 = vunpack.c.l.b16 %v35
  %v149 = vunpack.c.l.b16 %v36
  %v150 = vunpack.c.h.b16 %v36
  %v151 = vunpack.c.l.b16 %v37
  %v152 = vunpack.c.l.b16 %v38
  %v153 = vunpack.c.h.b16 %v38
  %v154 = vunpack.c.l.b16 %v39
  %v155 = vunpack.c.l.b16 %v40
  %v156 = vunpack.c.h.b16 %v40
  %v157 = vunpack.c.l.b16 %v41
  %v158 = vunpack.c.l.b16 %v42
  %v159 = vunpack.c.h.b16 %v42
  %v160 = vunpack.c.l.b16 %v43
  %v161 = vunpack.c.l.b16 %v44
  %v162 = vunpack.c.h.b16 %v44
  %v163 = vunpack.c.l.b16 %v45
  %v164 = vpack.c.b16 %v125, %v122
  %v165 = vpack.c.b16 %v126, %v123
  %v166 = vpack.c.b16 %v127, %v124
  %v167 = vpack.c.b16 %v131, %v128
  %v168 = vpack.c.b16 %v132, %v129
  %v169 = vpack.c.b16 %v133, %v130
  %v170 = vpack.c.b16 %v137, %v134
  %v171 = vpack.c.b16 %v138, %v135
  %v172 = vpack.c.b16 %v139, %v136
  %v173 = vpack.c.b16 %v143, %v140
  %v174 = vpack.c.b16 %v144, %v141
  %v175 = vpack.c.b16 %v145, %v142
  %v176 = vpack.c.b16 %v149, %v146
  %v177 = vpack.c.b16 %v150, %v147
  %v178 = vpack.c.b16 %v151, %v148
  %v179 = vpack.c.b16 %v155, %v152
  %v180 = vpack.c.b16 %v156, %v153
  %v181 = vpack.c.b16 %v157, %v154
  %v182 = vpack.c.b16 %v161, %v158
  %v183 = vpack.c.b16 %v162, %v159
  %v184 = vpack.c.b16 %v163, %v160
  %v254 = vunpack.c.l.b16 %v46
  %v255 = vunpack.c.l.b16 %v47
  %v256 = vunpack.c.l.b16 %v48
  %v257 = vunpack.c.l.b16 %v49
  %v258 = vunpack.c.l.b16 %v50
  %v259 = vunpack.c.l.b16 %v51
  %v260 = vunpack.c.l.b16 %v52
  %v261 = vunpack.c.l.b16 %v53
  %v262 = vunpack.c.l.b16 %v54
  %v263 = vunpack.c.l.b16 %v55
  %v264 = vunpack.c.l.b16 %v56
  %v265 = vunpack.c.l.b16 %v57
  %v266 = vunpack.c.l.b16 %v58
  %v267 = vunpack.c.l.b16 %v59
  %v268 = vunpack.c.l.b16 %v60
  %v269 = vunpack.c.l.b16 %v61
  %v270 = vunpack.c.l.b16 %v62
  %v271 = vunpack.c.l.b16 %v63
  %v272 = vunpack.c.l.b16 %v64
  %v273 = vunpack.c.l.b16 %v65
  %v274 = vunpack.c.l.b16 %v66
  %v275 = vunpack.c.l.b16 %v67
  %v276 = vunpack.c.l.b16 %v68
  %v277 = vunpack.c.l.b16 %v69
  %v278 = vunpack.c.l.b16 %v70
  %v279 = vunpack.c.l.b16 %v71
  %v280 = vunpack.c.l.b16 %v72
  %v281 = vunpack.c.l.b16 %v73
  %v282 = vunpack.c.l.b16 %v74
  %v283 = vunpack.c.l.b16 %v75
  %v284 = vunpack.c.l.b16 %v76
  %v285 = vunpack.c.l.b16 %v77
  %v286 = vunpack.c.l.b16 %v78
  %v287 = vunpack.c.l.b16 %v79
  %v288 = vunpack.c.l.b16 %v80
  %v289 = vunpack.c.l.b16 %v81
  %v290 = vunpack.c.l.b16 %v82
  %v291 = vunpack.c.l.b16 %v83
  %v292 = vunpack.c.l.b16 %v84
  %v293 = vunpack.c.l.b16 %v85
  %v294 = vunpack.c.l.b16 %v86
  %v295 = vunpack.c.l.b16 %v87
  %v296 = vunpack.c.l.b16 %v88
  %v297 = vunpack.c.l.b16 %v89
  %v298 = vunpack.c.l.b16 %v90
  %v299 = vunpack.c.l.b16 %v91
  %v300 = vunpack.c.l.b16 %v92
  %v301 = vunpack.c.l.b16 %v93
  %v302 = vpack.c.b16 %v255, %v254
  %v303 = vpack.c.b16 %v257, %v256
  %v304 = vpack.c.b16 %v259, %v258
  %v305 = vpack.c.b16 %v261, %v260
  %v306 = vpack.c.b16 %v263, %v262
  %v307 = vpack.c.b16 %v265, %v264
  %v308 = vpack.c.b16 %v267, %v266
  %v309 = vpack.c.b16 %v269, %v268
  %v310 = vpack.c.b16 %v271, %v270
  %v311 = vpack.c.b16 %v273, %v272
  %v312 = vpack.c.b16 %v275, %v274
  %v313 = vpack.c.b16 %v277, %v276
  %v314 = vpack.c.b16 %v279, %v278
  %v315 = vpack.c.b16 %v281, %v280
  %v316 = vpack.c.b16 %v283, %v282
  %v317 = vpack.c.b16 %v285, %v284
  %v318 = vpack.c.b16 %v287, %v286
  %v319 = vpack.c.b16 %v289, %v288
  %v320 = vpack.c.b16 %v291, %v290
  %v321 = vpack.c.b16 %v293, %v292
  %v322 = vpack.c.b16 %v295, %v294
  %v323 = vpack.c.b16 %v297, %v296
  %v324 = vpack.c.b16 %v299, %v298
  %v325 = vpack.c.b16 %v301, %v300
  %350 = vmatprep.subr.bf16.mxu0 0
  %351 = vmatpush1.bf16.msra.mxu0 %v302
  %352 = vmatprep.subr.bf16.mxu0 0
  %353 = vmatpush1.bf16.msra.mxu0 %v303
  %354 = vmatprep.subr.bf16.mxu0 0
  %355 = vmatpush1.bf16.msra.mxu0 %v304
  %356 = vmatprep.subr.bf16.mxu0 0
  %357 = vmatpush1.bf16.msra.mxu0 %v305
  %358 = vmatprep.subr.bf16.mxu0 0
  %359 = vmatpush1.bf16.msra.mxu0 %v306
  %360 = vmatprep.subr.bf16.mxu0 0
  %361 = vmatpush1.bf16.msra.mxu0 %v307
  %362 = vmatprep.subr.bf16.mxu0 0
  %363 = vmatpush1.bf16.msra.mxu0 %v308
  %364 = vmatprep.subr.bf16.mxu0 0
  %365 = vmatpush1.bf16.msra.mxu0 %v309
  %366 = vmatprep.subr.bf16.mxu0 0
  %367 = vmatpush1.bf16.msra.mxu0 %v310
  %368 = vmatprep.subr.bf16.mxu0 0
  %369 = vmatpush1.bf16.msra.mxu0 %v311
  %370 = vmatprep.subr.bf16.mxu0 0
  %371 = vmatpush1.bf16.msra.mxu0 %v312
  %372 = vmatprep.subr.bf16.mxu0 0
  %373 = vmatpush1.bf16.msra.mxu0 %v313
  %374 = vmatprep.subr.bf16.mxu0 0
  %375 = vmatpush1.bf16.msra.mxu0 %v314
  %376 = vmatprep.subr.bf16.mxu0 0
  %377 = vmatpush1.bf16.msra.mxu0 %v315
  %378 = vmatprep.subr.bf16.mxu0 0
  %379 = vmatpush1.bf16.msra.mxu0 %v316
  %380 = vmatprep.subr.bf16.mxu0 0
  %381 = vmatpush1.bf16.msra.mxu0 %v317
  %382 = vmatprep.mubr.bf16.mxu0 %v165
  %383 = vmatmul.mubr.bf16.gmra.mrb[0].mxu0 %v164
  %v384 = vpop.f32.mrb[0].mxu0
  %v385 = vadd.f32 0.0, %v384
  %v386 = vpop.f32.mrb[0].mxu0
  %v387 = vpop.f32.mrb[0].mxu0
  %v388 = vadd.f32 0.0, %v387
  %v389 = vpop.f32.mrb[0].mxu0
  %390 = vmatprep.mubr.bf16.mxu0 %v168
  %391 = vmatmul.mubr.bf16.gmra.mrb[0].mxu0 %v167
  %v392 = vpop.f32.mrb[0].mxu0
  %v393 = vadd.f32 0.0, %v392
  %v394 = vpop.f32.mrb[0].mxu0
  %v395 = vpop.f32.mrb[0].mxu0
  %v396 = vadd.f32 0.0, %v395
  %v397 = vpop.f32.mrb[0].mxu0
  %398 = vmatprep.mubr.bf16.mxu0 %v171
  %399 = vmatmul.mubr.bf16.gmra.mrb[0].mxu0 %v170
  %v400 = vpop.f32.mrb[0].mxu0
  %v401 = vadd.f32 0.0, %v400
  %v402 = vpop.f32.mrb[0].mxu0
  %v403 = vpop.f32.mrb[0].mxu0
  %v404 = vadd.f32 0.0, %v403
  %v405 = vpop.f32.mrb[0].mxu0
  %406 = vmatprep.mubr.bf16.mxu0 %v174
  %407 = vmatmul.mubr.bf16.gmra.mrb[0].mxu0 %v173
  %v408 = vpop.f32.mrb[0].mxu0
  %v409 = vadd.f32 0.0, %v408
  %v410 = vpop.f32.mrb[0].mxu0
  %v411 = vpop.f32.mrb[0].mxu0
  %v412 = vadd.f32 0.0, %v411
  %v413 = vpop.f32.mrb[0].mxu0
  %414 = vmatprep.mubr.bf16.mxu0 %v177
  %415 = vmatmul.mubr.bf16.gmra.mrb[0].mxu0 %v176
  %v416 = vpop.f32.mrb[0].mxu0
  %v417 = vadd.f32 0.0, %v416
  %v418 = vpop.f32.mrb[0].mxu0
  %v419 = vpop.f32.mrb[0].mxu0
  %v420 = vadd.f32 0.0, %v419
  %v421 = vpop.f32.mrb[0].mxu0
  %422 = vmatprep.mubr.bf16.mxu0 %v180
  %423 = vmatmul.mubr.bf16.gmra.mrb[0].mxu0 %v179
  %v424 = vpop.f32.mrb[0].mxu0
  %v425 = vadd.f32 0.0, %v424
  %v426 = vpop.f32.mrb[0].mxu0
  %v427 = vpop.f32.mrb[0].mxu0
  %v428 = vadd.f32 0.0, %v427
  %v429 = vpop.f32.mrb[0].mxu0
  %430 = vmatprep.mubr.bf16.mxu0 %v183
  %431 = vmatmul.mubr.bf16.gmra.mrb[0].mxu0 %v182
  %v432 = vpop.f32.mrb[0].mxu0
  %v433 = vadd.f32 0.0, %v432
  %v434 = vpop.f32.mrb[0].mxu0
  %v435 = vpop.f32.mrb[0].mxu0
  %v436 = vadd.f32 0.0, %v435
  %v437 = vpop.f32.mrb[0].mxu0
  %438 = vdwg.mxu0
  %439 = vmatprep.subr.bf16.mxu0 0
  %440 = vmatpush1.bf16.msra.mxu0 %v318
  %441 = vmatprep.subr.bf16.mxu0 0
  %442 = vmatpush1.bf16.msra.mxu0 %v319
  %443 = vmatprep.subr.bf16.mxu0 0
  %444 = vmatpush1.bf16.msra.mxu0 %v320
  %445 = vmatprep.subr.bf16.mxu0 0
  %446 = vmatpush1.bf16.msra.mxu0 %v321
  %447 = vmatprep.subr.bf16.mxu0 0
  %448 = vmatpush1.bf16.msra.mxu0 %v322
  %449 = vmatprep.subr.bf16.mxu0 0
  %450 = vmatpush1.bf16.msra.mxu0 %v323
  %451 = vmatprep.subr.bf16.mxu0 0
  %452 = vmatpush1.bf16.msra.mxu0 %v324
  %453 = vmatprep.subr.bf16.mxu0 0
  %454 = vmatpush1.bf16.msra.mxu0 %v325
  %455 = vmatprep.subr.bf16.mxu0 0
  %456 = vmatpush1.bf16.msra.mxu0 0
  %457 = vmatprep.subr.bf16.mxu0 0
  %458 = vmatpush1.bf16.msra.mxu0 0
  %459 = vmatprep.subr.bf16.mxu0 0
  %460 = vmatpush1.bf16.msra.mxu0 0
  %461 = vmatprep.subr.bf16.mxu0 0
  %462 = vmatpush1.bf16.msra.mxu0 0
  %463 = vmatprep.subr.bf16.mxu0 0
  %464 = vmatpush1.bf16.msra.mxu0 0
  %465 = vmatprep.subr.bf16.mxu0 0
  %466 = vmatpush1.bf16.msra.mxu0 0
  %467 = vmatprep.subr.bf16.mxu0 0
  %468 = vmatpush1.bf16.msra.mxu0 0
  %469 = vmatprep.subr.bf16.mxu0 0
  %470 = vmatpush1.bf16.msra.mxu0 0
  %471 = vmatprep.mubr.bf16.mxu0 0
  %472 = vmatmul.mubr.bf16.gmra.mrb[0].mxu0 %v166
  %v473 = vpop.f32.mrb[0].mxu0
  %v474 = vadd.f32 %v385, %v473
  %v475 = vpop.f32.mrb[0].mxu0
  %v476 = vpop.f32.mrb[0].mxu0
  %v477 = vadd.f32 %v388, %v476
  %v478 = vpop.f32.mrb[0].mxu0
  %479 = vmatprep.mubr.bf16.mxu0 0
  %480 = vmatmul.mubr.bf16.gmra.mrb[0].mxu0 %v169
  %v481 = vpop.f32.mrb[0].mxu0
  %v482 = vadd.f32 %v393, %v481
  %v483 = vpop.f32.mrb[0].mxu0
  %v484 = vpop.f32.mrb[0].mxu0
  %v485 = vadd.f32 %v396, %v484
  %v486 = vpop.f32.mrb[0].mxu0
  %487 = vmatprep.mubr.bf16.mxu0 0
  %488 = vmatmul.mubr.bf16.gmra.mrb[0].mxu0 %v172
  %v489 = vpop.f32.mrb[0].mxu0
  %v490 = vadd.f32 %v401, %v489
  %v491 = vpop.f32.mrb[0].mxu0
  %v492 = vpop.f32.mrb[0].mxu0
  %v493 = vadd.f32 %v404, %v492
  %v494 = vpop.f32.mrb[0].mxu0
  %495 = vmatprep.mubr.bf16.mxu0 0
  %496 = vmatmul.mubr.bf16.gmra.mrb[0].mxu0 %v175
  %v497 = vpop.f32.mrb[0].mxu0
  %v498 = vadd.f32 %v409, %v497
  %v499 = vpop.f32.mrb[0].mxu0
  %v500 = vpop.f32.mrb[0].mxu0
  %v501 = vadd.f32 %v412, %v500
  %v502 = vpop.f32.mrb[0].mxu0
  %503 = vmatprep.mubr.bf16.mxu0 0
  %504 = vmatmul.mubr.bf16.gmra.mrb[0].mxu0 %v178
  %v505 = vpop.f32.mrb[0].mxu0
  %v506 = vadd.f32 %v417, %v505
  %v507 = vpop.f32.mrb[0].mxu0
  %v508 = vpop.f32.mrb[0].mxu0
  %v509 = vadd.f32 %v420, %v508
  %v510 = vpop.f32.mrb[0].mxu0
  %511 = vmatprep.mubr.bf16.mxu0 0
  %512 = vmatmul.mubr.bf16.gmra.mrb[0].mxu0 %v181
  %v513 = vpop.f32.mrb[0].mxu0
  %v514 = vadd.f32 %v425, %v513
  %v515 = vpop.f32.mrb[0].mxu0
  %v516 = vpop.f32.mrb[0].mxu0
  %v517 = vadd.f32 %v428, %v516
  %v518 = vpop.f32.mrb[0].mxu0
  %519 = vmatprep.mubr.bf16.mxu0 0
  %520 = vmatmul.mubr.bf16.gmra.mrb[0].mxu0 %v184
  %v521 = vpop.f32.mrb[0].mxu0
  %v522 = vadd.f32 %v433, %v521
  %v523 = vpop.f32.mrb[0].mxu0
  %v524 = vpop.f32.mrb[0].mxu0
  %v525 = vadd.f32 %v436, %v524
  %v526 = vpop.f32.mrb[0].mxu0
  %527 = vdwg.mxu0
  %v528 = vld [vmem:[%s2] sm:$0x1]
  %v530 = vlaneseq
  %v531 = vshrl.u32 %v530, 7
  %v532 = vsub.s32 0, %v531
  %v533 = vrot.slane %v528, %v532
  %v535 = vmul.f32 %v474, %v533
  %v536 = vmul.f32 %v477, %v533
  %v537 = vmul.f32 %v482, %v533
  %v538 = vmul.f32 %v485, %v533
  %v539 = vmul.f32 %v490, %v533
  %v540 = vmul.f32 %v493, %v533
  %v541 = vmul.f32 %v498, %v533
  %v542 = vmul.f32 %v501, %v533
  %v543 = vmul.f32 %v506, %v533
  %v544 = vmul.f32 %v509, %v533
  %v545 = vmul.f32 %v514, %v533
  %v546 = vmul.f32 %v517, %v533
  %v547 = vmul.f32 %v522, %v533
  %v548 = vmul.f32 %v525, %v533
  %v549 = vld [vmem:[%s3] sm:$0x1]
  %v551 = vlaneseq
  %v552 = vshrl.u32 %v551, 7
  %v553 = vsub.s32 0, %v552
  %v554 = vrot.slane %v549, %v553
  %v556 = vadd.f32 %v535, %v554
  %v557 = vadd.f32 %v536, %v554
  %v558 = vadd.f32 %v537, %v554
  %v559 = vadd.f32 %v538, %v554
  %v560 = vadd.f32 %v539, %v554
  %v561 = vadd.f32 %v540, %v554
  %v562 = vadd.f32 %v541, %v554
  %v563 = vadd.f32 %v542, %v554
  %v564 = vadd.f32 %v543, %v554
  %v565 = vadd.f32 %v544, %v554
  %v566 = vadd.f32 %v545, %v554
  %v567 = vadd.f32 %v546, %v554
  %v568 = vadd.f32 %v547, %v554
  %v569 = vadd.f32 %v548, %v554
  %v570 = vmax.f32 %v556, 0.0
  %v571 = vmax.f32 %v557, 0.0
  %v572 = vmax.f32 %v558, 0.0
  %v573 = vmax.f32 %v559, 0.0
  %v574 = vmax.f32 %v560, 0.0
  %v575 = vmax.f32 %v561, 0.0
  %v576 = vmax.f32 %v562, 0.0
  %v577 = vmax.f32 %v563, 0.0
  %v578 = vmax.f32 %v564, 0.0
  %v579 = vmax.f32 %v565, 0.0
  %v580 = vmax.f32 %v566, 0.0
  %v581 = vmax.f32 %v567, 0.0
  %v582 = vmax.f32 %v568, 0.0
  %v583 = vmax.f32 %v569, 0.0
  %v584 = vpack.c.bf16 %v571, %v570
  %v585 = vpack.c.bf16 %v573, %v572
  %v586 = vpack.c.bf16 %v575, %v574
  %v587 = vpack.c.bf16 %v577, %v576
  %v588 = vpack.c.bf16 %v579, %v578
  %v589 = vpack.c.bf16 %v581, %v580
  %v590 = vpack.c.bf16 %v583, %v582
  %v598 = vunpack.c.l.b16 %v584
  %v599 = vunpack.c.h.b16 %v584
  %v600 = vunpack.c.l.b16 %v585
  %v601 = vunpack.c.h.b16 %v585
  %v602 = vunpack.c.l.b16 %v586
  %v603 = vunpack.c.h.b16 %v586
  %v604 = vunpack.c.l.b16 %v587
  %v605 = vunpack.c.h.b16 %v587
  %v606 = vunpack.c.l.b16 %v588
  %v607 = vunpack.c.h.b16 %v588
  %v608 = vunpack.c.l.b16 %v589
  %v609 = vunpack.c.h.b16 %v589
  %v610 = vunpack.c.l.b16 %v590
  %v611 = vunpack.c.h.b16 %v590
  %v612 = vpack.c.b16 %v598, %v598
  %v613 = vpack.c.b16 %v599, %v599
  %v614 = vpack.c.b16 %v600, %v600
  %v615 = vpack.c.b16 %v601, %v601
  %v616 = vpack.c.b16 %v602, %v602
  %v617 = vpack.c.b16 %v603, %v603
  %v618 = vpack.c.b16 %v604, %v604
  %v619 = vpack.c.b16 %v605, %v605
  %v620 = vpack.c.b16 %v606, %v606
  %v621 = vpack.c.b16 %v607, %v607
  %v622 = vpack.c.b16 %v608, %v608
  %v623 = vpack.c.b16 %v609, %v609
  %v624 = vpack.c.b16 %v610, %v610
  %v625 = vpack.c.b16 %v611, %v611
  %640 = vst [vmem:[%s4] sm:$0xf] %v612
  %641 = vst [vmem:[%s4 + $0x4] sm:$0xf] %v613
  %642 = vst [vmem:[%s4 + $0x8] sm:$0xf] %v614
  %643 = vst [vmem:[%s4 + $0xc] sm:$0xf] %v615
  %644 = vst [vmem:[%s4 + $0x10] sm:$0xf] %v616
  %645 = vst [vmem:[%s4 + $0x14] sm:$0xf] %v617
  %646 = vst [vmem:[%s4 + $0x18] sm:$0xf] %v618
  %647 = vst [vmem:[%s4 + $0x1c] sm:$0xf] %v619
  %648 = vst [vmem:[%s4 + $0x20] sm:$0xf] %v620
  %649 = vst [vmem:[%s4 + $0x24] sm:$0xf] %v621
  %650 = vst [vmem:[%s4 + $0x28] sm:$0xf] %v622
  %651 = vst [vmem:[%s4 + $0x2c] sm:$0xf] %v623
  %652 = vst [vmem:[%s4 + $0x30] sm:$0xf] %v624
  %653 = vst [vmem:[%s4 + $0x34] sm:$0xf] %v625
  // Predicated region
  $region18: #{vgg11_feat_forward.7} parent=0 // pred_check
    _
  $region19: #{vgg11_feat_forward.7} parent=0 // pred_check_branch
    %655 = sbr.rel (0) target = $region21
  $region20: #{vgg11_feat_forward.7} parent=0 // pred_region
    _
  $region21: #{vgg11_feat_forward.7} parent=0 // pred_fallthru
    _
  // Predicated region
  $region22: #{vgg11_feat_forward.7} parent=0 // pred_check
    _
  $region23: #{vgg11_feat_forward.7} parent=0 // pred_check_branch
    %657 = sbr.rel (0) target = $region25
  $region24: #{vgg11_feat_forward.7} parent=0 // pred_region
    _
  $region25: #{vgg11_feat_forward.7} parent=0 // pred_fallthru
    _

// kernel: vgg11_feat_forward.9
$region0: #{vgg11_feat_forward.9}
  #allocation0 [shape = 'u32[]', space=smem, size = 0x4, offset = 0x4, fixed_abs, tag = 'smem constant byte address 0x4 - core index']
  #allocation1 [shape = 'u32[144,128]{1,0:T(1,128)}', space=vmem, size = 0x12000, scoped, tag = 'internal scratch']
  %s0 = inlined_call_operand.vmem [shape: bf16[32,640], index: 0, kind: input, shape index: {}]
  %s1 = inlined_call_operand.vmem [shape: bf16[640,128], index: 1, kind: input, shape index: {}]
  %s2 = inlined_call_operand.vmem [shape: f32[1,128], index: 2, kind: input, shape index: {}]
  %s3 = inlined_call_operand.vmem [shape: f32[1,128], index: 3, kind: input, shape index: {}]
  %s4 = inlined_call_operand.vmem [shape: bf16[32,128], index: 4, kind: output, shape index: {}]
  %s5 = sld [smem:[#allocation0]]
  $region26: #{vgg11_feat_forward.9} parent=0
    _
  %s7 = ssub.s32 1, %s5
  %s8 = scalar_select 0, %s7, %s5
  // Predicated region
  $region2: #{vgg11_feat_forward.9} parent=0 // pred_check
    _
  $region3: #{vgg11_feat_forward.9} parent=0 // pred_check_branch
    %10 = sbr.rel (0) target = $region5
  $region4: #{vgg11_feat_forward.9} parent=0 // pred_region
    _
  $region5: #{vgg11_feat_forward.9} parent=0 // pred_fallthru
    _
  // Predicated region
  $region6: #{vgg11_feat_forward.9} parent=0 // pred_check
    _
  $region7: #{vgg11_feat_forward.9} parent=0 // pred_check_branch
    %12 = sbr.rel (0) target = $region9
  $region8: #{vgg11_feat_forward.9} parent=0 // pred_region
    _
  $region9: #{vgg11_feat_forward.9} parent=0 // pred_fallthru
    _
  // Predicated region
  $region10: #{vgg11_feat_forward.9} parent=0 // pred_check
    _
  $region11: #{vgg11_feat_forward.9} parent=0 // pred_check_branch
    %14 = sbr.rel (0) target = $region13
  $region12: #{vgg11_feat_forward.9} parent=0 // pred_region
    _
  $region13: #{vgg11_feat_forward.9} parent=0 // pred_fallthru
    _
  // Predicated region
  $region14: #{vgg11_feat_forward.9} parent=0 // pred_check
    _
  $region15: #{vgg11_feat_forward.9} parent=0 // pred_check_branch
    %16 = sbr.rel (0) target = $region17
  $region16: #{vgg11_feat_forward.9} parent=0 // pred_region
    _
  $region17: #{vgg11_feat_forward.9} parent=0 // pred_fallthru
    _
  %v18 = vld [vmem:[%s0] sm:$0xff]
  %v19 = vld [vmem:[%s0 + $0x8] sm:$0xff]
  %v20 = vld [vmem:[%s0 + $0x10] sm:$0xf]
  %v21 = vld [vmem:[%s0 + $0x14] sm:$0xff]
  %v22 = vld [vmem:[%s0 + $0x1c] sm:$0xff]
  %v23 = vld [vmem:[%s0 + $0x24] sm:$0xf]
  %v24 = vld [vmem:[%s0 + $0x28] sm:$0xff]
  %v25 = vld [vmem:[%s0 + $0x30] sm:$0xff]
  %v26 = vld [vmem:[%s0 + $0x38] sm:$0xf]
  %v27 = vld [vmem:[%s0 + $0x3c] sm:$0xff]
  %v28 = vld [vmem:[%s0 + $0x44] sm:$0xff]
  %v29 = vld [vmem:[%s0 + $0x4c] sm:$0xf]
  %v30 = vld [vmem:[%s1] sm:$0xf]
  %v31 = vld [vmem:[%s1 + $0x4] sm:$0xf]
  %v32 = vld [vmem:[%s1 + $0x8] sm:$0xf]
  %v33 = vld [vmem:[%s1 + $0xc] sm:$0xf]
  %v34 = vld [vmem:[%s1 + $0x10] sm:$0xf]
  %v35 = vld [vmem:[%s1 + $0x14] sm:$0xf]
  %v36 = vld [vmem:[%s1 + $0x18] sm:$0xf]
  %v37 = vld [vmem:[%s1 + $0x1c] sm:$0xf]
  %v38 = vld [vmem:[%s1 + $0x20] sm:$0xf]
  %v39 = vld [vmem:[%s1 + $0x24] sm:$0xf]
  %v40 = vld [vmem:[%s1 + $0x28] sm:$0xf]
  %v41 = vld [vmem:[%s1 + $0x2c] sm:$0xf]
  %v42 = vld [vmem:[%s1 + $0x30] sm:$0xf]
  %v43 = vld [vmem:[%s1 + $0x34] sm:$0xf]
  %v44 = vld [vmem:[%s1 + $0x38] sm:$0xf]
  %v45 = vld [vmem:[%s1 + $0x3c] sm:$0xf]
  %v46 = vld [vmem:[%s1 + $0x40] sm:$0xf]
  %v47 = vld [vmem:[%s1 + $0x44] sm:$0xf]
  %v48 = vld [vmem:[%s1 + $0x48] sm:$0xf]
  %v49 = vld [vmem:[%s1 + $0x4c] sm:$0xf]
  %v50 = vld [vmem:[%s1 + $0x50] sm:$0xf]
  %v51 = vld [vmem:[%s1 + $0x54] sm:$0xf]
  %v52 = vld [vmem:[%s1 + $0x58] sm:$0xf]
  %v53 = vld [vmem:[%s1 + $0x5c] sm:$0xf]
  %v54 = vld [vmem:[%s1 + $0x60] sm:$0xf]
  %v55 = vld [vmem:[%s1 + $0x64] sm:$0xf]
  %v56 = vld [vmem:[%s1 + $0x68] sm:$0xf]
  %v57 = vld [vmem:[%s1 + $0x6c] sm:$0xf]
  %v58 = vld [vmem:[%s1 + $0x70] sm:$0xf]
  %v59 = vld [vmem:[%s1 + $0x74] sm:$0xf]
  %v60 = vld [vmem:[%s1 + $0x78] sm:$0xf]
  %v61 = vld [vmem:[%s1 + $0x7c] sm:$0xf]
  %v62 = vld [vmem:[%s1 + $0x80] sm:$0xf]
  %v63 = vld [vmem:[%s1 + $0x84] sm:$0xf]
  %v64 = vld [vmem:[%s1 + $0x88] sm:$0xf]
  %v65 = vld [vmem:[%s1 + $0x8c] sm:$0xf]
  %v66 = vld [vmem:[%s1 + $0x90] sm:$0xf]
  %v67 = vld [vmem:[%s1 + $0x94] sm:$0xf]
  %v68 = vld [vmem:[%s1 + $0x98] sm:$0xf]
  %v69 = vld [vmem:[%s1 + $0x9c] sm:$0xf]
  %v70 = vld [vmem:[%s1 + $0xa0] sm:$0xf]
  %v71 = vld [vmem:[%s1 + $0xa4] sm:$0xf]
  %v72 = vld [vmem:[%s1 + $0xa8] sm:$0xf]
  %v73 = vld [vmem:[%s1 + $0xac] sm:$0xf]
  %v74 = vld [vmem:[%s1 + $0xb0] sm:$0xf]
  %v75 = vld [vmem:[%s1 + $0xb4] sm:$0xf]
  %v76 = vld [vmem:[%s1 + $0xb8] sm:$0xf]
  %v77 = vld [vmem:[%s1 + $0xbc] sm:$0xf]
  %v78 = vld [vmem:[%s1 + $0xc0] sm:$0xf]
  %v79 = vld [vmem:[%s1 + $0xc4] sm:$0xf]
  %v80 = vld [vmem:[%s1 + $0xc8] sm:$0xf]
  %v81 = vld [vmem:[%s1 + $0xcc] sm:$0xf]
  %v82 = vld [vmem:[%s1 + $0xd0] sm:$0xf]
  %v83 = vld [vmem:[%s1 + $0xd4] sm:$0xf]
  %v84 = vld [vmem:[%s1 + $0xd8] sm:$0xf]
  %v85 = vld [vmem:[%s1 + $0xdc] sm:$0xf]
  %v86 = vld [vmem:[%s1 + $0xe0] sm:$0xf]
  %v87 = vld [vmem:[%s1 + $0xe4] sm:$0xf]
  %v88 = vld [vmem:[%s1 + $0xe8] sm:$0xf]
  %v89 = vld [vmem:[%s1 + $0xec] sm:$0xf]
  %v90 = vld [vmem:[%s1 + $0xf0] sm:$0xf]
  %v91 = vld [vmem:[%s1 + $0xf4] sm:$0xf]
  %v92 = vld [vmem:[%s1 + $0xf8] sm:$0xf]
  %v93 = vld [vmem:[%s1 + $0xfc] sm:$0xf]
  %v94 = vld [vmem:[%s1 + $0x100] sm:$0xf]
  %v95 = vld [vmem:[%s1 + $0x104] sm:$0xf]
  %v96 = vld [vmem:[%s1 + $0x108] sm:$0xf]
  %v97 = vld [vmem:[%s1 + $0x10c] sm:$0xf]
  %v98 = vld [vmem:[%s1 + $0x110] sm:$0xf]
  %v99 = vld [vmem:[%s1 + $0x114] sm:$0xf]
  %v100 = vld [vmem:[%s1 + $0x118] sm:$0xf]
  %v101 = vld [vmem:[%s1 + $0x11c] sm:$0xf]
  %v102 = vld [vmem:[%s1 + $0x120] sm:$0xf]
  %v103 = vld [vmem:[%s1 + $0x124] sm:$0xf]
  %v104 = vld [vmem:[%s1 + $0x128] sm:$0xf]
  %v105 = vld [vmem:[%s1 + $0x12c] sm:$0xf]
  %v106 = vld [vmem:[%s1 + $0x130] sm:$0xf]
  %v107 = vld [vmem:[%s1 + $0x134] sm:$0xf]
  %v108 = vld [vmem:[%s1 + $0x138] sm:$0xf]
  %v109 = vld [vmem:[%s1 + $0x13c] sm:$0xf]
  %v122 = vunpack.c.l.b16 %v18
  %v123 = vunpack.c.h.b16 %v18
  %v124 = vunpack.c.l.b16 %v19
  %v125 = vunpack.c.h.b16 %v19
  %v126 = vunpack.c.l.b16 %v20
  %v127 = vunpack.c.l.b16 %v21
  %v128 = vunpack.c.h.b16 %v21
  %v129 = vunpack.c.l.b16 %v22
  %v130 = vunpack.c.h.b16 %v22
  %v131 = vunpack.c.l.b16 %v23
  %v132 = vunpack.c.l.b16 %v24
  %v133 = vunpack.c.h.b16 %v24
  %v134 = vunpack.c.l.b16 %v25
  %v135 = vunpack.c.h.b16 %v25
  %v136 = vunpack.c.l.b16 %v26
  %v137 = vunpack.c.l.b16 %v27
  %v138 = vunpack.c.h.b16 %v27
  %v139 = vunpack.c.l.b16 %v28
  %v140 = vunpack.c.h.b16 %v28
  %v141 = vunpack.c.l.b16 %v29
  %v142 = vpack.c.b16 %v127, %v122
  %v143 = vpack.c.b16 %v128, %v123
  %v144 = vpack.c.b16 %v129, %v124
  %v145 = vpack.c.b16 %v130, %v125
  %v146 = vpack.c.b16 %v131, %v126
  %v147 = vpack.c.b16 %v137, %v132
  %v148 = vpack.c.b16 %v138, %v133
  %v149 = vpack.c.b16 %v139, %v134
  %v150 = vpack.c.b16 %v140, %v135
  %v151 = vpack.c.b16 %v141, %v136
  %v242 = vunpack.c.l.b16 %v30
  %v243 = vunpack.c.l.b16 %v31
  %v244 = vunpack.c.l.b16 %v32
  %v245 = vunpack.c.l.b16 %v33
  %v246 = vunpack.c.l.b16 %v34
  %v247 = vunpack.c.l.b16 %v35
  %v248 = vunpack.c.l.b16 %v36
  %v249 = vunpack.c.l.b16 %v37
  %v250 = vunpack.c.l.b16 %v38
  %v251 = vunpack.c.l.b16 %v39
  %v252 = vunpack.c.l.b16 %v40
  %v253 = vunpack.c.l.b16 %v41
  %v254 = vunpack.c.l.b16 %v42
  %v255 = vunpack.c.l.b16 %v43
  %v256 = vunpack.c.l.b16 %v44
  %v257 = vunpack.c.l.b16 %v45
  %v258 = vunpack.c.l.b16 %v46
  %v259 = vunpack.c.l.b16 %v47
  %v260 = vunpack.c.l.b16 %v48
  %v261 = vunpack.c.l.b16 %v49
  %v262 = vunpack.c.l.b16 %v50
  %v263 = vunpack.c.l.b16 %v51
  %v264 = vunpack.c.l.b16 %v52
  %v265 = vunpack.c.l.b16 %v53
  %v266 = vunpack.c.l.b16 %v54
  %v267 = vunpack.c.l.b16 %v55
  %v268 = vunpack.c.l.b16 %v56
  %v269 = vunpack.c.l.b16 %v57
  %v270 = vunpack.c.l.b16 %v58
  %v271 = vunpack.c.l.b16 %v59
  %v272 = vunpack.c.l.b16 %v60
  %v273 = vunpack.c.l.b16 %v61
  %v274 = vunpack.c.l.b16 %v62
  %v275 = vunpack.c.l.b16 %v63
  %v276 = vunpack.c.l.b16 %v64
  %v277 = vunpack.c.l.b16 %v65
  %v278 = vunpack.c.l.b16 %v66
  %v279 = vunpack.c.l.b16 %v67
  %v280 = vunpack.c.l.b16 %v68
  %v281 = vunpack.c.l.b16 %v69
  %v282 = vunpack.c.l.b16 %v70
  %v283 = vunpack.c.l.b16 %v71
  %v284 = vunpack.c.l.b16 %v72
  %v285 = vunpack.c.l.b16 %v73
  %v286 = vunpack.c.l.b16 %v74
  %v287 = vunpack.c.l.b16 %v75
  %v288 = vunpack.c.l.b16 %v76
  %v289 = vunpack.c.l.b16 %v77
  %v290 = vunpack.c.l.b16 %v78
  %v291 = vunpack.c.l.b16 %v79
  %v292 = vunpack.c.l.b16 %v80
  %v293 = vunpack.c.l.b16 %v81
  %v294 = vunpack.c.l.b16 %v82
  %v295 = vunpack.c.l.b16 %v83
  %v296 = vunpack.c.l.b16 %v84
  %v297 = vunpack.c.l.b16 %v85
  %v298 = vunpack.c.l.b16 %v86
  %v299 = vunpack.c.l.b16 %v87
  %v300 = vunpack.c.l.b16 %v88
  %v301 = vunpack.c.l.b16 %v89
  %v302 = vunpack.c.l.b16 %v90
  %v303 = vunpack.c.l.b16 %v91
  %v304 = vunpack.c.l.b16 %v92
  %v305 = vunpack.c.l.b16 %v93
  %v306 = vunpack.c.l.b16 %v94
  %v307 = vunpack.c.l.b16 %v95
  %v308 = vunpack.c.l.b16 %v96
  %v309 = vunpack.c.l.b16 %v97
  %v310 = vunpack.c.l.b16 %v98
  %v311 = vunpack.c.l.b16 %v99
  %v312 = vunpack.c.l.b16 %v100
  %v313 = vunpack.c.l.b16 %v101
  %v314 = vunpack.c.l.b16 %v102
  %v315 = vunpack.c.l.b16 %v103
  %v316 = vunpack.c.l.b16 %v104
  %v317 = vunpack.c.l.b16 %v105
  %v318 = vunpack.c.l.b16 %v106
  %v319 = vunpack.c.l.b16 %v107
  %v320 = vunpack.c.l.b16 %v108
  %v321 = vunpack.c.l.b16 %v109
  %v322 = vpack.c.b16 %v243, %v242
  %v323 = vpack.c.b16 %v245, %v244
  %v324 = vpack.c.b16 %v247, %v246
  %v325 = vpack.c.b16 %v249, %v248
  %v326 = vpack.c.b16 %v251, %v250
  %v327 = vpack.c.b16 %v253, %v252
  %v328 = vpack.c.b16 %v255, %v254
  %v329 = vpack.c.b16 %v257, %v256
  %v330 = vpack.c.b16 %v259, %v258
  %v331 = vpack.c.b16 %v261, %v260
  %v332 = vpack.c.b16 %v263, %v262
  %v333 = vpack.c.b16 %v265, %v264
  %v334 = vpack.c.b16 %v267, %v266
  %v335 = vpack.c.b16 %v269, %v268
  %v336 = vpack.c.b16 %v271, %v270
  %v337 = vpack.c.b16 %v273, %v272
  %v338 = vpack.c.b16 %v275, %v274
  %v339 = vpack.c.b16 %v277, %v276
  %v340 = vpack.c.b16 %v279, %v278
  %v341 = vpack.c.b16 %v281, %v280
  %v342 = vpack.c.b16 %v283, %v282
  %v343 = vpack.c.b16 %v285, %v284
  %v344 = vpack.c.b16 %v287, %v286
  %v345 = vpack.c.b16 %v289, %v288
  %v346 = vpack.c.b16 %v291, %v290
  %v347 = vpack.c.b16 %v293, %v292
  %v348 = vpack.c.b16 %v295, %v294
  %v349 = vpack.c.b16 %v297, %v296
  %v350 = vpack.c.b16 %v299, %v298
  %v351 = vpack.c.b16 %v301, %v300
  %v352 = vpack.c.b16 %v303, %v302
  %v353 = vpack.c.b16 %v305, %v304
  %v354 = vpack.c.b16 %v307, %v306
  %v355 = vpack.c.b16 %v309, %v308
  %v356 = vpack.c.b16 %v311, %v310
  %v357 = vpack.c.b16 %v313, %v312
  %v358 = vpack.c.b16 %v315, %v314
  %v359 = vpack.c.b16 %v317, %v316
  %v360 = vpack.c.b16 %v319, %v318
  %v361 = vpack.c.b16 %v321, %v320
  %402 = vmatprep.subr.bf16.mxu0 0
  %403 = vmatpush1.bf16.msra.mxu0 %v322
  %404 = vmatprep.subr.bf16.mxu0 0
  %405 = vmatpush1.bf16.msra.mxu0 %v323
  %406 = vmatprep.subr.bf16.mxu0 0
  %407 = vmatpush1.bf16.msra.mxu0 %v324
  %408 = vmatprep.subr.bf16.mxu0 0
  %409 = vmatpush1.bf16.msra.mxu0 %v325
  %410 = vmatprep.subr.bf16.mxu0 0
  %411 = vmatpush1.bf16.msra.mxu0 %v326
  %412 = vmatprep.subr.bf16.mxu0 0
  %413 = vmatpush1.bf16.msra.mxu0 %v327
  %414 = vmatprep.subr.bf16.mxu0 0
  %415 = vmatpush1.bf16.msra.mxu0 %v328
  %416 = vmatprep.subr.bf16.mxu0 0
  %417 = vmatpush1.bf16.msra.mxu0 %v329
  %418 = vmatprep.subr.bf16.mxu0 0
  %419 = vmatpush1.bf16.msra.mxu0 %v330
  %420 = vmatprep.subr.bf16.mxu0 0
  %421 = vmatpush1.bf16.msra.mxu0 %v331
  %422 = vmatprep.subr.bf16.mxu0 0
  %423 = vmatpush1.bf16.msra.mxu0 %v332
  %424 = vmatprep.subr.bf16.mxu0 0
  %425 = vmatpush1.bf16.msra.mxu0 %v333
  %426 = vmatprep.subr.bf16.mxu0 0
  %427 = vmatpush1.bf16.msra.mxu0 %v334
  %428 = vmatprep.subr.bf16.mxu0 0
  %429 = vmatpush1.bf16.msra.mxu0 %v335
  %430 = vmatprep.subr.bf16.mxu0 0
  %431 = vmatpush1.bf16.msra.mxu0 %v336
  %432 = vmatprep.subr.bf16.mxu0 0
  %433 = vmatpush1.bf16.msra.mxu0 %v337
  %434 = vmatprep.mubr.bf16.mxu0 %v143
  %435 = vmatmul.mubr.bf16.gmra.mrb[0].mxu0 %v142
  %v436 = vpop.f32.mrb[0].mxu0
  %v437 = vadd.f32 0.0, %v436
  %v438 = vpop.f32.mrb[0].mxu0
  %v439 = vpop.f32.mrb[0].mxu0
  %v440 = vadd.f32 0.0, %v439
  %v441 = vpop.f32.mrb[0].mxu0
  %442 = vmatprep.mubr.bf16.mxu0 %v148
  %443 = vmatmul.mubr.bf16.gmra.mrb[0].mxu0 %v147
  %v444 = vpop.f32.mrb[0].mxu0
  %v445 = vadd.f32 0.0, %v444
  %v446 = vpop.f32.mrb[0].mxu0
  %v447 = vpop.f32.mrb[0].mxu0
  %v448 = vadd.f32 0.0, %v447
  %v449 = vpop.f32.mrb[0].mxu0
  %450 = vdwg.mxu0
  %451 = vmatprep.subr.bf16.mxu0 0
  %452 = vmatpush1.bf16.msra.mxu0 %v338
  %453 = vmatprep.subr.bf16.mxu0 0
  %454 = vmatpush1.bf16.msra.mxu0 %v339
  %455 = vmatprep.subr.bf16.mxu0 0
  %456 = vmatpush1.bf16.msra.mxu0 %v340
  %457 = vmatprep.subr.bf16.mxu0 0
  %458 = vmatpush1.bf16.msra.mxu0 %v341
  %459 = vmatprep.subr.bf16.mxu0 0
  %460 = vmatpush1.bf16.msra.mxu0 %v342
  %461 = vmatprep.subr.bf16.mxu0 0
  %462 = vmatpush1.bf16.msra.mxu0 %v343
  %463 = vmatprep.subr.bf16.mxu0 0
  %464 = vmatpush1.bf16.msra.mxu0 %v344
  %465 = vmatprep.subr.bf16.mxu0 0
  %466 = vmatpush1.bf16.msra.mxu0 %v345
  %467 = vmatprep.subr.bf16.mxu0 0
  %468 = vmatpush1.bf16.msra.mxu0 %v346
  %469 = vmatprep.subr.bf16.mxu0 0
  %470 = vmatpush1.bf16.msra.mxu0 %v347
  %471 = vmatprep.subr.bf16.mxu0 0
  %472 = vmatpush1.bf16.msra.mxu0 %v348
  %473 = vmatprep.subr.bf16.mxu0 0
  %474 = vmatpush1.bf16.msra.mxu0 %v349
  %475 = vmatprep.subr.bf16.mxu0 0
  %476 = vmatpush1.bf16.msra.mxu0 %v350
  %477 = vmatprep.subr.bf16.mxu0 0
  %478 = vmatpush1.bf16.msra.mxu0 %v351
  %479 = vmatprep.subr.bf16.mxu0 0
  %480 = vmatpush1.bf16.msra.mxu0 %v352
  %481 = vmatprep.subr.bf16.mxu0 0
  %482 = vmatpush1.bf16.msra.mxu0 %v353
  %483 = vmatprep.mubr.bf16.mxu0 %v145
  %484 = vmatmul.mubr.bf16.gmra.mrb[0].mxu0 %v144
  %v485 = vpop.f32.mrb[0].mxu0
  %v486 = vadd.f32 %v437, %v485
  %v487 = vpop.f32.mrb[0].mxu0
  %v488 = vpop.f32.mrb[0].mxu0
  %v489 = vadd.f32 %v440, %v488
  %v490 = vpop.f32.mrb[0].mxu0
  %491 = vmatprep.mubr.bf16.mxu0 %v150
  %492 = vmatmul.mubr.bf16.gmra.mrb[0].mxu0 %v149
  %v493 = vpop.f32.mrb[0].mxu0
  %v494 = vadd.f32 %v445, %v493
  %v495 = vpop.f32.mrb[0].mxu0
  %v496 = vpop.f32.mrb[0].mxu0
  %v497 = vadd.f32 %v448, %v496
  %v498 = vpop.f32.mrb[0].mxu0
  %499 = vdwg.mxu0
  %500 = vmatprep.subr.bf16.mxu0 0
  %501 = vmatpush1.bf16.msra.mxu0 %v354
  %502 = vmatprep.subr.bf16.mxu0 0
  %503 = vmatpush1.bf16.msra.mxu0 %v355
  %504 = vmatprep.subr.bf16.mxu0 0
  %505 = vmatpush1.bf16.msra.mxu0 %v356
  %506 = vmatprep.subr.bf16.mxu0 0
  %507 = vmatpush1.bf16.msra.mxu0 %v357
  %508 = vmatprep.subr.bf16.mxu0 0
  %509 = vmatpush1.bf16.msra.mxu0 %v358
  %510 = vmatprep.subr.bf16.mxu0 0
  %511 = vmatpush1.bf16.msra.mxu0 %v359
  %512 = vmatprep.subr.bf16.mxu0 0
  %513 = vmatpush1.bf16.msra.mxu0 %v360
  %514 = vmatprep.subr.bf16.mxu0 0
  %515 = vmatpush1.bf16.msra.mxu0 %v361
  %516 = vmatprep.subr.bf16.mxu0 0
  %517 = vmatpush1.bf16.msra.mxu0 0
  %518 = vmatprep.subr.bf16.mxu0 0
  %519 = vmatpush1.bf16.msra.mxu0 0
  %520 = vmatprep.subr.bf16.mxu0 0
  %521 = vmatpush1.bf16.msra.mxu0 0
  %522 = vmatprep.subr.bf16.mxu0 0
  %523 = vmatpush1.bf16.msra.mxu0 0
  %524 = vmatprep.subr.bf16.mxu0 0
  %525 = vmatpush1.bf16.msra.mxu0 0
  %526 = vmatprep.subr.bf16.mxu0 0
  %527 = vmatpush1.bf16.msra.mxu0 0
  %528 = vmatprep.subr.bf16.mxu0 0
  %529 = vmatpush1.bf16.msra.mxu0 0
  %530 = vmatprep.subr.bf16.mxu0 0
  %531 = vmatpush1.bf16.msra.mxu0 0
  %532 = vmatprep.mubr.bf16.mxu0 0
  %533 = vmatmul.mubr.bf16.gmra.mrb[0].mxu0 %v146
  %v534 = vpop.f32.mrb[0].mxu0
  %v535 = vadd.f32 %v486, %v534
  %v536 = vpop.f32.mrb[0].mxu0
  %v537 = vpop.f32.mrb[0].mxu0
  %v538 = vadd.f32 %v489, %v537
  %v539 = vpop.f32.mrb[0].mxu0
  %540 = vmatprep.mubr.bf16.mxu0 0
  %541 = vmatmul.mubr.bf16.gmra.mrb[0].mxu0 %v151
  %v542 = vpop.f32.mrb[0].mxu0
  %v543 = vadd.f32 %v494, %v542
  %v544 = vpop.f32.mrb[0].mxu0
  %v545 = vpop.f32.mrb[0].mxu0
  %v546 = vadd.f32 %v497, %v545
  %v547 = vpop.f32.mrb[0].mxu0
  %548 = vdwg.mxu0
  %v549 = vld [vmem:[%s2] sm:$0x1]
  %v551 = vlaneseq
  %v552 = vshrl.u32 %v551, 7
  %v553 = vsub.s32 0, %v552
  %v554 = vrot.slane %v549, %v553
  %v556 = vmul.f32 %v535, %v554
  %v557 = vmul.f32 %v538, %v554
  %v558 = vmul.f32 %v543, %v554
  %v559 = vmul.f32 %v546, %v554
  %v560 = vld [vmem:[%s3] sm:$0x1]
  %v562 = vlaneseq
  %v563 = vshrl.u32 %v562, 7
  %v564 = vsub.s32 0, %v563
  %v565 = vrot.slane %v560, %v564
  %v567 = vadd.f32 %v556, %v565
  %v568 = vadd.f32 %v557, %v565
  %v569 = vadd.f32 %v558, %v565
  %v570 = vadd.f32 %v559, %v565
  %v571 = vmax.f32 %v567, 0.0
  %v572 = vmax.f32 %v568, 0.0
  %v573 = vmax.f32 %v569, 0.0
  %v574 = vmax.f32 %v570, 0.0
  %v575 = vpack.c.bf16 %v572, %v571
  %v576 = vpack.c.bf16 %v574, %v573
  %v579 = vunpack.c.l.b16 %v575
  %v580 = vunpack.c.h.b16 %v575
  %v581 = vunpack.c.l.b16 %v576
  %v582 = vunpack.c.h.b16 %v576
  %v583 = vpack.c.b16 %v579, %v579
  %v584 = vpack.c.b16 %v580, %v580
  %v585 = vpack.c.b16 %v581, %v581
  %v586 = vpack.c.b16 %v582, %v582
  %591 = vst [vmem:[%s4] sm:$0xf] %v583
  %592 = vst [vmem:[%s4 + $0x4] sm:$0xf] %v584
  %593 = vst [vmem:[%s4 + $0x8] sm:$0xf] %v585
  %594 = vst [vmem:[%s4 + $0xc] sm:$0xf] %v586
  // Predicated region
  $region18: #{vgg11_feat_forward.9} parent=0 // pred_check
    _
  $region19: #{vgg11_feat_forward.9} parent=0 // pred_check_branch
    %596 = sbr.rel (0) target = $region21
  $region20: #{vgg11_feat_forward.9} parent=0 // pred_region
    _
  $region21: #{vgg11_feat_forward.9} parent=0 // pred_fallthru
    _
  // Predicated region
  $region22: #{vgg11_feat_forward.9} parent=0 // pred_check
    _
  $region23: #{vgg11_feat_forward.9} parent=0 // pred_check_branch
    %598 = sbr.rel (0) target = $region25
  $region24: #{vgg11_feat_forward.9} parent=0 // pred_region
    _
  $region25: #{vgg11_feat_forward.9} parent=0 // pred_fallthru
    _

// kernel: vgg11_feat_forward.11
$region0: #{vgg11_feat_forward.11}
  #allocation0 [shape = 'u32[]', space=smem, size = 0x4, offset = 0x4, fixed_abs, tag = 'smem constant byte address 0x4 - core index']
  #allocation1 [shape = 'u32[144,128]{1,0:T(1,128)}', space=vmem, size = 0x12000, scoped, tag = 'internal scratch']
  %s0 = inlined_call_operand.vmem [shape: bf16[16,1152], index: 0, kind: input, shape index: {}]
  %s1 = inlined_call_operand.vmem [shape: bf16[1152,128], index: 1, kind: input, shape index: {}]
  %s2 = inlined_call_operand.vmem [shape: f32[1,128], index: 2, kind: input, shape index: {}]
  %s3 = inlined_call_operand.vmem [shape: f32[1,128], index: 3, kind: input, shape index: {}]
  %s4 = inlined_call_operand.vmem [shape: bf16[128,1024], index: 4, kind: input, shape index: {}]
  %s5 = inlined_call_operand.vmem [shape: f32[1,1024], index: 5, kind: input, shape index: {}]
  %s6 = inlined_call_operand.vmem [shape: bf16[1024,128], index: 6, kind: input, shape index: {}]
  %s7 = inlined_call_operand.vmem [shape: f32[1,128], index: 7, kind: input, shape index: {}]
  %s8 = inlined_call_operand.vmem [shape: f32[16,128], index: 8, kind: output, shape index: {}]
  %s9 = sld [smem:[#allocation0]]
  $region42: #{vgg11_feat_forward.11} parent=0
    _
  %s11 = ssub.s32 1, %s9
  %s12 = scalar_select 0, %s11, %s9
  // Predicated region
  $region2: #{vgg11_feat_forward.11} parent=0 // pred_check
    _
  $region3: #{vgg11_feat_forward.11} parent=0 // pred_check_branch
    %14 = sbr.rel (0) target = $region5
  $region4: #{vgg11_feat_forward.11} parent=0 // pred_region
    _
  $region5: #{vgg11_feat_forward.11} parent=0 // pred_fallthru
    _
  // Predicated region
  $region6: #{vgg11_feat_forward.11} parent=0 // pred_check
    _
  $region7: #{vgg11_feat_forward.11} parent=0 // pred_check_branch
    %16 = sbr.rel (0) target = $region9
  $region8: #{vgg11_feat_forward.11} parent=0 // pred_region
    _
  $region9: #{vgg11_feat_forward.11} parent=0 // pred_fallthru
    _
  // Predicated region
  $region10: #{vgg11_feat_forward.11} parent=0 // pred_check
    _
  $region11: #{vgg11_feat_forward.11} parent=0 // pred_check_branch
    %18 = sbr.rel (0) target = $region13
  $region12: #{vgg11_feat_forward.11} parent=0 // pred_region
    _
  $region13: #{vgg11_feat_forward.11} parent=0 // pred_fallthru
    _
  // Predicated region
  $region14: #{vgg11_feat_forward.11} parent=0 // pred_check
    _
  $region15: #{vgg11_feat_forward.11} parent=0 // pred_check_branch
    %20 = sbr.rel (0) target = $region17
  $region16: #{vgg11_feat_forward.11} parent=0 // pred_region
    _
  $region17: #{vgg11_feat_forward.11} parent=0 // pred_fallthru
    _
  // Predicated region
  $region18: #{vgg11_feat_forward.11} parent=0 // pred_check
    _
  $region19: #{vgg11_feat_forward.11} parent=0 // pred_check_branch
    %22 = sbr.rel (0) target = $region21
  $region20: #{vgg11_feat_forward.11} parent=0 // pred_region
    _
  $region21: #{vgg11_feat_forward.11} parent=0 // pred_fallthru
    _
  // Predicated region
  $region22: #{vgg11_feat_forward.11} parent=0 // pred_check
    _
  $region23: #{vgg11_feat_forward.11} parent=0 // pred_check_branch
    %24 = sbr.rel (0) target = $region25
  $region24: #{vgg11_feat_forward.11} parent=0 // pred_region
    _
  $region25: #{vgg11_feat_forward.11} parent=0 // pred_fallthru
    _
  // Predicated region
  $region26: #{vgg11_feat_forward.11} parent=0 // pred_check
    _
  $region27: #{vgg11_feat_forward.11} parent=0 // pred_check_branch
    %26 = sbr.rel (0) target = $region29
  $region28: #{vgg11_feat_forward.11} parent=0 // pred_region
    _
  $region29: #{vgg11_feat_forward.11} parent=0 // pred_fallthru
    _
  // Predicated region
  $region30: #{vgg11_feat_forward.11} parent=0 // pred_check
    _
  $region31: #{vgg11_feat_forward.11} parent=0 // pred_check_branch
    %28 = sbr.rel (0) target = $region33
  $region32: #{vgg11_feat_forward.11} parent=0 // pred_region
    _
  $region33: #{vgg11_feat_forward.11} parent=0 // pred_fallthru
    _
  %v30 = vld [vmem:[%s0] sm:$0xff]
  %v31 = vld [vmem:[%s0 + $0x8] sm:$0xff]
  %v32 = vld [vmem:[%s0 + $0x10] sm:$0xff]
  %v33 = vld [vmem:[%s0 + $0x18] sm:$0xff]
  %v34 = vld [vmem:[%s0 + $0x20] sm:$0xf]
  %v35 = vld [vmem:[%s0 + $0x24] sm:$0xff]
  %v36 = vld [vmem:[%s0 + $0x2c] sm:$0xff]
  %v37 = vld [vmem:[%s0 + $0x34] sm:$0xff]
  %v38 = vld [vmem:[%s0 + $0x3c] sm:$0xff]
  %v39 = vld [vmem:[%s0 + $0x44] sm:$0xf]
  %v40 = vld [vmem:[%s1] sm:$0xf]
  %v41 = vld [vmem:[%s1 + $0x4] sm:$0xf]
  %v42 = vld [vmem:[%s1 + $0x8] sm:$0xf]
  %v43 = vld [vmem:[%s1 + $0xc] sm:$0xf]
  %v44 = vld [vmem:[%s1 + $0x10] sm:$0xf]
  %v45 = vld [vmem:[%s1 + $0x14] sm:$0xf]
  %v46 = vld [vmem:[%s1 + $0x18] sm:$0xf]
  %v47 = vld [vmem:[%s1 + $0x1c] sm:$0xf]
  %v48 = vld [vmem:[%s1 + $0x20] sm:$0xf]
  %v49 = vld [vmem:[%s1 + $0x24] sm:$0xf]
  %v50 = vld [vmem:[%s1 + $0x28] sm:$0xf]
  %v51 = vld [vmem:[%s1 + $0x2c] sm:$0xf]
  %v52 = vld [vmem:[%s1 + $0x30] sm:$0xf]
  %v53 = vld [vmem:[%s1 + $0x34] sm:$0xf]
  %v54 = vld [vmem:[%s1 + $0x38] sm:$0xf]
  %v55 = vld [vmem:[%s1 + $0x3c] sm:$0xf]
  %v56 = vld [vmem:[%s1 + $0x40] sm:$0xf]
  %v57 = vld [vmem:[%s1 + $0x44] sm:$0xf]
  %v58 = vld [vmem:[%s1 + $0x48] sm:$0xf]
  %v59 = vld [vmem:[%s1 + $0x4c] sm:$0xf]
  %v60 = vld [vmem:[%s1 + $0x50] sm:$0xf]
  %v61 = vld [vmem:[%s1 + $0x54] sm:$0xf]
  %v62 = vld [vmem:[%s1 + $0x58] sm:$0xf]
  %v63 = vld [vmem:[%s1 + $0x5c] sm:$0xf]
  %v64 = vld [vmem:[%s1 + $0x60] sm:$0xf]
  %v65 = vld [vmem:[%s1 + $0x64] sm:$0xf]
  %v66 = vld [vmem:[%s1 + $0x68] sm:$0xf]
  %v67 = vld [vmem:[%s1 + $0x6c] sm:$0xf]
  %v68 = vld [vmem:[%s1 + $0x70] sm:$0xf]
  %v69 = vld [vmem:[%s1 + $0x74] sm:$0xf]
  %v70 = vld [vmem:[%s1 + $0x78] sm:$0xf]
  %v71 = vld [vmem:[%s1 + $0x7c] sm:$0xf]
  %v72 = vld [vmem:[%s1 + $0x80] sm:$0xf]
  %v73 = vld [vmem:[%s1 + $0x84] sm:$0xf]
  %v74 = vld [vmem:[%s1 + $0x88] sm:$0xf]
  %v75 = vld [vmem:[%s1 + $0x8c] sm:$0xf]
  %v76 = vld [vmem:[%s1 + $0x90] sm:$0xf]
  %v77 = vld [vmem:[%s1 + $0x94] sm:$0xf]
  %v78 = vld [vmem:[%s1 + $0x98] sm:$0xf]
  %v79 = vld [vmem:[%s1 + $0x9c] sm:$0xf]
  %v80 = vld [vmem:[%s1 + $0xa0] sm:$0xf]
  %v81 = vld [vmem:[%s1 + $0xa4] sm:$0xf]
  %v82 = vld [vmem:[%s1 + $0xa8] sm:$0xf]
  %v83 = vld [vmem:[%s1 + $0xac] sm:$0xf]
  %v84 = vld [vmem:[%s1 + $0xb0] sm:$0xf]
  %v85 = vld [vmem:[%s1 + $0xb4] sm:$0xf]
  %v86 = vld [vmem:[%s1 + $0xb8] sm:$0xf]
  %v87 = vld [vmem:[%s1 + $0xbc] sm:$0xf]
  %v88 = vld [vmem:[%s1 + $0xc0] sm:$0xf]
  %v89 = vld [vmem:[%s1 + $0xc4] sm:$0xf]
  %v90 = vld [vmem:[%s1 + $0xc8] sm:$0xf]
  %v91 = vld [vmem:[%s1 + $0xcc] sm:$0xf]
  %v92 = vld [vmem:[%s1 + $0xd0] sm:$0xf]
  %v93 = vld [vmem:[%s1 + $0xd4] sm:$0xf]
  %v94 = vld [vmem:[%s1 + $0xd8] sm:$0xf]
  %v95 = vld [vmem:[%s1 + $0xdc] sm:$0xf]
  %v96 = vld [vmem:[%s1 + $0xe0] sm:$0xf]
  %v97 = vld [vmem:[%s1 + $0xe4] sm:$0xf]
  %v98 = vld [vmem:[%s1 + $0xe8] sm:$0xf]
  %v99 = vld [vmem:[%s1 + $0xec] sm:$0xf]
  %v100 = vld [vmem:[%s1 + $0xf0] sm:$0xf]
  %v101 = vld [vmem:[%s1 + $0xf4] sm:$0xf]
  %v102 = vld [vmem:[%s1 + $0xf8] sm:$0xf]
  %v103 = vld [vmem:[%s1 + $0xfc] sm:$0xf]
  %v104 = vld [vmem:[%s1 + $0x100] sm:$0xf]
  %v105 = vld [vmem:[%s1 + $0x104] sm:$0xf]
  %v106 = vld [vmem:[%s1 + $0x108] sm:$0xf]
  %v107 = vld [vmem:[%s1 + $0x10c] sm:$0xf]
  %v108 = vld [vmem:[%s1 + $0x110] sm:$0xf]
  %v109 = vld [vmem:[%s1 + $0x114] sm:$0xf]
  %v110 = vld [vmem:[%s1 + $0x118] sm:$0xf]
  %v111 = vld [vmem:[%s1 + $0x11c] sm:$0xf]
  %v112 = vld [vmem:[%s1 + $0x120] sm:$0xf]
  %v113 = vld [vmem:[%s1 + $0x124] sm:$0xf]
  %v114 = vld [vmem:[%s1 + $0x128] sm:$0xf]
  %v115 = vld [vmem:[%s1 + $0x12c] sm:$0xf]
  %v116 = vld [vmem:[%s1 + $0x130] sm:$0xf]
  %v117 = vld [vmem:[%s1 + $0x134] sm:$0xf]
  %v118 = vld [vmem:[%s1 + $0x138] sm:$0xf]
  %v119 = vld [vmem:[%s1 + $0x13c] sm:$0xf]
  %v120 = vld [vmem:[%s1 + $0x140] sm:$0xf]
  %v121 = vld [vmem:[%s1 + $0x144] sm:$0xf]
  %v122 = vld [vmem:[%s1 + $0x148] sm:$0xf]
  %v123 = vld [vmem:[%s1 + $0x14c] sm:$0xf]
  %v124 = vld [vmem:[%s1 + $0x150] sm:$0xf]
  %v125 = vld [vmem:[%s1 + $0x154] sm:$0xf]
  %v126 = vld [vmem:[%s1 + $0x158] sm:$0xf]
  %v127 = vld [vmem:[%s1 + $0x15c] sm:$0xf]
  %v128 = vld [vmem:[%s1 + $0x160] sm:$0xf]
  %v129 = vld [vmem:[%s1 + $0x164] sm:$0xf]
  %v130 = vld [vmem:[%s1 + $0x168] sm:$0xf]
  %v131 = vld [vmem:[%s1 + $0x16c] sm:$0xf]
  %v132 = vld [vmem:[%s1 + $0x170] sm:$0xf]
  %v133 = vld [vmem:[%s1 + $0x174] sm:$0xf]
  %v134 = vld [vmem:[%s1 + $0x178] sm:$0xf]
  %v135 = vld [vmem:[%s1 + $0x17c] sm:$0xf]
  %v136 = vld [vmem:[%s1 + $0x180] sm:$0xf]
  %v137 = vld [vmem:[%s1 + $0x184] sm:$0xf]
  %v138 = vld [vmem:[%s1 + $0x188] sm:$0xf]
  %v139 = vld [vmem:[%s1 + $0x18c] sm:$0xf]
  %v140 = vld [vmem:[%s1 + $0x190] sm:$0xf]
  %v141 = vld [vmem:[%s1 + $0x194] sm:$0xf]
  %v142 = vld [vmem:[%s1 + $0x198] sm:$0xf]
  %v143 = vld [vmem:[%s1 + $0x19c] sm:$0xf]
  %v144 = vld [vmem:[%s1 + $0x1a0] sm:$0xf]
  %v145 = vld [vmem:[%s1 + $0x1a4] sm:$0xf]
  %v146 = vld [vmem:[%s1 + $0x1a8] sm:$0xf]
  %v147 = vld [vmem:[%s1 + $0x1ac] sm:$0xf]
  %v148 = vld [vmem:[%s1 + $0x1b0] sm:$0xf]
  %v149 = vld [vmem:[%s1 + $0x1b4] sm:$0xf]
  %v150 = vld [vmem:[%s1 + $0x1b8] sm:$0xf]
  %v151 = vld [vmem:[%s1 + $0x1bc] sm:$0xf]
  %v152 = vld [vmem:[%s1 + $0x1c0] sm:$0xf]
  %v153 = vld [vmem:[%s1 + $0x1c4] sm:$0xf]
  %v154 = vld [vmem:[%s1 + $0x1c8] sm:$0xf]
  %v155 = vld [vmem:[%s1 + $0x1cc] sm:$0xf]
  %v156 = vld [vmem:[%s1 + $0x1d0] sm:$0xf]
  %v157 = vld [vmem:[%s1 + $0x1d4] sm:$0xf]
  %v158 = vld [vmem:[%s1 + $0x1d8] sm:$0xf]
  %v159 = vld [vmem:[%s1 + $0x1dc] sm:$0xf]
  %v160 = vld [vmem:[%s1 + $0x1e0] sm:$0xf]
  %v161 = vld [vmem:[%s1 + $0x1e4] sm:$0xf]
  %v162 = vld [vmem:[%s1 + $0x1e8] sm:$0xf]
  %v163 = vld [vmem:[%s1 + $0x1ec] sm:$0xf]
  %v164 = vld [vmem:[%s1 + $0x1f0] sm:$0xf]
  %v165 = vld [vmem:[%s1 + $0x1f4] sm:$0xf]
  %v166 = vld [vmem:[%s1 + $0x1f8] sm:$0xf]
  %v167 = vld [vmem:[%s1 + $0x1fc] sm:$0xf]
  %v168 = vld [vmem:[%s1 + $0x200] sm:$0xf]
  %v169 = vld [vmem:[%s1 + $0x204] sm:$0xf]
  %v170 = vld [vmem:[%s1 + $0x208] sm:$0xf]
  %v171 = vld [vmem:[%s1 + $0x20c] sm:$0xf]
  %v172 = vld [vmem:[%s1 + $0x210] sm:$0xf]
  %v173 = vld [vmem:[%s1 + $0x214] sm:$0xf]
  %v174 = vld [vmem:[%s1 + $0x218] sm:$0xf]
  %v175 = vld [vmem:[%s1 + $0x21c] sm:$0xf]
  %v176 = vld [vmem:[%s1 + $0x220] sm:$0xf]
  %v177 = vld [vmem:[%s1 + $0x224] sm:$0xf]
  %v178 = vld [vmem:[%s1 + $0x228] sm:$0xf]
  %v179 = vld [vmem:[%s1 + $0x22c] sm:$0xf]
  %v180 = vld [vmem:[%s1 + $0x230] sm:$0xf]
  %v181 = vld [vmem:[%s1 + $0x234] sm:$0xf]
  %v182 = vld [vmem:[%s1 + $0x238] sm:$0xf]
  %v183 = vld [vmem:[%s1 + $0x23c] sm:$0xf]
  %v194 = vunpack.c.l.b16 %v30
  %v195 = vunpack.c.h.b16 %v30
  %v196 = vunpack.c.l.b16 %v31
  %v197 = vunpack.c.h.b16 %v31
  %v198 = vunpack.c.l.b16 %v32
  %v199 = vunpack.c.h.b16 %v32
  %v200 = vunpack.c.l.b16 %v33
  %v201 = vunpack.c.h.b16 %v33
  %v202 = vunpack.c.l.b16 %v34
  %v203 = vunpack.c.l.b16 %v35
  %v204 = vunpack.c.h.b16 %v35
  %v205 = vunpack.c.l.b16 %v36
  %v206 = vunpack.c.h.b16 %v36
  %v207 = vunpack.c.l.b16 %v37
  %v208 = vunpack.c.h.b16 %v37
  %v209 = vunpack.c.l.b16 %v38
  %v210 = vunpack.c.h.b16 %v38
  %v211 = vunpack.c.l.b16 %v39
  %v212 = vpack.c.b16 %v203, %v194
  %v213 = vpack.c.b16 %v204, %v195
  %v214 = vpack.c.b16 %v205, %v196
  %v215 = vpack.c.b16 %v206, %v197
  %v216 = vpack.c.b16 %v207, %v198
  %v217 = vpack.c.b16 %v208, %v199
  %v218 = vpack.c.b16 %v209, %v200
  %v219 = vpack.c.b16 %v210, %v201
  %v220 = vpack.c.b16 %v211, %v202
  %v374 = vunpack.c.l.b16 %v40
  %v375 = vunpack.c.l.b16 %v41
  %v376 = vunpack.c.l.b16 %v42
  %v377 = vunpack.c.l.b16 %v43
  %v378 = vunpack.c.l.b16 %v44
  %v379 = vunpack.c.l.b16 %v45
  %v380 = vunpack.c.l.b16 %v46
  %v381 = vunpack.c.l.b16 %v47
  %v382 = vunpack.c.l.b16 %v48
  %v383 = vunpack.c.l.b16 %v49
  %v384 = vunpack.c.l.b16 %v50
  %v385 = vunpack.c.l.b16 %v51
  %v386 = vunpack.c.l.b16 %v52
  %v387 = vunpack.c.l.b16 %v53
  %v388 = vunpack.c.l.b16 %v54
  %v389 = vunpack.c.l.b16 %v55
  %v390 = vunpack.c.l.b16 %v56
  %v391 = vunpack.c.l.b16 %v57
  %v392 = vunpack.c.l.b16 %v58
  %v393 = vunpack.c.l.b16 %v59
  %v394 = vunpack.c.l.b16 %v60
  %v395 = vunpack.c.l.b16 %v61
  %v396 = vunpack.c.l.b16 %v62
  %v397 = vunpack.c.l.b16 %v63
  %v398 = vunpack.c.l.b16 %v64
  %v399 = vunpack.c.l.b16 %v65
  %v400 = vunpack.c.l.b16 %v66
  %v401 = vunpack.c.l.b16 %v67
  %v402 = vunpack.c.l.b16 %v68
  %v403 = vunpack.c.l.b16 %v69
  %v404 = vunpack.c.l.b16 %v70
  %v405 = vunpack.c.l.b16 %v71
  %v406 = vunpack.c.l.b16 %v72
  %v407 = vunpack.c.l.b16 %v73
  %v408 = vunpack.c.l.b16 %v74
  %v409 = vunpack.c.l.b16 %v75
  %v410 = vunpack.c.l.b16 %v76
  %v411 = vunpack.c.l.b16 %v77
  %v412 = vunpack.c.l.b16 %v78
  %v413 = vunpack.c.l.b16 %v79
  %v414 = vunpack.c.l.b16 %v80
  %v415 = vunpack.c.l.b16 %v81
  %v416 = vunpack.c.l.b16 %v82
  %v417 = vunpack.c.l.b16 %v83
  %v418 = vunpack.c.l.b16 %v84
  %v419 = vunpack.c.l.b16 %v85
  %v420 = vunpack.c.l.b16 %v86
  %v421 = vunpack.c.l.b16 %v87
  %v422 = vunpack.c.l.b16 %v88
  %v423 = vunpack.c.l.b16 %v89
  %v424 = vunpack.c.l.b16 %v90
  %v425 = vunpack.c.l.b16 %v91
  %v426 = vunpack.c.l.b16 %v92
  %v427 = vunpack.c.l.b16 %v93
  %v428 = vunpack.c.l.b16 %v94
  %v429 = vunpack.c.l.b16 %v95
  %v430 = vunpack.c.l.b16 %v96
  %v431 = vunpack.c.l.b16 %v97
  %v432 = vunpack.c.l.b16 %v98
  %v433 = vunpack.c.l.b16 %v99
  %v434 = vunpack.c.l.b16 %v100
  %v435 = vunpack.c.l.b16 %v101
  %v436 = vunpack.c.l.b16 %v102
  %v437 = vunpack.c.l.b16 %v103
  %v438 = vunpack.c.l.b16 %v104
  %v439 = vunpack.c.l.b16 %v105
  %v440 = vunpack.c.l.b16 %v106
  %v441 = vunpack.c.l.b16 %v107
  %v442 = vunpack.c.l.b16 %v108
  %v443 = vunpack.c.l.b16 %v109
  %v444 = vunpack.c.l.b16 %v110
  %v445 = vunpack.c.l.b16 %v111
  %v446 = vunpack.c.l.b16 %v112
  %v447 = vunpack.c.l.b16 %v113
  %v448 = vunpack.c.l.b16 %v114
  %v449 = vunpack.c.l.b16 %v115
  %v450 = vunpack.c.l.b16 %v116
  %v451 = vunpack.c.l.b16 %v117
  %v452 = vunpack.c.l.b16 %v118
  %v453 = vunpack.c.l.b16 %v119
  %v454 = vunpack.c.l.b16 %v120
  %v455 = vunpack.c.l.b16 %v121
  %v456 = vunpack.c.l.b16 %v122
  %v457 = vunpack.c.l.b16 %v123
  %v458 = vunpack.c.l.b16 %v124
  %v459 = vunpack.c.l.b16 %v125
  %v460 = vunpack.c.l.b16 %v126
  %v461 = vunpack.c.l.b16 %v127
  %v462 = vunpack.c.l.b16 %v128
  %v463 = vunpack.c.l.b16 %v129
  %v464 = vunpack.c.l.b16 %v130
  %v465 = vunpack.c.l.b16 %v131
  %v466 = vunpack.c.l.b16 %v132
  %v467 = vunpack.c.l.b16 %v133
  %v468 = vunpack.c.l.b16 %v134
  %v469 = vunpack.c.l.b16 %v135
  %v470 = vunpack.c.l.b16 %v136
  %v471 = vunpack.c.l.b16 %v137
  %v472 = vunpack.c.l.b16 %v138
  %v473 = vunpack.c.l.b16 %v139
  %v474 = vunpack.c.l.b16 %v140
  %v475 = vunpack.c.l.b16 %v141
  %v476 = vunpack.c.l.b16 %v142
  %v477 = vunpack.c.l.b16 %v143
  %v478 = vunpack.c.l.b16 %v144
  %v479 = vunpack.c.l.b16 %v145
  %v480 = vunpack.c.l.b16 %v146
  %v481 = vunpack.c.l.b16 %v147
  %v482 = vunpack.c.l.b16 %v148
  %v483 = vunpack.c.l.b16 %v149
  %v484 = vunpack.c.l.b16 %v150
  %v485 = vunpack.c.l.b16 %v151
  %v486 = vunpack.c.l.b16 %v152
  %v487 = vunpack.c.l.b16 %v153
  %v488 = vunpack.c.l.b16 %v154
  %v489 = vunpack.c.l.b16 %v155
  %v490 = vunpack.c.l.b16 %v156
  %v491 = vunpack.c.l.b16 %v157
  %v492 = vunpack.c.l.b16 %v158
  %v493 = vunpack.c.l.b16 %v159
  %v494 = vunpack.c.l.b16 %v160
  %v495 = vunpack.c.l.b16 %v161
  %v496 = vunpack.c.l.b16 %v162
  %v497 = vunpack.c.l.b16 %v163
  %v498 = vunpack.c.l.b16 %v164
  %v499 = vunpack.c.l.b16 %v165
  %v500 = vunpack.c.l.b16 %v166
  %v501 = vunpack.c.l.b16 %v167
  %v502 = vunpack.c.l.b16 %v168
  %v503 = vunpack.c.l.b16 %v169
  %v504 = vunpack.c.l.b16 %v170
  %v505 = vunpack.c.l.b16 %v171
  %v506 = vunpack.c.l.b16 %v172
  %v507 = vunpack.c.l.b16 %v173
  %v508 = vunpack.c.l.b16 %v174
  %v509 = vunpack.c.l.b16 %v175
  %v510 = vunpack.c.l.b16 %v176
  %v511 = vunpack.c.l.b16 %v177
  %v512 = vunpack.c.l.b16 %v178
  %v513 = vunpack.c.l.b16 %v179
  %v514 = vunpack.c.l.b16 %v180
  %v515 = vunpack.c.l.b16 %v181
  %v516 = vunpack.c.l.b16 %v182
  %v517 = vunpack.c.l.b16 %v183
  %v518 = vpack.c.b16 %v375, %v374
  %v519 = vpack.c.b16 %v377, %v376
  %v520 = vpack.c.b16 %v379, %v378
  %v521 = vpack.c.b16 %v381, %v380
  %v522 = vpack.c.b16 %v383, %v382
  %v523 = vpack.c.b16 %v385, %v384
  %v524 = vpack.c.b16 %v387, %v386
  %v525 = vpack.c.b16 %v389, %v388
  %v526 = vpack.c.b16 %v391, %v390
  %v527 = vpack.c.b16 %v393, %v392
  %v528 = vpack.c.b16 %v395, %v394
  %v529 = vpack.c.b16 %v397, %v396
  %v530 = vpack.c.b16 %v399, %v398
  %v531 = vpack.c.b16 %v401, %v400
  %v532 = vpack.c.b16 %v403, %v402
  %v533 = vpack.c.b16 %v405, %v404
  %v534 = vpack.c.b16 %v407, %v406
  %v535 = vpack.c.b16 %v409, %v408
  %v536 = vpack.c.b16 %v411, %v410
  %v537 = vpack.c.b16 %v413, %v412
  %v538 = vpack.c.b16 %v415, %v414
  %v539 = vpack.c.b16 %v417, %v416
  %v540 = vpack.c.b16 %v419, %v418
  %v541 = vpack.c.b16 %v421, %v420
  %v542 = vpack.c.b16 %v423, %v422
  %v543 = vpack.c.b16 %v425, %v424
  %v544 = vpack.c.b16 %v427, %v426
  %v545 = vpack.c.b16 %v429, %v428
  %v546 = vpack.c.b16 %v431, %v430
  %v547 = vpack.c.b16 %v433, %v432
  %v548 = vpack.c.b16 %v435, %v434
  %v549 = vpack.c.b16 %v437, %v436
  %v550 = vpack.c.b16 %v439, %v438
  %v551 = vpack.c.b16 %v441, %v440
  %v552 = vpack.c.b16 %v443, %v442
  %v553 = vpack.c.b16 %v445, %v444
  %v554 = vpack.c.b16 %v447, %v446
  %v555 = vpack.c.b16 %v449, %v448
  %v556 = vpack.c.b16 %v451, %v450
  %v557 = vpack.c.b16 %v453, %v452
  %v558 = vpack.c.b16 %v455, %v454
  %v559 = vpack.c.b16 %v457, %v456
  %v560 = vpack.c.b16 %v459, %v458
  %v561 = vpack.c.b16 %v461, %v460
  %v562 = vpack.c.b16 %v463, %v462
  %v563 = vpack.c.b16 %v465, %v464
  %v564 = vpack.c.b16 %v467, %v466
  %v565 = vpack.c.b16 %v469, %v468
  %v566 = vpack.c.b16 %v471, %v470
  %v567 = vpack.c.b16 %v473, %v472
  %v568 = vpack.c.b16 %v475, %v474
  %v569 = vpack.c.b16 %v477, %v476
  %v570 = vpack.c.b16 %v479, %v478
  %v571 = vpack.c.b16 %v481, %v480
  %v572 = vpack.c.b16 %v483, %v482
  %v573 = vpack.c.b16 %v485, %v484
  %v574 = vpack.c.b16 %v487, %v486
  %v575 = vpack.c.b16 %v489, %v488
  %v576 = vpack.c.b16 %v491, %v490
  %v577 = vpack.c.b16 %v493, %v492
  %v578 = vpack.c.b16 %v495, %v494
  %v579 = vpack.c.b16 %v497, %v496
  %v580 = vpack.c.b16 %v499, %v498
  %v581 = vpack.c.b16 %v501, %v500
  %v582 = vpack.c.b16 %v503, %v502
  %v583 = vpack.c.b16 %v505, %v504
  %v584 = vpack.c.b16 %v507, %v506
  %v585 = vpack.c.b16 %v509, %v508
  %v586 = vpack.c.b16 %v511, %v510
  %v587 = vpack.c.b16 %v513, %v512
  %v588 = vpack.c.b16 %v515, %v514
  %v589 = vpack.c.b16 %v517, %v516
  %662 = vmatprep.subr.bf16.mxu0 0
  %663 = vmatpush1.bf16.msra.mxu0 %v518
  %664 = vmatprep.subr.bf16.mxu0 0
  %665 = vmatpush1.bf16.msra.mxu0 %v519
  %666 = vmatprep.subr.bf16.mxu0 0
  %667 = vmatpush1.bf16.msra.mxu0 %v520
  %668 = vmatprep.subr.bf16.mxu0 0
  %669 = vmatpush1.bf16.msra.mxu0 %v521
  %670 = vmatprep.subr.bf16.mxu0 0
  %671 = vmatpush1.bf16.msra.mxu0 %v522
  %672 = vmatprep.subr.bf16.mxu0 0
  %673 = vmatpush1.bf16.msra.mxu0 %v523
  %674 = vmatprep.subr.bf16.mxu0 0
  %675 = vmatpush1.bf16.msra.mxu0 %v524
  %676 = vmatprep.subr.bf16.mxu0 0
  %677 = vmatpush1.bf16.msra.mxu0 %v525
  %678 = vmatprep.subr.bf16.mxu0 0
  %679 = vmatpush1.bf16.msra.mxu0 %v526
  %680 = vmatprep.subr.bf16.mxu0 0
  %681 = vmatpush1.bf16.msra.mxu0 %v527
  %682 = vmatprep.subr.bf16.mxu0 0
  %683 = vmatpush1.bf16.msra.mxu0 %v528
  %684 = vmatprep.subr.bf16.mxu0 0
  %685 = vmatpush1.bf16.msra.mxu0 %v529
  %686 = vmatprep.subr.bf16.mxu0 0
  %687 = vmatpush1.bf16.msra.mxu0 %v530
  %688 = vmatprep.subr.bf16.mxu0 0
  %689 = vmatpush1.bf16.msra.mxu0 %v531
  %690 = vmatprep.subr.bf16.mxu0 0
  %691 = vmatpush1.bf16.msra.mxu0 %v532
  %692 = vmatprep.subr.bf16.mxu0 0
  %693 = vmatpush1.bf16.msra.mxu0 %v533
  %694 = vmatprep.mubr.bf16.mxu0 %v213
  %695 = vmatmul.mubr.bf16.gmra.mrb[0].mxu0 %v212
  %v696 = vpop.f32.mrb[0].mxu0
  %v697 = vadd.f32 0.0, %v696
  %v698 = vpop.f32.mrb[0].mxu0
  %v699 = vpop.f32.mrb[0].mxu0
  %v700 = vadd.f32 0.0, %v699
  %v701 = vpop.f32.mrb[0].mxu0
  %702 = vdwg.mxu0
  %703 = vmatprep.subr.bf16.mxu0 0
  %704 = vmatpush1.bf16.msra.mxu0 %v534
  %705 = vmatprep.subr.bf16.mxu0 0
  %706 = vmatpush1.bf16.msra.mxu0 %v535
  %707 = vmatprep.subr.bf16.mxu0 0
  %708 = vmatpush1.bf16.msra.mxu0 %v536
  %709 = vmatprep.subr.bf16.mxu0 0
  %710 = vmatpush1.bf16.msra.mxu0 %v537
  %711 = vmatprep.subr.bf16.mxu0 0
  %712 = vmatpush1.bf16.msra.mxu0 %v538
  %713 = vmatprep.subr.bf16.mxu0 0
  %714 = vmatpush1.bf16.msra.mxu0 %v539
  %715 = vmatprep.subr.bf16.mxu0 0
  %716 = vmatpush1.bf16.msra.mxu0 %v540
  %717 = vmatprep.subr.bf16.mxu0 0
  %718 = vmatpush1.bf16.msra.mxu0 %v541
  %719 = vmatprep.subr.bf16.mxu0 0
  %720 = vmatpush1.bf16.msra.mxu0 %v542
  %721 = vmatprep.subr.bf16.mxu0 0
  %722 = vmatpush1.bf16.msra.mxu0 %v543
  %723 = vmatprep.subr.bf16.mxu0 0
  %724 = vmatpush1.bf16.msra.mxu0 %v544
  %725 = vmatprep.subr.bf16.mxu0 0
  %726 = vmatpush1.bf16.msra.mxu0 %v545
  %727 = vmatprep.subr.bf16.mxu0 0
  %728 = vmatpush1.bf16.msra.mxu0 %v546
  %729 = vmatprep.subr.bf16.mxu0 0
  %730 = vmatpush1.bf16.msra.mxu0 %v547
  %731 = vmatprep.subr.bf16.mxu0 0
  %732 = vmatpush1.bf16.msra.mxu0 %v548
  %733 = vmatprep.subr.bf16.mxu0 0
  %734 = vmatpush1.bf16.msra.mxu0 %v549
  %735 = vmatprep.mubr.bf16.mxu0 %v215
  %736 = vmatmul.mubr.bf16.gmra.mrb[0].mxu0 %v214
  %v737 = vpop.f32.mrb[0].mxu0
  %v738 = vadd.f32 %v697, %v737
  %v739 = vpop.f32.mrb[0].mxu0
  %v740 = vpop.f32.mrb[0].mxu0
  %v741 = vadd.f32 %v700, %v740
  %v742 = vpop.f32.mrb[0].mxu0
  %743 = vdwg.mxu0
  %744 = vmatprep.subr.bf16.mxu0 0
  %745 = vmatpush1.bf16.msra.mxu0 %v550
  %746 = vmatprep.subr.bf16.mxu0 0
  %747 = vmatpush1.bf16.msra.mxu0 %v551
  %748 = vmatprep.subr.bf16.mxu0 0
  %749 = vmatpush1.bf16.msra.mxu0 %v552
  %750 = vmatprep.subr.bf16.mxu0 0
  %751 = vmatpush1.bf16.msra.mxu0 %v553
  %752 = vmatprep.subr.bf16.mxu0 0
  %753 = vmatpush1.bf16.msra.mxu0 %v554
  %754 = vmatprep.subr.bf16.mxu0 0
  %755 = vmatpush1.bf16.msra.mxu0 %v555
  %756 = vmatprep.subr.bf16.mxu0 0
  %757 = vmatpush1.bf16.msra.mxu0 %v556
  %758 = vmatprep.subr.bf16.mxu0 0
  %759 = vmatpush1.bf16.msra.mxu0 %v557
  %760 = vmatprep.subr.bf16.mxu0 0
  %761 = vmatpush1.bf16.msra.mxu0 %v558
  %762 = vmatprep.subr.bf16.mxu0 0
  %763 = vmatpush1.bf16.msra.mxu0 %v559
  %764 = vmatprep.subr.bf16.mxu0 0
  %765 = vmatpush1.bf16.msra.mxu0 %v560
  %766 = vmatprep.subr.bf16.mxu0 0
  %767 = vmatpush1.bf16.msra.mxu0 %v561
  %768 = vmatprep.subr.bf16.mxu0 0
  %769 = vmatpush1.bf16.msra.mxu0 %v562
  %770 = vmatprep.subr.bf16.mxu0 0
  %771 = vmatpush1.bf16.msra.mxu0 %v563
  %772 = vmatprep.subr.bf16.mxu0 0
  %773 = vmatpush1.bf16.msra.mxu0 %v564
  %774 = vmatprep.subr.bf16.mxu0 0
  %775 = vmatpush1.bf16.msra.mxu0 %v565
  %776 = vmatprep.mubr.bf16.mxu0 %v217
  %777 = vmatmul.mubr.bf16.gmra.mrb[0].mxu0 %v216
  %v778 = vpop.f32.mrb[0].mxu0
  %v779 = vadd.f32 %v738, %v778
  %v780 = vpop.f32.mrb[0].mxu0
  %v781 = vpop.f32.mrb[0].mxu0
  %v782 = vadd.f32 %v741, %v781
  %v783 = vpop.f32.mrb[0].mxu0
  %784 = vdwg.mxu0
  %785 = vmatprep.subr.bf16.mxu0 0
  %786 = vmatpush1.bf16.msra.mxu0 %v566
  %787 = vmatprep.subr.bf16.mxu0 0
  %788 = vmatpush1.bf16.msra.mxu0 %v567
  %789 = vmatprep.subr.bf16.mxu0 0
  %790 = vmatpush1.bf16.msra.mxu0 %v568
  %791 = vmatprep.subr.bf16.mxu0 0
  %792 = vmatpush1.bf16.msra.mxu0 %v569
  %793 = vmatprep.subr.bf16.mxu0 0
  %794 = vmatpush1.bf16.msra.mxu0 %v570
  %795 = vmatprep.subr.bf16.mxu0 0
  %796 = vmatpush1.bf16.msra.mxu0 %v571
  %797 = vmatprep.subr.bf16.mxu0 0
  %798 = vmatpush1.bf16.msra.mxu0 %v572
  %799 = vmatprep.subr.bf16.mxu0 0
  %800 = vmatpush1.bf16.msra.mxu0 %v573
  %801 = vmatprep.subr.bf16.mxu0 0
  %802 = vmatpush1.bf16.msra.mxu0 %v574
  %803 = vmatprep.subr.bf16.mxu0 0
  %804 = vmatpush1.bf16.msra.mxu0 %v575
  %805 = vmatprep.subr.bf16.mxu0 0
  %806 = vmatpush1.bf16.msra.mxu0 %v576
  %807 = vmatprep.subr.bf16.mxu0 0
  %808 = vmatpush1.bf16.msra.mxu0 %v577
  %809 = vmatprep.subr.bf16.mxu0 0
  %810 = vmatpush1.bf16.msra.mxu0 %v578
  %811 = vmatprep.subr.bf16.mxu0 0
  %812 = vmatpush1.bf16.msra.mxu0 %v579
  %813 = vmatprep.subr.bf16.mxu0 0
  %814 = vmatpush1.bf16.msra.mxu0 %v580
  %815 = vmatprep.subr.bf16.mxu0 0
  %816 = vmatpush1.bf16.msra.mxu0 %v581
  %817 = vmatprep.mubr.bf16.mxu0 %v219
  %818 = vmatmul.mubr.bf16.gmra.mrb[0].mxu0 %v218
  %v819 = vpop.f32.mrb[0].mxu0
  %v820 = vadd.f32 %v779, %v819
  %v821 = vpop.f32.mrb[0].mxu0
  %v822 = vpop.f32.mrb[0].mxu0
  %v823 = vadd.f32 %v782, %v822
  %v824 = vpop.f32.mrb[0].mxu0
  %825 = vdwg.mxu0
  %826 = vmatprep.subr.bf16.mxu0 0
  %827 = vmatpush1.bf16.msra.mxu0 %v582
  %828 = vmatprep.subr.bf16.mxu0 0
  %829 = vmatpush1.bf16.msra.mxu0 %v583
  %830 = vmatprep.subr.bf16.mxu0 0
  %831 = vmatpush1.bf16.msra.mxu0 %v584
  %832 = vmatprep.subr.bf16.mxu0 0
  %833 = vmatpush1.bf16.msra.mxu0 %v585
  %834 = vmatprep.subr.bf16.mxu0 0
  %835 = vmatpush1.bf16.msra.mxu0 %v586
  %836 = vmatprep.subr.bf16.mxu0 0
  %837 = vmatpush1.bf16.msra.mxu0 %v587
  %838 = vmatprep.subr.bf16.mxu0 0
  %839 = vmatpush1.bf16.msra.mxu0 %v588
  %840 = vmatprep.subr.bf16.mxu0 0
  %841 = vmatpush1.bf16.msra.mxu0 %v589
  %842 = vmatprep.subr.bf16.mxu0 0
  %843 = vmatpush1.bf16.msra.mxu0 0
  %844 = vmatprep.subr.bf16.mxu0 0
  %845 = vmatpush1.bf16.msra.mxu0 0
  %846 = vmatprep.subr.bf16.mxu0 0
  %847 = vmatpush1.bf16.msra.mxu0 0
  %848 = vmatprep.subr.bf16.mxu0 0
  %849 = vmatpush1.bf16.msra.mxu0 0
  %850 = vmatprep.subr.bf16.mxu0 0
  %851 = vmatpush1.bf16.msra.mxu0 0
  %852 = vmatprep.subr.bf16.mxu0 0
  %853 = vmatpush1.bf16.msra.mxu0 0
  %854 = vmatprep.subr.bf16.mxu0 0
  %855 = vmatpush1.bf16.msra.mxu0 0
  %856 = vmatprep.subr.bf16.mxu0 0
  %857 = vmatpush1.bf16.msra.mxu0 0
  %858 = vmatprep.mubr.bf16.mxu0 0
  %859 = vmatmul.mubr.bf16.gmra.mrb[0].mxu0 %v220
  %v860 = vpop.f32.mrb[0].mxu0
  %v861 = vadd.f32 %v820, %v860
  %v862 = vpop.f32.mrb[0].mxu0
  %v863 = vpop.f32.mrb[0].mxu0
  %v864 = vadd.f32 %v823, %v863
  %v865 = vpop.f32.mrb[0].mxu0
  %866 = vdwg.mxu0
  %v867 = vld [vmem:[%s2] sm:$0x1]
  %v869 = vlaneseq
  %v870 = vshrl.u32 %v869, 7
  %v871 = vsub.s32 0, %v870
  %v872 = vrot.slane %v867, %v871
  %v874 = vmul.f32 %v861, %v872
  %v875 = vmul.f32 %v864, %v872
  %v876 = vld [vmem:[%s3] sm:$0x1]
  %v878 = vlaneseq
  %v879 = vshrl.u32 %v878, 7
  %v880 = vsub.s32 0, %v879
  %v881 = vrot.slane %v876, %v880
  %v883 = vadd.f32 %v874, %v881
  %v884 = vadd.f32 %v875, %v881
  %v885 = vmax.f32 %v883, 0.0
  %v886 = vmax.f32 %v884, 0.0
  %v887 = vpack.c.bf16 %v886, %v885
  %v888 = vld [vmem:[%s4] sm:$0xff]
  %v889 = vld [vmem:[%s4 + $0x8] sm:$0xff]
  %v890 = vld [vmem:[%s4 + $0x10] sm:$0xff]
  %v891 = vld [vmem:[%s4 + $0x18] sm:$0xff]
  %v892 = vld [vmem:[%s4 + $0x20] sm:$0xff]
  %v893 = vld [vmem:[%s4 + $0x28] sm:$0xff]
  %v894 = vld [vmem:[%s4 + $0x30] sm:$0xff]
  %v895 = vld [vmem:[%s4 + $0x38] sm:$0xff]
  %v896 = vld [vmem:[%s4 + $0x40] sm:$0xff]
  %v897 = vld [vmem:[%s4 + $0x48] sm:$0xff]
  %v898 = vld [vmem:[%s4 + $0x50] sm:$0xff]
  %v899 = vld [vmem:[%s4 + $0x58] sm:$0xff]
  %v900 = vld [vmem:[%s4 + $0x60] sm:$0xff]
  %v901 = vld [vmem:[%s4 + $0x68] sm:$0xff]
  %v902 = vld [vmem:[%s4 + $0x70] sm:$0xff]
  %v903 = vld [vmem:[%s4 + $0x78] sm:$0xff]
  %v904 = vld [vmem:[%s4 + $0x80] sm:$0xff]
  %v905 = vld [vmem:[%s4 + $0x88] sm:$0xff]
  %v906 = vld [vmem:[%s4 + $0x90] sm:$0xff]
  %v907 = vld [vmem:[%s4 + $0x98] sm:$0xff]
  %v908 = vld [vmem:[%s4 + $0xa0] sm:$0xff]
  %v909 = vld [vmem:[%s4 + $0xa8] sm:$0xff]
  %v910 = vld [vmem:[%s4 + $0xb0] sm:$0xff]
  %v911 = vld [vmem:[%s4 + $0xb8] sm:$0xff]
  %v912 = vld [vmem:[%s4 + $0xc0] sm:$0xff]
  %v913 = vld [vmem:[%s4 + $0xc8] sm:$0xff]
  %v914 = vld [vmem:[%s4 + $0xd0] sm:$0xff]
  %v915 = vld [vmem:[%s4 + $0xd8] sm:$0xff]
  %v916 = vld [vmem:[%s4 + $0xe0] sm:$0xff]
  %v917 = vld [vmem:[%s4 + $0xe8] sm:$0xff]
  %v918 = vld [vmem:[%s4 + $0xf0] sm:$0xff]
  %v919 = vld [vmem:[%s4 + $0xf8] sm:$0xff]
  %v920 = vld [vmem:[%s4 + $0x100] sm:$0xff]
  %v921 = vld [vmem:[%s4 + $0x108] sm:$0xff]
  %v922 = vld [vmem:[%s4 + $0x110] sm:$0xff]
  %v923 = vld [vmem:[%s4 + $0x118] sm:$0xff]
  %v924 = vld [vmem:[%s4 + $0x120] sm:$0xff]
  %v925 = vld [vmem:[%s4 + $0x128] sm:$0xff]
  %v926 = vld [vmem:[%s4 + $0x130] sm:$0xff]
  %v927 = vld [vmem:[%s4 + $0x138] sm:$0xff]
  %v928 = vld [vmem:[%s4 + $0x140] sm:$0xff]
  %v929 = vld [vmem:[%s4 + $0x148] sm:$0xff]
  %v930 = vld [vmem:[%s4 + $0x150] sm:$0xff]
  %v931 = vld [vmem:[%s4 + $0x158] sm:$0xff]
  %v932 = vld [vmem:[%s4 + $0x160] sm:$0xff]
  %v933 = vld [vmem:[%s4 + $0x168] sm:$0xff]
  %v934 = vld [vmem:[%s4 + $0x170] sm:$0xff]
  %v935 = vld [vmem:[%s4 + $0x178] sm:$0xff]
  %v936 = vld [vmem:[%s4 + $0x180] sm:$0xff]
  %v937 = vld [vmem:[%s4 + $0x188] sm:$0xff]
  %v938 = vld [vmem:[%s4 + $0x190] sm:$0xff]
  %v939 = vld [vmem:[%s4 + $0x198] sm:$0xff]
  %v940 = vld [vmem:[%s4 + $0x1a0] sm:$0xff]
  %v941 = vld [vmem:[%s4 + $0x1a8] sm:$0xff]
  %v942 = vld [vmem:[%s4 + $0x1b0] sm:$0xff]
  %v943 = vld [vmem:[%s4 + $0x1b8] sm:$0xff]
  %v944 = vld [vmem:[%s4 + $0x1c0] sm:$0xff]
  %v945 = vld [vmem:[%s4 + $0x1c8] sm:$0xff]
  %v946 = vld [vmem:[%s4 + $0x1d0] sm:$0xff]
  %v947 = vld [vmem:[%s4 + $0x1d8] sm:$0xff]
  %v948 = vld [vmem:[%s4 + $0x1e0] sm:$0xff]
  %v949 = vld [vmem:[%s4 + $0x1e8] sm:$0xff]
  %v950 = vld [vmem:[%s4 + $0x1f0] sm:$0xff]
  %v951 = vld [vmem:[%s4 + $0x1f8] sm:$0xff]
  %v952 = vld [vmem:[%s5] sm:$0xff]
  %v954 = vlaneseq
  %v955 = vshrl.u32 %v954, 7
  %v956 = vsub.s32 0, %v955
  %v957 = vrot.slane %v952, %v956
  %v958 = vlaneseq
  %v959 = vshrl.u32 %v958, 7
  %v960 = vsub.s32 1, %v959
  %v961 = vrot.slane %v952, %v960
  %v962 = vlaneseq
  %v963 = vshrl.u32 %v962, 7
  %v964 = vsub.s32 2, %v963
  %v965 = vrot.slane %v952, %v964
  %v966 = vlaneseq
  %v967 = vshrl.u32 %v966, 7
  %v968 = vsub.s32 3, %v967
  %v969 = vrot.slane %v952, %v968
  %v970 = vlaneseq
  %v971 = vshrl.u32 %v970, 7
  %v972 = vsub.s32 4, %v971
  %v973 = vrot.slane %v952, %v972
  %v974 = vlaneseq
  %v975 = vshrl.u32 %v974, 7
  %v976 = vsub.s32 5, %v975
  %v977 = vrot.slane %v952, %v976
  %v978 = vlaneseq
  %v979 = vshrl.u32 %v978, 7
  %v980 = vsub.s32 6, %v979
  %v981 = vrot.slane %v952, %v980
  %v982 = vlaneseq
  %v983 = vshrl.u32 %v982, 7
  %v984 = vsub.s32 7, %v983
  %v985 = vrot.slane %v952, %v984
  %v1058 = vunpack.c.l.b16 %v888
  %v1059 = vunpack.c.h.b16 %v888
  %v1060 = vunpack.c.l.b16 %v889
  %v1061 = vunpack.c.h.b16 %v889
  %v1062 = vunpack.c.l.b16 %v890
  %v1063 = vunpack.c.h.b16 %v890
  %v1064 = vunpack.c.l.b16 %v891
  %v1065 = vunpack.c.h.b16 %v891
  %v1066 = vunpack.c.l.b16 %v892
  %v1067 = vunpack.c.h.b16 %v892
  %v1068 = vunpack.c.l.b16 %v893
  %v1069 = vunpack.c.h.b16 %v893
  %v1070 = vunpack.c.l.b16 %v894
  %v1071 = vunpack.c.h.b16 %v894
  %v1072 = vunpack.c.l.b16 %v895
  %v1073 = vunpack.c.h.b16 %v895
  %v1074 = vunpack.c.l.b16 %v896
  %v1075 = vunpack.c.h.b16 %v896
  %v1076 = vunpack.c.l.b16 %v897
  %v1077 = vunpack.c.h.b16 %v897
  %v1078 = vunpack.c.l.b16 %v898
  %v1079 = vunpack.c.h.b16 %v898
  %v1080 = vunpack.c.l.b16 %v899
  %v1081 = vunpack.c.h.b16 %v899
  %v1082 = vunpack.c.l.b16 %v900
  %v1083 = vunpack.c.h.b16 %v900
  %v1084 = vunpack.c.l.b16 %v901
  %v1085 = vunpack.c.h.b16 %v901
  %v1086 = vunpack.c.l.b16 %v902
  %v1087 = vunpack.c.h.b16 %v902
  %v1088 = vunpack.c.l.b16 %v903
  %v1089 = vunpack.c.h.b16 %v903
  %v1090 = vunpack.c.l.b16 %v904
  %v1091 = vunpack.c.h.b16 %v904
  %v1092 = vunpack.c.l.b16 %v905
  %v1093 = vunpack.c.h.b16 %v905
  %v1094 = vunpack.c.l.b16 %v906
  %v1095 = vunpack.c.h.b16 %v906
  %v1096 = vunpack.c.l.b16 %v907
  %v1097 = vunpack.c.h.b16 %v907
  %v1098 = vunpack.c.l.b16 %v908
  %v1099 = vunpack.c.h.b16 %v908
  %v1100 = vunpack.c.l.b16 %v909
  %v1101 = vunpack.c.h.b16 %v909
  %v1102 = vunpack.c.l.b16 %v910
  %v1103 = vunpack.c.h.b16 %v910
  %v1104 = vunpack.c.l.b16 %v911
  %v1105 = vunpack.c.h.b16 %v911
  %v1106 = vunpack.c.l.b16 %v912
  %v1107 = vunpack.c.h.b16 %v912
  %v1108 = vunpack.c.l.b16 %v913
  %v1109 = vunpack.c.h.b16 %v913
  %v1110 = vunpack.c.l.b16 %v914
  %v1111 = vunpack.c.h.b16 %v914
  %v1112 = vunpack.c.l.b16 %v915
  %v1113 = vunpack.c.h.b16 %v915
  %v1114 = vunpack.c.l.b16 %v916
  %v1115 = vunpack.c.h.b16 %v916
  %v1116 = vunpack.c.l.b16 %v917
  %v1117 = vunpack.c.h.b16 %v917
  %v1118 = vunpack.c.l.b16 %v918
  %v1119 = vunpack.c.h.b16 %v918
  %v1120 = vunpack.c.l.b16 %v919
  %v1121 = vunpack.c.h.b16 %v919
  %v1122 = vunpack.c.l.b16 %v920
  %v1123 = vunpack.c.h.b16 %v920
  %v1124 = vunpack.c.l.b16 %v921
  %v1125 = vunpack.c.h.b16 %v921
  %v1126 = vunpack.c.l.b16 %v922
  %v1127 = vunpack.c.h.b16 %v922
  %v1128 = vunpack.c.l.b16 %v923
  %v1129 = vunpack.c.h.b16 %v923
  %v1130 = vunpack.c.l.b16 %v924
  %v1131 = vunpack.c.h.b16 %v924
  %v1132 = vunpack.c.l.b16 %v925
  %v1133 = vunpack.c.h.b16 %v925
  %v1134 = vunpack.c.l.b16 %v926
  %v1135 = vunpack.c.h.b16 %v926
  %v1136 = vunpack.c.l.b16 %v927
  %v1137 = vunpack.c.h.b16 %v927
  %v1138 = vunpack.c.l.b16 %v928
  %v1139 = vunpack.c.h.b16 %v928
  %v1140 = vunpack.c.l.b16 %v929
  %v1141 = vunpack.c.h.b16 %v929
  %v1142 = vunpack.c.l.b16 %v930
  %v1143 = vunpack.c.h.b16 %v930
  %v1144 = vunpack.c.l.b16 %v931
  %v1145 = vunpack.c.h.b16 %v931
  %v1146 = vunpack.c.l.b16 %v932
  %v1147 = vunpack.c.h.b16 %v932
  %v1148 = vunpack.c.l.b16 %v933
  %v1149 = vunpack.c.h.b16 %v933
  %v1150 = vunpack.c.l.b16 %v934
  %v1151 = vunpack.c.h.b16 %v934
  %v1152 = vunpack.c.l.b16 %v935
  %v1153 = vunpack.c.h.b16 %v935
  %v1154 = vunpack.c.l.b16 %v936
  %v1155 = vunpack.c.h.b16 %v936
  %v1156 = vunpack.c.l.b16 %v937
  %v1157 = vunpack.c.h.b16 %v937
  %v1158 = vunpack.c.l.b16 %v938
  %v1159 = vunpack.c.h.b16 %v938
  %v1160 = vunpack.c.l.b16 %v939
  %v1161 = vunpack.c.h.b16 %v939
  %v1162 = vunpack.c.l.b16 %v940
  %v1163 = vunpack.c.h.b16 %v940
  %v1164 = vunpack.c.l.b16 %v941
  %v1165 = vunpack.c.h.b16 %v941
  %v1166 = vunpack.c.l.b16 %v942
  %v1167 = vunpack.c.h.b16 %v942
  %v1168 = vunpack.c.l.b16 %v943
  %v1169 = vunpack.c.h.b16 %v943
  %v1170 = vunpack.c.l.b16 %v944
  %v1171 = vunpack.c.h.b16 %v944
  %v1172 = vunpack.c.l.b16 %v945
  %v1173 = vunpack.c.h.b16 %v945
  %v1174 = vunpack.c.l.b16 %v946
  %v1175 = vunpack.c.h.b16 %v946
  %v1176 = vunpack.c.l.b16 %v947
  %v1177 = vunpack.c.h.b16 %v947
  %v1178 = vunpack.c.l.b16 %v948
  %v1179 = vunpack.c.h.b16 %v948
  %v1180 = vunpack.c.l.b16 %v949
  %v1181 = vunpack.c.h.b16 %v949
  %v1182 = vunpack.c.l.b16 %v950
  %v1183 = vunpack.c.h.b16 %v950
  %v1184 = vunpack.c.l.b16 %v951
  %v1185 = vunpack.c.h.b16 %v951
  %v1186 = vpack.c.b16 %v1066, %v1058
  %v1187 = vpack.c.b16 %v1067, %v1059
  %v1188 = vpack.c.b16 %v1068, %v1060
  %v1189 = vpack.c.b16 %v1069, %v1061
  %v1190 = vpack.c.b16 %v1070, %v1062
  %v1191 = vpack.c.b16 %v1071, %v1063
  %v1192 = vpack.c.b16 %v1072, %v1064
  %v1193 = vpack.c.b16 %v1073, %v1065
  %v1194 = vpack.c.b16 %v1082, %v1074
  %v1195 = vpack.c.b16 %v1083, %v1075
  %v1196 = vpack.c.b16 %v1084, %v1076
  %v1197 = vpack.c.b16 %v1085, %v1077
  %v1198 = vpack.c.b16 %v1086, %v1078
  %v1199 = vpack.c.b16 %v1087, %v1079
  %v1200 = vpack.c.b16 %v1088, %v1080
  %v1201 = vpack.c.b16 %v1089, %v1081
  %v1202 = vpack.c.b16 %v1098, %v1090
  %v1203 = vpack.c.b16 %v1099, %v1091
  %v1204 = vpack.c.b16 %v1100, %v1092
  %v1205 = vpack.c.b16 %v1101, %v1093
  %v1206 = vpack.c.b16 %v1102, %v1094
  %v1207 = vpack.c.b16 %v1103, %v1095
  %v1208 = vpack.c.b16 %v1104, %v1096
  %v1209 = vpack.c.b16 %v1105, %v1097
  %v1210 = vpack.c.b16 %v1114, %v1106
  %v1211 = vpack.c.b16 %v1115, %v1107
  %v1212 = vpack.c.b16 %v1116, %v1108
  %v1213 = vpack.c.b16 %v1117, %v1109
  %v1214 = vpack.c.b16 %v1118, %v1110
  %v1215 = vpack.c.b16 %v1119, %v1111
  %v1216 = vpack.c.b16 %v1120, %v1112
  %v1217 = vpack.c.b16 %v1121, %v1113
  %v1218 = vpack.c.b16 %v1130, %v1122
  %v1219 = vpack.c.b16 %v1131, %v1123
  %v1220 = vpack.c.b16 %v1132, %v1124
  %v1221 = vpack.c.b16 %v1133, %v1125
  %v1222 = vpack.c.b16 %v1134, %v1126
  %v1223 = vpack.c.b16 %v1135, %v1127
  %v1224 = vpack.c.b16 %v1136, %v1128
  %v1225 = vpack.c.b16 %v1137, %v1129
  %v1226 = vpack.c.b16 %v1146, %v1138
  %v1227 = vpack.c.b16 %v1147, %v1139
  %v1228 = vpack.c.b16 %v1148, %v1140
  %v1229 = vpack.c.b16 %v1149, %v1141
  %v1230 = vpack.c.b16 %v1150, %v1142
  %v1231 = vpack.c.b16 %v1151, %v1143
  %v1232 = vpack.c.b16 %v1152, %v1144
  %v1233 = vpack.c.b16 %v1153, %v1145
  %v1234 = vpack.c.b16 %v1162, %v1154
  %v1235 = vpack.c.b16 %v1163, %v1155
  %v1236 = vpack.c.b16 %v1164, %v1156
  %v1237 = vpack.c.b16 %v1165, %v1157
  %v1238 = vpack.c.b16 %v1166, %v1158
  %v1239 = vpack.c.b16 %v1167, %v1159
  %v1240 = vpack.c.b16 %v1168, %v1160
  %v1241 = vpack.c.b16 %v1169, %v1161
  %v1242 = vpack.c.b16 %v1178, %v1170
  %v1243 = vpack.c.b16 %v1179, %v1171
  %v1244 = vpack.c.b16 %v1180, %v1172
  %v1245 = vpack.c.b16 %v1181, %v1173
  %v1246 = vpack.c.b16 %v1182, %v1174
  %v1247 = vpack.c.b16 %v1183, %v1175
  %v1248 = vpack.c.b16 %v1184, %v1176
  %v1249 = vpack.c.b16 %v1185, %v1177
  %1314 = vmatprep.subr.bf16.mxu0 %v1187
  %1315 = vmatpush1.bf16.msra.mxu0 %v1186
  %1316 = vmatprep.subr.bf16.mxu0 %v1195
  %1317 = vmatpush1.bf16.msra.mxu0 %v1194
  %1318 = vmatprep.subr.bf16.mxu0 %v1203
  %1319 = vmatpush1.bf16.msra.mxu0 %v1202
  %1320 = vmatprep.subr.bf16.mxu0 %v1211
  %1321 = vmatpush1.bf16.msra.mxu0 %v1210
  %1322 = vmatprep.subr.bf16.mxu0 %v1219
  %1323 = vmatpush1.bf16.msra.mxu0 %v1218
  %1324 = vmatprep.subr.bf16.mxu0 %v1227
  %1325 = vmatpush1.bf16.msra.mxu0 %v1226
  %1326 = vmatprep.subr.bf16.mxu0 %v1235
  %1327 = vmatpush1.bf16.msra.mxu0 %v1234
  %1328 = vmatprep.subr.bf16.mxu0 %v1243
  %1329 = vmatpush1.bf16.msra.mxu0 %v1242
  %1330 = vmatprep.subr.bf16.mxu0 0
  %1331 = vmatpush1.bf16.msra.mxu0 0
  %1332 = vmatprep.subr.bf16.mxu0 0
  %1333 = vmatpush1.bf16.msra.mxu0 0
  %1334 = vmatprep.subr.bf16.mxu0 0
  %1335 = vmatpush1.bf16.msra.mxu0 0
  %1336 = vmatprep.subr.bf16.mxu0 0
  %1337 = vmatpush1.bf16.msra.mxu0 0
  %1338 = vmatprep.subr.bf16.mxu0 0
  %1339 = vmatpush1.bf16.msra.mxu0 0
  %1340 = vmatprep.subr.bf16.mxu0 0
  %1341 = vmatpush1.bf16.msra.mxu0 0
  %1342 = vmatprep.subr.bf16.mxu0 0
  %1343 = vmatpush1.bf16.msra.mxu0 0
  %1344 = vmatprep.subr.bf16.mxu0 0
  %1345 = vmatpush1.bf16.msra.mxu0 0
  %1346 = vmatprep.mubr.bf16.mxu0 0
  %1347 = vmatmul.mubr.bf16.gmra.mrb[0].mxu0 %v887
  %v1348 = vpop.f32.mrb[0].mxu0
  %v1349 = vadd.f32 %v957, %v1348
  %v1350 = vpop.f32.mrb[0].mxu0
  %v1351 = vadd.f32 %v961, %v1350
  %v1352 = vpop.f32.mrb[0].mxu0
  %v1353 = vadd.f32 %v957, %v1352
  %v1354 = vpop.f32.mrb[0].mxu0
  %v1355 = vadd.f32 %v961, %v1354
  %1356 = vdwg.mxu0
  %1357 = vmatprep.subr.bf16.mxu0 %v1189
  %1358 = vmatpush1.bf16.msra.mxu0 %v1188
  %1359 = vmatprep.subr.bf16.mxu0 %v1197
  %1360 = vmatpush1.bf16.msra.mxu0 %v1196
  %1361 = vmatprep.subr.bf16.mxu0 %v1205
  %1362 = vmatpush1.bf16.msra.mxu0 %v1204
  %1363 = vmatprep.subr.bf16.mxu0 %v1213
  %1364 = vmatpush1.bf16.msra.mxu0 %v1212
  %1365 = vmatprep.subr.bf16.mxu0 %v1221
  %1366 = vmatpush1.bf16.msra.mxu0 %v1220
  %1367 = vmatprep.subr.bf16.mxu0 %v1229
  %1368 = vmatpush1.bf16.msra.mxu0 %v1228
  %1369 = vmatprep.subr.bf16.mxu0 %v1237
  %1370 = vmatpush1.bf16.msra.mxu0 %v1236
  %1371 = vmatprep.subr.bf16.mxu0 %v1245
  %1372 = vmatpush1.bf16.msra.mxu0 %v1244
  %1373 = vmatprep.subr.bf16.mxu0 0
  %1374 = vmatpush1.bf16.msra.mxu0 0
  %1375 = vmatprep.subr.bf16.mxu0 0
  %1376 = vmatpush1.bf16.msra.mxu0 0
  %1377 = vmatprep.subr.bf16.mxu0 0
  %1378 = vmatpush1.bf16.msra.mxu0 0
  %1379 = vmatprep.subr.bf16.mxu0 0
  %1380 = vmatpush1.bf16.msra.mxu0 0
  %1381 = vmatprep.subr.bf16.mxu0 0
  %1382 = vmatpush1.bf16.msra.mxu0 0
  %1383 = vmatprep.subr.bf16.mxu0 0
  %1384 = vmatpush1.bf16.msra.mxu0 0
  %1385 = vmatprep.subr.bf16.mxu0 0
  %1386 = vmatpush1.bf16.msra.mxu0 0
  %1387 = vmatprep.subr.bf16.mxu0 0
  %1388 = vmatpush1.bf16.msra.mxu0 0
  %1389 = vmatprep.mubr.bf16.mxu0 0
  %1390 = vmatmul.mubr.bf16.gmra.mrb[0].mxu0 %v887
  %v1391 = vpop.f32.mrb[0].mxu0
  %v1392 = vadd.f32 %v965, %v1391
  %v1393 = vpop.f32.mrb[0].mxu0
  %v1394 = vadd.f32 %v969, %v1393
  %v1395 = vpop.f32.mrb[0].mxu0
  %v1396 = vadd.f32 %v965, %v1395
  %v1397 = vpop.f32.mrb[0].mxu0
  %v1398 = vadd.f32 %v969, %v1397
  %1399 = vdwg.mxu0
  %1400 = vmatprep.subr.bf16.mxu0 %v1191
  %1401 = vmatpush1.bf16.msra.mxu0 %v1190
  %1402 = vmatprep.subr.bf16.mxu0 %v1199
  %1403 = vmatpush1.bf16.msra.mxu0 %v1198
  %1404 = vmatprep.subr.bf16.mxu0 %v1207
  %1405 = vmatpush1.bf16.msra.mxu0 %v1206
  %1406 = vmatprep.subr.bf16.mxu0 %v1215
  %1407 = vmatpush1.bf16.msra.mxu0 %v1214
  %1408 = vmatprep.subr.bf16.mxu0 %v1223
  %1409 = vmatpush1.bf16.msra.mxu0 %v1222
  %1410 = vmatprep.subr.bf16.mxu0 %v1231
  %1411 = vmatpush1.bf16.msra.mxu0 %v1230
  %1412 = vmatprep.subr.bf16.mxu0 %v1239
  %1413 = vmatpush1.bf16.msra.mxu0 %v1238
  %1414 = vmatprep.subr.bf16.mxu0 %v1247
  %1415 = vmatpush1.bf16.msra.mxu0 %v1246
  %1416 = vmatprep.subr.bf16.mxu0 0
  %1417 = vmatpush1.bf16.msra.mxu0 0
  %1418 = vmatprep.subr.bf16.mxu0 0
  %1419 = vmatpush1.bf16.msra.mxu0 0
  %1420 = vmatprep.subr.bf16.mxu0 0
  %1421 = vmatpush1.bf16.msra.mxu0 0
  %1422 = vmatprep.subr.bf16.mxu0 0
  %1423 = vmatpush1.bf16.msra.mxu0 0
  %1424 = vmatprep.subr.bf16.mxu0 0
  %1425 = vmatpush1.bf16.msra.mxu0 0
  %1426 = vmatprep.subr.bf16.mxu0 0
  %1427 = vmatpush1.bf16.msra.mxu0 0
  %1428 = vmatprep.subr.bf16.mxu0 0
  %1429 = vmatpush1.bf16.msra.mxu0 0
  %1430 = vmatprep.subr.bf16.mxu0 0
  %1431 = vmatpush1.bf16.msra.mxu0 0
  %1432 = vmatprep.mubr.bf16.mxu0 0
  %1433 = vmatmul.mubr.bf16.gmra.mrb[0].mxu0 %v887
  %v1434 = vpop.f32.mrb[0].mxu0
  %v1435 = vadd.f32 %v973, %v1434
  %v1436 = vpop.f32.mrb[0].mxu0
  %v1437 = vadd.f32 %v977, %v1436
  %v1438 = vpop.f32.mrb[0].mxu0
  %v1439 = vadd.f32 %v973, %v1438
  %v1440 = vpop.f32.mrb[0].mxu0
  %v1441 = vadd.f32 %v977, %v1440
  %1442 = vdwg.mxu0
  %1443 = vmatprep.subr.bf16.mxu0 %v1193
  %1444 = vmatpush1.bf16.msra.mxu0 %v1192
  %1445 = vmatprep.subr.bf16.mxu0 %v1201
  %1446 = vmatpush1.bf16.msra.mxu0 %v1200
  %1447 = vmatprep.subr.bf16.mxu0 %v1209
  %1448 = vmatpush1.bf16.msra.mxu0 %v1208
  %1449 = vmatprep.subr.bf16.mxu0 %v1217
  %1450 = vmatpush1.bf16.msra.mxu0 %v1216
  %1451 = vmatprep.subr.bf16.mxu0 %v1225
  %1452 = vmatpush1.bf16.msra.mxu0 %v1224
  %1453 = vmatprep.subr.bf16.mxu0 %v1233
  %1454 = vmatpush1.bf16.msra.mxu0 %v1232
  %1455 = vmatprep.subr.bf16.mxu0 %v1241
  %1456 = vmatpush1.bf16.msra.mxu0 %v1240
  %1457 = vmatprep.subr.bf16.mxu0 %v1249
  %1458 = vmatpush1.bf16.msra.mxu0 %v1248
  %1459 = vmatprep.subr.bf16.mxu0 0
  %1460 = vmatpush1.bf16.msra.mxu0 0
  %1461 = vmatprep.subr.bf16.mxu0 0
  %1462 = vmatpush1.bf16.msra.mxu0 0
  %1463 = vmatprep.subr.bf16.mxu0 0
  %1464 = vmatpush1.bf16.msra.mxu0 0
  %1465 = vmatprep.subr.bf16.mxu0 0
  %1466 = vmatpush1.bf16.msra.mxu0 0
  %1467 = vmatprep.subr.bf16.mxu0 0
  %1468 = vmatpush1.bf16.msra.mxu0 0
  %1469 = vmatprep.subr.bf16.mxu0 0
  %1470 = vmatpush1.bf16.msra.mxu0 0
  %1471 = vmatprep.subr.bf16.mxu0 0
  %1472 = vmatpush1.bf16.msra.mxu0 0
  %1473 = vmatprep.subr.bf16.mxu0 0
  %1474 = vmatpush1.bf16.msra.mxu0 0
  %1475 = vmatprep.mubr.bf16.mxu0 0
  %1476 = vmatmul.mubr.bf16.gmra.mrb[0].mxu0 %v887
  %v1477 = vpop.f32.mrb[0].mxu0
  %v1478 = vadd.f32 %v981, %v1477
  %v1479 = vpop.f32.mrb[0].mxu0
  %v1480 = vadd.f32 %v985, %v1479
  %v1481 = vpop.f32.mrb[0].mxu0
  %v1482 = vadd.f32 %v981, %v1481
  %v1483 = vpop.f32.mrb[0].mxu0
  %v1484 = vadd.f32 %v985, %v1483
  %1485 = vdwg.mxu0
  %v1486 = vmax.f32 %v1349, 0.0
  %v1487 = vmax.f32 %v1351, 0.0
  %v1488 = vmax.f32 %v1392, 0.0
  %v1489 = vmax.f32 %v1394, 0.0
  %v1490 = vmax.f32 %v1435, 0.0
  %v1491 = vmax.f32 %v1437, 0.0
  %v1492 = vmax.f32 %v1478, 0.0
  %v1493 = vmax.f32 %v1480, 0.0
  %v1494 = vmax.f32 %v1353, 0.0
  %v1495 = vmax.f32 %v1355, 0.0
  %v1496 = vmax.f32 %v1396, 0.0
  %v1497 = vmax.f32 %v1398, 0.0
  %v1498 = vmax.f32 %v1439, 0.0
  %v1499 = vmax.f32 %v1441, 0.0
  %v1500 = vmax.f32 %v1482, 0.0
  %v1501 = vmax.f32 %v1484, 0.0
  %v1502 = vpack.c.bf16 %v1494, %v1486
  %v1503 = vpack.c.bf16 %v1495, %v1487
  %v1504 = vpack.c.bf16 %v1496, %v1488
  %v1505 = vpack.c.bf16 %v1497, %v1489
  %v1506 = vpack.c.bf16 %v1498, %v1490
  %v1507 = vpack.c.bf16 %v1499, %v1491
  %v1508 = vpack.c.bf16 %v1500, %v1492
  %v1509 = vpack.c.bf16 %v1501, %v1493
  %v1510 = vld [vmem:[%s6] sm:$0xf]
  %v1511 = vld [vmem:[%s6 + $0x4] sm:$0xf]
  %v1512 = vld [vmem:[%s6 + $0x8] sm:$0xf]
  %v1513 = vld [vmem:[%s6 + $0xc] sm:$0xf]
  %v1514 = vld [vmem:[%s6 + $0x10] sm:$0xf]
  %v1515 = vld [vmem:[%s6 + $0x14] sm:$0xf]
  %v1516 = vld [vmem:[%s6 + $0x18] sm:$0xf]
  %v1517 = vld [vmem:[%s6 + $0x1c] sm:$0xf]
  %v1518 = vld [vmem:[%s6 + $0x20] sm:$0xf]
  %v1519 = vld [vmem:[%s6 + $0x24] sm:$0xf]
  %v1520 = vld [vmem:[%s6 + $0x28] sm:$0xf]
  %v1521 = vld [vmem:[%s6 + $0x2c] sm:$0xf]
  %v1522 = vld [vmem:[%s6 + $0x30] sm:$0xf]
  %v1523 = vld [vmem:[%s6 + $0x34] sm:$0xf]
  %v1524 = vld [vmem:[%s6 + $0x38] sm:$0xf]
  %v1525 = vld [vmem:[%s6 + $0x3c] sm:$0xf]
  %v1526 = vld [vmem:[%s6 + $0x40] sm:$0xf]
  %v1527 = vld [vmem:[%s6 + $0x44] sm:$0xf]
  %v1528 = vld [vmem:[%s6 + $0x48] sm:$0xf]
  %v1529 = vld [vmem:[%s6 + $0x4c] sm:$0xf]
  %v1530 = vld [vmem:[%s6 + $0x50] sm:$0xf]
  %v1531 = vld [vmem:[%s6 + $0x54] sm:$0xf]
  %v1532 = vld [vmem:[%s6 + $0x58] sm:$0xf]
  %v1533 = vld [vmem:[%s6 + $0x5c] sm:$0xf]
  %v1534 = vld [vmem:[%s6 + $0x60] sm:$0xf]
  %v1535 = vld [vmem:[%s6 + $0x64] sm:$0xf]
  %v1536 = vld [vmem:[%s6 + $0x68] sm:$0xf]
  %v1537 = vld [vmem:[%s6 + $0x6c] sm:$0xf]
  %v1538 = vld [vmem:[%s6 + $0x70] sm:$0xf]
  %v1539 = vld [vmem:[%s6 + $0x74] sm:$0xf]
  %v1540 = vld [vmem:[%s6 + $0x78] sm:$0xf]
  %v1541 = vld [vmem:[%s6 + $0x7c] sm:$0xf]
  %v1542 = vld [vmem:[%s6 + $0x80] sm:$0xf]
  %v1543 = vld [vmem:[%s6 + $0x84] sm:$0xf]
  %v1544 = vld [vmem:[%s6 + $0x88] sm:$0xf]
  %v1545 = vld [vmem:[%s6 + $0x8c] sm:$0xf]
  %v1546 = vld [vmem:[%s6 + $0x90] sm:$0xf]
  %v1547 = vld [vmem:[%s6 + $0x94] sm:$0xf]
  %v1548 = vld [vmem:[%s6 + $0x98] sm:$0xf]
  %v1549 = vld [vmem:[%s6 + $0x9c] sm:$0xf]
  %v1550 = vld [vmem:[%s6 + $0xa0] sm:$0xf]
  %v1551 = vld [vmem:[%s6 + $0xa4] sm:$0xf]
  %v1552 = vld [vmem:[%s6 + $0xa8] sm:$0xf]
  %v1553 = vld [vmem:[%s6 + $0xac] sm:$0xf]
  %v1554 = vld [vmem:[%s6 + $0xb0] sm:$0xf]
  %v1555 = vld [vmem:[%s6 + $0xb4] sm:$0xf]
  %v1556 = vld [vmem:[%s6 + $0xb8] sm:$0xf]
  %v1557 = vld [vmem:[%s6 + $0xbc] sm:$0xf]
  %v1558 = vld [vmem:[%s6 + $0xc0] sm:$0xf]
  %v1559 = vld [vmem:[%s6 + $0xc4] sm:$0xf]
  %v1560 = vld [vmem:[%s6 + $0xc8] sm:$0xf]
  %v1561 = vld [vmem:[%s6 + $0xcc] sm:$0xf]
  %v1562 = vld [vmem:[%s6 + $0xd0] sm:$0xf]
  %v1563 = vld [vmem:[%s6 + $0xd4] sm:$0xf]
  %v1564 = vld [vmem:[%s6 + $0xd8] sm:$0xf]
  %v1565 = vld [vmem:[%s6 + $0xdc] sm:$0xf]
  %v1566 = vld [vmem:[%s6 + $0xe0] sm:$0xf]
  %v1567 = vld [vmem:[%s6 + $0xe4] sm:$0xf]
  %v1568 = vld [vmem:[%s6 + $0xe8] sm:$0xf]
  %v1569 = vld [vmem:[%s6 + $0xec] sm:$0xf]
  %v1570 = vld [vmem:[%s6 + $0xf0] sm:$0xf]
  %v1571 = vld [vmem:[%s6 + $0xf4] sm:$0xf]
  %v1572 = vld [vmem:[%s6 + $0xf8] sm:$0xf]
  %v1573 = vld [vmem:[%s6 + $0xfc] sm:$0xf]
  %v1574 = vld [vmem:[%s6 + $0x100] sm:$0xf]
  %v1575 = vld [vmem:[%s6 + $0x104] sm:$0xf]
  %v1576 = vld [vmem:[%s6 + $0x108] sm:$0xf]
  %v1577 = vld [vmem:[%s6 + $0x10c] sm:$0xf]
  %v1578 = vld [vmem:[%s6 + $0x110] sm:$0xf]
  %v1579 = vld [vmem:[%s6 + $0x114] sm:$0xf]
  %v1580 = vld [vmem:[%s6 + $0x118] sm:$0xf]
  %v1581 = vld [vmem:[%s6 + $0x11c] sm:$0xf]
  %v1582 = vld [vmem:[%s6 + $0x120] sm:$0xf]
  %v1583 = vld [vmem:[%s6 + $0x124] sm:$0xf]
  %v1584 = vld [vmem:[%s6 + $0x128] sm:$0xf]
  %v1585 = vld [vmem:[%s6 + $0x12c] sm:$0xf]
  %v1586 = vld [vmem:[%s6 + $0x130] sm:$0xf]
  %v1587 = vld [vmem:[%s6 + $0x134] sm:$0xf]
  %v1588 = vld [vmem:[%s6 + $0x138] sm:$0xf]
  %v1589 = vld [vmem:[%s6 + $0x13c] sm:$0xf]
  %v1590 = vld [vmem:[%s6 + $0x140] sm:$0xf]
  %v1591 = vld [vmem:[%s6 + $0x144] sm:$0xf]
  %v1592 = vld [vmem:[%s6 + $0x148] sm:$0xf]
  %v1593 = vld [vmem:[%s6 + $0x14c] sm:$0xf]
  %v1594 = vld [vmem:[%s6 + $0x150] sm:$0xf]
  %v1595 = vld [vmem:[%s6 + $0x154] sm:$0xf]
  %v1596 = vld [vmem:[%s6 + $0x158] sm:$0xf]
  %v1597 = vld [vmem:[%s6 + $0x15c] sm:$0xf]
  %v1598 = vld [vmem:[%s6 + $0x160] sm:$0xf]
  %v1599 = vld [vmem:[%s6 + $0x164] sm:$0xf]
  %v1600 = vld [vmem:[%s6 + $0x168] sm:$0xf]
  %v1601 = vld [vmem:[%s6 + $0x16c] sm:$0xf]
  %v1602 = vld [vmem:[%s6 + $0x170] sm:$0xf]
  %v1603 = vld [vmem:[%s6 + $0x174] sm:$0xf]
  %v1604 = vld [vmem:[%s6 + $0x178] sm:$0xf]
  %v1605 = vld [vmem:[%s6 + $0x17c] sm:$0xf]
  %v1606 = vld [vmem:[%s6 + $0x180] sm:$0xf]
  %v1607 = vld [vmem:[%s6 + $0x184] sm:$0xf]
  %v1608 = vld [vmem:[%s6 + $0x188] sm:$0xf]
  %v1609 = vld [vmem:[%s6 + $0x18c] sm:$0xf]
  %v1610 = vld [vmem:[%s6 + $0x190] sm:$0xf]
  %v1611 = vld [vmem:[%s6 + $0x194] sm:$0xf]
  %v1612 = vld [vmem:[%s6 + $0x198] sm:$0xf]
  %v1613 = vld [vmem:[%s6 + $0x19c] sm:$0xf]
  %v1614 = vld [vmem:[%s6 + $0x1a0] sm:$0xf]
  %v1615 = vld [vmem:[%s6 + $0x1a4] sm:$0xf]
  %v1616 = vld [vmem:[%s6 + $0x1a8] sm:$0xf]
  %v1617 = vld [vmem:[%s6 + $0x1ac] sm:$0xf]
  %v1618 = vld [vmem:[%s6 + $0x1b0] sm:$0xf]
  %v1619 = vld [vmem:[%s6 + $0x1b4] sm:$0xf]
  %v1620 = vld [vmem:[%s6 + $0x1b8] sm:$0xf]
  %v1621 = vld [vmem:[%s6 + $0x1bc] sm:$0xf]
  %v1622 = vld [vmem:[%s6 + $0x1c0] sm:$0xf]
  %v1623 = vld [vmem:[%s6 + $0x1c4] sm:$0xf]
  %v1624 = vld [vmem:[%s6 + $0x1c8] sm:$0xf]
  %v1625 = vld [vmem:[%s6 + $0x1cc] sm:$0xf]
  %v1626 = vld [vmem:[%s6 + $0x1d0] sm:$0xf]
  %v1627 = vld [vmem:[%s6 + $0x1d4] sm:$0xf]
  %v1628 = vld [vmem:[%s6 + $0x1d8] sm:$0xf]
  %v1629 = vld [vmem:[%s6 + $0x1dc] sm:$0xf]
  %v1630 = vld [vmem:[%s6 + $0x1e0] sm:$0xf]
  %v1631 = vld [vmem:[%s6 + $0x1e4] sm:$0xf]
  %v1632 = vld [vmem:[%s6 + $0x1e8] sm:$0xf]
  %v1633 = vld [vmem:[%s6 + $0x1ec] sm:$0xf]
  %v1634 = vld [vmem:[%s6 + $0x1f0] sm:$0xf]
  %v1635 = vld [vmem:[%s6 + $0x1f4] sm:$0xf]
  %v1636 = vld [vmem:[%s6 + $0x1f8] sm:$0xf]
  %v1637 = vld [vmem:[%s6 + $0x1fc] sm:$0xf]
  %v1638 = vld [vmem:[%s7] sm:$0x1]
  %v1640 = vlaneseq
  %v1641 = vshrl.u32 %v1640, 7
  %v1642 = vsub.s32 0, %v1641
  %v1643 = vrot.slane %v1638, %v1642
  %v1773 = vunpack.c.l.b16 %v1510
  %v1774 = vunpack.c.l.b16 %v1511
  %v1775 = vunpack.c.l.b16 %v1512
  %v1776 = vunpack.c.l.b16 %v1513
  %v1777 = vunpack.c.l.b16 %v1514
  %v1778 = vunpack.c.l.b16 %v1515
  %v1779 = vunpack.c.l.b16 %v1516
  %v1780 = vunpack.c.l.b16 %v1517
  %v1781 = vunpack.c.l.b16 %v1518
  %v1782 = vunpack.c.l.b16 %v1519
  %v1783 = vunpack.c.l.b16 %v1520
  %v1784 = vunpack.c.l.b16 %v1521
  %v1785 = vunpack.c.l.b16 %v1522
  %v1786 = vunpack.c.l.b16 %v1523
  %v1787 = vunpack.c.l.b16 %v1524
  %v1788 = vunpack.c.l.b16 %v1525
  %v1789 = vunpack.c.l.b16 %v1526
  %v1790 = vunpack.c.l.b16 %v1527
  %v1791 = vunpack.c.l.b16 %v1528
  %v1792 = vunpack.c.l.b16 %v1529
  %v1793 = vunpack.c.l.b16 %v1530
  %v1794 = vunpack.c.l.b16 %v1531
  %v1795 = vunpack.c.l.b16 %v1532
  %v1796 = vunpack.c.l.b16 %v1533
  %v1797 = vunpack.c.l.b16 %v1534
  %v1798 = vunpack.c.l.b16 %v1535
  %v1799 = vunpack.c.l.b16 %v1536
  %v1800 = vunpack.c.l.b16 %v1537
  %v1801 = vunpack.c.l.b16 %v1538
  %v1802 = vunpack.c.l.b16 %v1539
  %v1803 = vunpack.c.l.b16 %v1540
  %v1804 = vunpack.c.l.b16 %v1541
  %v1805 = vunpack.c.l.b16 %v1542
  %v1806 = vunpack.c.l.b16 %v1543
  %v1807 = vunpack.c.l.b16 %v1544
  %v1808 = vunpack.c.l.b16 %v1545
  %v1809 = vunpack.c.l.b16 %v1546
  %v1810 = vunpack.c.l.b16 %v1547
  %v1811 = vunpack.c.l.b16 %v1548
  %v1812 = vunpack.c.l.b16 %v1549
  %v1813 = vunpack.c.l.b16 %v1550
  %v1814 = vunpack.c.l.b16 %v1551
  %v1815 = vunpack.c.l.b16 %v1552
  %v1816 = vunpack.c.l.b16 %v1553
  %v1817 = vunpack.c.l.b16 %v1554
  %v1818 = vunpack.c.l.b16 %v1555
  %v1819 = vunpack.c.l.b16 %v1556
  %v1820 = vunpack.c.l.b16 %v1557
  %v1821 = vunpack.c.l.b16 %v1558
  %v1822 = vunpack.c.l.b16 %v1559
  %v1823 = vunpack.c.l.b16 %v1560
  %v1824 = vunpack.c.l.b16 %v1561
  %v1825 = vunpack.c.l.b16 %v1562
  %v1826 = vunpack.c.l.b16 %v1563
  %v1827 = vunpack.c.l.b16 %v1564
  %v1828 = vunpack.c.l.b16 %v1565
  %v1829 = vunpack.c.l.b16 %v1566
  %v1830 = vunpack.c.l.b16 %v1567
  %v1831 = vunpack.c.l.b16 %v1568
  %v1832 = vunpack.c.l.b16 %v1569
  %v1833 = vunpack.c.l.b16 %v1570
  %v1834 = vunpack.c.l.b16 %v1571
  %v1835 = vunpack.c.l.b16 %v1572
  %v1836 = vunpack.c.l.b16 %v1573
  %v1837 = vunpack.c.l.b16 %v1574
  %v1838 = vunpack.c.l.b16 %v1575
  %v1839 = vunpack.c.l.b16 %v1576
  %v1840 = vunpack.c.l.b16 %v1577
  %v1841 = vunpack.c.l.b16 %v1578
  %v1842 = vunpack.c.l.b16 %v1579
  %v1843 = vunpack.c.l.b16 %v1580
  %v1844 = vunpack.c.l.b16 %v1581
  %v1845 = vunpack.c.l.b16 %v1582
  %v1846 = vunpack.c.l.b16 %v1583
  %v1847 = vunpack.c.l.b16 %v1584
  %v1848 = vunpack.c.l.b16 %v1585
  %v1849 = vunpack.c.l.b16 %v1586
  %v1850 = vunpack.c.l.b16 %v1587
  %v1851 = vunpack.c.l.b16 %v1588
  %v1852 = vunpack.c.l.b16 %v1589
  %v1853 = vunpack.c.l.b16 %v1590
  %v1854 = vunpack.c.l.b16 %v1591
  %v1855 = vunpack.c.l.b16 %v1592
  %v1856 = vunpack.c.l.b16 %v1593
  %v1857 = vunpack.c.l.b16 %v1594
  %v1858 = vunpack.c.l.b16 %v1595
  %v1859 = vunpack.c.l.b16 %v1596
  %v1860 = vunpack.c.l.b16 %v1597
  %v1861 = vunpack.c.l.b16 %v1598
  %v1862 = vunpack.c.l.b16 %v1599
  %v1863 = vunpack.c.l.b16 %v1600
  %v1864 = vunpack.c.l.b16 %v1601
  %v1865 = vunpack.c.l.b16 %v1602
  %v1866 = vunpack.c.l.b16 %v1603
  %v1867 = vunpack.c.l.b16 %v1604
  %v1868 = vunpack.c.l.b16 %v1605
  %v1869 = vunpack.c.l.b16 %v1606
  %v1870 = vunpack.c.l.b16 %v1607
  %v1871 = vunpack.c.l.b16 %v1608
  %v1872 = vunpack.c.l.b16 %v1609
  %v1873 = vunpack.c.l.b16 %v1610
  %v1874 = vunpack.c.l.b16 %v1611
  %v1875 = vunpack.c.l.b16 %v1612
  %v1876 = vunpack.c.l.b16 %v1613
  %v1877 = vunpack.c.l.b16 %v1614
  %v1878 = vunpack.c.l.b16 %v1615
  %v1879 = vunpack.c.l.b16 %v1616
  %v1880 = vunpack.c.l.b16 %v1617
  %v1881 = vunpack.c.l.b16 %v1618
  %v1882 = vunpack.c.l.b16 %v1619
  %v1883 = vunpack.c.l.b16 %v1620
  %v1884 = vunpack.c.l.b16 %v1621
  %v1885 = vunpack.c.l.b16 %v1622
  %v1886 = vunpack.c.l.b16 %v1623
  %v1887 = vunpack.c.l.b16 %v1624
  %v1888 = vunpack.c.l.b16 %v1625
  %v1889 = vunpack.c.l.b16 %v1626
  %v1890 = vunpack.c.l.b16 %v1627
  %v1891 = vunpack.c.l.b16 %v1628
  %v1892 = vunpack.c.l.b16 %v1629
  %v1893 = vunpack.c.l.b16 %v1630
  %v1894 = vunpack.c.l.b16 %v1631
  %v1895 = vunpack.c.l.b16 %v1632
  %v1896 = vunpack.c.l.b16 %v1633
  %v1897 = vunpack.c.l.b16 %v1634
  %v1898 = vunpack.c.l.b16 %v1635
  %v1899 = vunpack.c.l.b16 %v1636
  %v1900 = vunpack.c.l.b16 %v1637
  %v1901 = vpack.c.b16 %v1774, %v1773
  %v1902 = vpack.c.b16 %v1776, %v1775
  %v1903 = vpack.c.b16 %v1778, %v1777
  %v1904 = vpack.c.b16 %v1780, %v1779
  %v1905 = vpack.c.b16 %v1782, %v1781
  %v1906 = vpack.c.b16 %v1784, %v1783
  %v1907 = vpack.c.b16 %v1786, %v1785
  %v1908 = vpack.c.b16 %v1788, %v1787
  %v1909 = vpack.c.b16 %v1790, %v1789
  %v1910 = vpack.c.b16 %v1792, %v1791
  %v1911 = vpack.c.b16 %v1794, %v1793
  %v1912 = vpack.c.b16 %v1796, %v1795
  %v1913 = vpack.c.b16 %v1798, %v1797
  %v1914 = vpack.c.b16 %v1800, %v1799
  %v1915 = vpack.c.b16 %v1802, %v1801
  %v1916 = vpack.c.b16 %v1804, %v1803
  %v1917 = vpack.c.b16 %v1806, %v1805
  %v1918 = vpack.c.b16 %v1808, %v1807
  %v1919 = vpack.c.b16 %v1810, %v1809
  %v1920 = vpack.c.b16 %v1812, %v1811
  %v1921 = vpack.c.b16 %v1814, %v1813
  %v1922 = vpack.c.b16 %v1816, %v1815
  %v1923 = vpack.c.b16 %v1818, %v1817
  %v1924 = vpack.c.b16 %v1820, %v1819
  %v1925 = vpack.c.b16 %v1822, %v1821
  %v1926 = vpack.c.b16 %v1824, %v1823
  %v1927 = vpack.c.b16 %v1826, %v1825
  %v1928 = vpack.c.b16 %v1828, %v1827
  %v1929 = vpack.c.b16 %v1830, %v1829
  %v1930 = vpack.c.b16 %v1832, %v1831
  %v1931 = vpack.c.b16 %v1834, %v1833
  %v1932 = vpack.c.b16 %v1836, %v1835
  %v1933 = vpack.c.b16 %v1838, %v1837
  %v1934 = vpack.c.b16 %v1840, %v1839
  %v1935 = vpack.c.b16 %v1842, %v1841
  %v1936 = vpack.c.b16 %v1844, %v1843
  %v1937 = vpack.c.b16 %v1846, %v1845
  %v1938 = vpack.c.b16 %v1848, %v1847
  %v1939 = vpack.c.b16 %v1850, %v1849
  %v1940 = vpack.c.b16 %v1852, %v1851
  %v1941 = vpack.c.b16 %v1854, %v1853
  %v1942 = vpack.c.b16 %v1856, %v1855
  %v1943 = vpack.c.b16 %v1858, %v1857
  %v1944 = vpack.c.b16 %v1860, %v1859
  %v1945 = vpack.c.b16 %v1862, %v1861
  %v1946 = vpack.c.b16 %v1864, %v1863
  %v1947 = vpack.c.b16 %v1866, %v1865
  %v1948 = vpack.c.b16 %v1868, %v1867
  %v1949 = vpack.c.b16 %v1870, %v1869
  %v1950 = vpack.c.b16 %v1872, %v1871
  %v1951 = vpack.c.b16 %v1874, %v1873
  %v1952 = vpack.c.b16 %v1876, %v1875
  %v1953 = vpack.c.b16 %v1878, %v1877
  %v1954 = vpack.c.b16 %v1880, %v1879
  %v1955 = vpack.c.b16 %v1882, %v1881
  %v1956 = vpack.c.b16 %v1884, %v1883
  %v1957 = vpack.c.b16 %v1886, %v1885
  %v1958 = vpack.c.b16 %v1888, %v1887
  %v1959 = vpack.c.b16 %v1890, %v1889
  %v1960 = vpack.c.b16 %v1892, %v1891
  %v1961 = vpack.c.b16 %v1894, %v1893
  %v1962 = vpack.c.b16 %v1896, %v1895
  %v1963 = vpack.c.b16 %v1898, %v1897
  %v1964 = vpack.c.b16 %v1900, %v1899
  %2029 = vmatprep.subr.bf16.mxu0 0
  %2030 = vmatpush1.bf16.msra.mxu0 %v1901
  %2031 = vmatprep.subr.bf16.mxu0 0
  %2032 = vmatpush1.bf16.msra.mxu0 %v1902
  %2033 = vmatprep.subr.bf16.mxu0 0
  %2034 = vmatpush1.bf16.msra.mxu0 %v1903
  %2035 = vmatprep.subr.bf16.mxu0 0
  %2036 = vmatpush1.bf16.msra.mxu0 %v1904
  %2037 = vmatprep.subr.bf16.mxu0 0
  %2038 = vmatpush1.bf16.msra.mxu0 %v1905
  %2039 = vmatprep.subr.bf16.mxu0 0
  %2040 = vmatpush1.bf16.msra.mxu0 %v1906
  %2041 = vmatprep.subr.bf16.mxu0 0
  %2042 = vmatpush1.bf16.msra.mxu0 %v1907
  %2043 = vmatprep.subr.bf16.mxu0 0
  %2044 = vmatpush1.bf16.msra.mxu0 %v1908
  %2045 = vmatprep.subr.bf16.mxu0 0
  %2046 = vmatpush1.bf16.msra.mxu0 %v1909
  %2047 = vmatprep.subr.bf16.mxu0 0
  %2048 = vmatpush1.bf16.msra.mxu0 %v1910
  %2049 = vmatprep.subr.bf16.mxu0 0
  %2050 = vmatpush1.bf16.msra.mxu0 %v1911
  %2051 = vmatprep.subr.bf16.mxu0 0
  %2052 = vmatpush1.bf16.msra.mxu0 %v1912
  %2053 = vmatprep.subr.bf16.mxu0 0
  %2054 = vmatpush1.bf16.msra.mxu0 %v1913
  %2055 = vmatprep.subr.bf16.mxu0 0
  %2056 = vmatpush1.bf16.msra.mxu0 %v1914
  %2057 = vmatprep.subr.bf16.mxu0 0
  %2058 = vmatpush1.bf16.msra.mxu0 %v1915
  %2059 = vmatprep.subr.bf16.mxu0 0
  %2060 = vmatpush1.bf16.msra.mxu0 %v1916
  %2061 = vmatprep.mubr.bf16.mxu0 %v1503
  %2062 = vmatmul.mubr.bf16.gmra.mrb[0].mxu0 %v1502
  %v2063 = vpop.f32.mrb[0].mxu0
  %v2064 = vadd.f32 %v1643, %v2063
  %v2065 = vpop.f32.mrb[0].mxu0
  %v2066 = vpop.f32.mrb[0].mxu0
  %v2067 = vadd.f32 %v1643, %v2066
  %v2068 = vpop.f32.mrb[0].mxu0
  %2069 = vdwg.mxu0
  %2070 = vmatprep.subr.bf16.mxu0 0
  %2071 = vmatpush1.bf16.msra.mxu0 %v1917
  %2072 = vmatprep.subr.bf16.mxu0 0
  %2073 = vmatpush1.bf16.msra.mxu0 %v1918
  %2074 = vmatprep.subr.bf16.mxu0 0
  %2075 = vmatpush1.bf16.msra.mxu0 %v1919
  %2076 = vmatprep.subr.bf16.mxu0 0
  %2077 = vmatpush1.bf16.msra.mxu0 %v1920
  %2078 = vmatprep.subr.bf16.mxu0 0
  %2079 = vmatpush1.bf16.msra.mxu0 %v1921
  %2080 = vmatprep.subr.bf16.mxu0 0
  %2081 = vmatpush1.bf16.msra.mxu0 %v1922
  %2082 = vmatprep.subr.bf16.mxu0 0
  %2083 = vmatpush1.bf16.msra.mxu0 %v1923
  %2084 = vmatprep.subr.bf16.mxu0 0
  %2085 = vmatpush1.bf16.msra.mxu0 %v1924
  %2086 = vmatprep.subr.bf16.mxu0 0
  %2087 = vmatpush1.bf16.msra.mxu0 %v1925
  %2088 = vmatprep.subr.bf16.mxu0 0
  %2089 = vmatpush1.bf16.msra.mxu0 %v1926
  %2090 = vmatprep.subr.bf16.mxu0 0
  %2091 = vmatpush1.bf16.msra.mxu0 %v1927
  %2092 = vmatprep.subr.bf16.mxu0 0
  %2093 = vmatpush1.bf16.msra.mxu0 %v1928
  %2094 = vmatprep.subr.bf16.mxu0 0
  %2095 = vmatpush1.bf16.msra.mxu0 %v1929
  %2096 = vmatprep.subr.bf16.mxu0 0
  %2097 = vmatpush1.bf16.msra.mxu0 %v1930
  %2098 = vmatprep.subr.bf16.mxu0 0
  %2099 = vmatpush1.bf16.msra.mxu0 %v1931
  %2100 = vmatprep.subr.bf16.mxu0 0
  %2101 = vmatpush1.bf16.msra.mxu0 %v1932
  %2102 = vmatprep.mubr.bf16.mxu0 %v1505
  %2103 = vmatmul.mubr.bf16.gmra.mrb[0].mxu0 %v1504
  %v2104 = vpop.f32.mrb[0].mxu0
  %v2105 = vadd.f32 %v2064, %v2104
  %v2106 = vpop.f32.mrb[0].mxu0
  %v2107 = vpop.f32.mrb[0].mxu0
  %v2108 = vadd.f32 %v2067, %v2107
  %v2109 = vpop.f32.mrb[0].mxu0
  %2110 = vdwg.mxu0
  %2111 = vmatprep.subr.bf16.mxu0 0
  %2112 = vmatpush1.bf16.msra.mxu0 %v1933
  %2113 = vmatprep.subr.bf16.mxu0 0
  %2114 = vmatpush1.bf16.msra.mxu0 %v1934
  %2115 = vmatprep.subr.bf16.mxu0 0
  %2116 = vmatpush1.bf16.msra.mxu0 %v1935
  %2117 = vmatprep.subr.bf16.mxu0 0
  %2118 = vmatpush1.bf16.msra.mxu0 %v1936
  %2119 = vmatprep.subr.bf16.mxu0 0
  %2120 = vmatpush1.bf16.msra.mxu0 %v1937
  %2121 = vmatprep.subr.bf16.mxu0 0
  %2122 = vmatpush1.bf16.msra.mxu0 %v1938
  %2123 = vmatprep.subr.bf16.mxu0 0
  %2124 = vmatpush1.bf16.msra.mxu0 %v1939
  %2125 = vmatprep.subr.bf16.mxu0 0
  %2126 = vmatpush1.bf16.msra.mxu0 %v1940
  %2127 = vmatprep.subr.bf16.mxu0 0
  %2128 = vmatpush1.bf16.msra.mxu0 %v1941
  %2129 = vmatprep.subr.bf16.mxu0 0
  %2130 = vmatpush1.bf16.msra.mxu0 %v1942
  %2131 = vmatprep.subr.bf16.mxu0 0
  %2132 = vmatpush1.bf16.msra.mxu0 %v1943
  %2133 = vmatprep.subr.bf16.mxu0 0
  %2134 = vmatpush1.bf16.msra.mxu0 %v1944
  %2135 = vmatprep.subr.bf16.mxu0 0
  %2136 = vmatpush1.bf16.msra.mxu0 %v1945
  %2137 = vmatprep.subr.bf16.mxu0 0
  %2138 = vmatpush1.bf16.msra.mxu0 %v1946
  %2139 = vmatprep.subr.bf16.mxu0 0
  %2140 = vmatpush1.bf16.msra.mxu0 %v1947
  %2141 = vmatprep.subr.bf16.mxu0 0
  %2142 = vmatpush1.bf16.msra.mxu0 %v1948
  %2143 = vmatprep.mubr.bf16.mxu0 %v1507
  %2144 = vmatmul.mubr.bf16.gmra.mrb[0].mxu0 %v1506
  %v2145 = vpop.f32.mrb[0].mxu0
  %v2146 = vadd.f32 %v2105, %v2145
  %v2147 = vpop.f32.mrb[0].mxu0
  %v2148 = vpop.f32.mrb[0].mxu0
  %v2149 = vadd.f32 %v2108, %v2148
  %v2150 = vpop.f32.mrb[0].mxu0
  %2151 = vdwg.mxu0
  %2152 = vmatprep.subr.bf16.mxu0 0
  %2153 = vmatpush1.bf16.msra.mxu0 %v1949
  %2154 = vmatprep.subr.bf16.mxu0 0
  %2155 = vmatpush1.bf16.msra.mxu0 %v1950
  %2156 = vmatprep.subr.bf16.mxu0 0
  %2157 = vmatpush1.bf16.msra.mxu0 %v1951
  %2158 = vmatprep.subr.bf16.mxu0 0
  %2159 = vmatpush1.bf16.msra.mxu0 %v1952
  %2160 = vmatprep.subr.bf16.mxu0 0
  %2161 = vmatpush1.bf16.msra.mxu0 %v1953
  %2162 = vmatprep.subr.bf16.mxu0 0
  %2163 = vmatpush1.bf16.msra.mxu0 %v1954
  %2164 = vmatprep.subr.bf16.mxu0 0
  %2165 = vmatpush1.bf16.msra.mxu0 %v1955
  %2166 = vmatprep.subr.bf16.mxu0 0
  %2167 = vmatpush1.bf16.msra.mxu0 %v1956
  %2168 = vmatprep.subr.bf16.mxu0 0
  %2169 = vmatpush1.bf16.msra.mxu0 %v1957
  %2170 = vmatprep.subr.bf16.mxu0 0
  %2171 = vmatpush1.bf16.msra.mxu0 %v1958
  %2172 = vmatprep.subr.bf16.mxu0 0
  %2173 = vmatpush1.bf16.msra.mxu0 %v1959
  %2174 = vmatprep.subr.bf16.mxu0 0
  %2175 = vmatpush1.bf16.msra.mxu0 %v1960
  %2176 = vmatprep.subr.bf16.mxu0 0
  %2177 = vmatpush1.bf16.msra.mxu0 %v1961
  %2178 = vmatprep.subr.bf16.mxu0 0
  %2179 = vmatpush1.bf16.msra.mxu0 %v1962
  %2180 = vmatprep.subr.bf16.mxu0 0
  %2181 = vmatpush1.bf16.msra.mxu0 %v1963
  %2182 = vmatprep.subr.bf16.mxu0 0
  %2183 = vmatpush1.bf16.msra.mxu0 %v1964
  %2184 = vmatprep.mubr.bf16.mxu0 %v1509
  %2185 = vmatmul.mubr.bf16.gmra.mrb[0].mxu0 %v1508
  %v2186 = vpop.f32.mrb[0].mxu0
  %v2187 = vadd.f32 %v2146, %v2186
  %v2188 = vpop.f32.mrb[0].mxu0
  %v2189 = vpop.f32.mrb[0].mxu0
  %v2190 = vadd.f32 %v2149, %v2189
  %v2191 = vpop.f32.mrb[0].mxu0
  %2192 = vdwg.mxu0
  %2193 = vst [vmem:[%s8] sm:$0xff] %v2187
  %2194 = vst [vmem:[%s8 + $0x8] sm:$0xff] %v2190
  // Predicated region
  $region34: #{vgg11_feat_forward.11} parent=0 // pred_check
    _
  $region35: #{vgg11_feat_forward.11} parent=0 // pred_check_branch
    %2196 = sbr.rel (0) target = $region37
  $region36: #{vgg11_feat_forward.11} parent=0 // pred_region
    _
  $region37: #{vgg11_feat_forward.11} parent=0 // pred_fallthru
    _
  // Predicated region
  $region38: #{vgg11_feat_forward.11} parent=0 // pred_check
    _
  $region39: #{vgg11_feat_forward.11} parent=0 // pred_check_branch
    %2198 = sbr.rel (0) target = $region41
  $region40: #{vgg11_feat_forward.11} parent=0 // pred_region
    _
  $region41: #{vgg11_feat_forward.11} parent=0 // pred_fallthru
    _

</llo_original>
